<compile_context>
chip_gen: v7x
topology: tpu7x:2x2x1
jax: 0.10.0
libtpu: 0.0.40
codegen_flags: <defaults>
</compile_context>

<pallas_src>
import functools
import math

import jax
import jax.numpy as jnp
from jax.experimental import pallas as pl
from jax.experimental.pallas import tpu as pltpu

BN_EPS = 1e-5  # torch.nn.BatchNorm1d default


# --------------------------- in-kernel helpers --------------------------------

def _elu(x):
    # F.elu, alpha=1 (clamp exp arg so the dead branch cannot overflow)
    return jnp.where(x > 0, x, jnp.exp(jnp.minimum(x, 0.0)) - 1.0)


def _mm(a, b):
    # f32 operands, f32 accumulation (bf16 path blocked by runtime dot support)
    return jnp.dot(a, b, preferred_element_type=jnp.float32)


def _bn(y):
    # training-mode BatchNorm1d, gamma=1, beta=0, biased variance over axis 0.
    # Single statistics pass: var = E[y^2] - mean^2 (post-ELU values, benign).
    mean = jnp.mean(y, axis=0, keepdims=True)
    mean_sq = jnp.mean(y * y, axis=0, keepdims=True)
    var = jnp.maximum(mean_sq - mean * mean, 0.0)
    return (y - mean) * jax.lax.rsqrt(var + BN_EPS)


def _mlp(x, w1, b1, w2, b2):
    # fc1 -> ELU -> (dropout p=0) -> fc2 -> ELU -> BN   (the PyTorch MLP block)
    h = _elu(_mm(x, w1) + b1)
    y = _elu(_mm(h, w2) + b2)
    return _bn(y)


# --------------------------- fused Pallas kernel ------------------------------

def _fused_kernel(H,
                  x_ref, rrb_ref, rsb_ref, rrtb_ref,
                  w1a_ref, b1a_ref, w1b_ref, b1b_ref,
                  w2a_ref, b2a_ref, w2b_ref, b2b_ref,
                  w3a_ref, b3a_ref, w3b_ref, b3b_ref,
                  w4a_ref, b4a_ref, w4as_ref, w4b_ref, b4b_ref,
                  wo_ref, bo_ref,
                  o_ref):
    x = x_ref[...]        # (B*N, n_in)
    rrb = rrb_ref[...]    # (B*E, B*N)  block-diag one-hot receivers
    rsb = rsb_ref[...]    # (B*E, B*N)  block-diag one-hot senders
    rrtb = rrtb_ref[...]  # (B*N, B*E)  block-diag rel_rec.T, pre-scaled by 1/N

    # ---- mlp1 on node features; BN over all B*N rows -------------------------
    x1 = _mlp(x, w1a_ref[...], b1a_ref[...], w1b_ref[...], b1b_ref[...])  # (B*N, H)

    # ---- node2edge fused with mlp2's first layer (project-then-gather) -------
    # one wide matmul: columns [0:H]=rec projection, [H:2H]=send projection
    proj2 = _mm(x1, w2a_ref[...])                                  # (B*N, 2H)
    e1 = _mm(rrb, proj2[:, :H]) + _mm(rsb, proj2[:, H:]) + b2a_ref[...]
    x2 = _bn(_elu(_mm(_elu(e1), w2b_ref[...]) + b2b_ref[...]))     # (B*E, H)
    x_skip = x2

    # ---- edge2node: (rel_rec.T / N) @ edges, all batches in one matmul -------
    n1 = _mm(rrtb, x2)                                             # (B*N, H)

    # ---- mlp3 on node features -----------------------------------------------
    x3 = _mlp(n1, w3a_ref[...], b3a_ref[...], w3b_ref[...], b3b_ref[...])  # (B*N, H)

    # ---- node2edge + skip concat fused with mlp4's first layer ----------------
    proj4 = _mm(x3, w4a_ref[...])                                  # (B*N, 2H)
    sk = _mm(x_skip, w4as_ref[...])                                # (B*E, H)
    e4 = _mm(rrb, proj4[:, :H]) + _mm(rsb, proj4[:, H:]) + sk + b4a_ref[...]
    x4 = _bn(_elu(_mm(_elu(e4), w4b_ref[...]) + b4b_ref[...]))     # (B*E, H)

    # ---- fc_out (lane-padded to 128 output columns -> dense vst) --------------
    o_ref[...] = _mm(x4, wo_ref[...]) + bo_ref[...]                # (B*E, 128)


# --------------------------- wrapper ------------------------------------------

def interaction_net_forward(params, inputs, rel_rec, rel_send):
    B, N = inputs.shape[0], inputs.shape[1]
    E = rel_rec.shape[0]
    H = params["mlp1"][2].shape[0]            # mlp1's fc2 is (H, H)
    n_out = params["fc_out"][0].shape[1]

    x2d = inputs.reshape(B * N, -1).astype(jnp.float32)            # (B*N, n_in)

    # block-diagonal rel matrices: one matmul per gather for ALL batches
    eye_b = jnp.eye(B, dtype=jnp.float32)
    rrb = jnp.kron(eye_b, rel_rec.astype(jnp.float32))             # (B*E, B*N)
    rsb = jnp.kron(eye_b, rel_send.astype(jnp.float32))            # (B*E, B*N)
    rrtb = jnp.kron(eye_b, rel_rec.T.astype(jnp.float32)) * (1.0 / N)  # (B*N, B*E)

    w1a, b1a, w1b, b1b = params["mlp1"]
    w2a, b2a, w2b, b2b = params["mlp2"]
    w3a, b3a, w3b, b3b = params["mlp3"]
    w4a, b4a, w4b, b4b = params["mlp4"]
    wo, bo = params["fc_out"]

    # pack split first-layer weights into wide lane-dense blocks (host side)
    w2a_packed = jnp.concatenate([w2a[:H], w2a[H:]], axis=1)       # (H, 2H)
    w4a_packed = jnp.concatenate([w4a[:H], w4a[H:2 * H]], axis=1)  # (H, 2H)
    w4a_skip = w4a[2 * H:]                                         # (H, H)

    # lane-pad fc_out to a multiple of 128 output columns
    n_pad = max(128, ((n_out + 127) // 128) * 128)
    wo_p = jnp.zeros((H, n_pad), jnp.float32).at[:, :n_out].set(wo)
    bo_p = jnp.zeros((1, n_pad), jnp.float32).at[:, :n_out].set(bo)

    args = [x2d, rrb, rsb, rrtb,
            w1a, b1a, w1b, b1b,
            w2a_packed, b2a, w2b, b2b,
            w3a, b3a, w3b, b3b,
            w4a_packed, b4a, w4a_skip, w4b, b4b,
            wo_p, bo_p]

    vmem = pl.BlockSpec(memory_space=pltpu.MemorySpace.VMEM)
    out = pl.pallas_call(
        functools.partial(_fused_kernel, H),
        out_shape=jax.ShapeDtypeStruct((B * E, n_pad), jnp.float32),
        in_specs=[vmem] * len(args),
        out_specs=vmem,
        compiler_params=pltpu.CompilerParams(vmem_limit_bytes=32 * 1024 * 1024),
    )(*args)
    return out[:, :n_out].reshape(B, E, n_out)


# --------------------------- parameters ----------------------------------------

def _xavier_normal(key, fan_in, fan_out):
    std = math.sqrt(2.0 / (fan_in + fan_out))
    return jax.random.normal(key, (fan_in, fan_out), jnp.float32) * std


def _make_linear(key, fan_in, fan_out):
    # stored as (in, out) = torch weight transposed; bias filled with 0.1
    w = _xavier_normal(key, fan_in, fan_out)
    b = jnp.full((1, fan_out), 0.1, jnp.float32)
    return w, b


def init_interaction_net(key, n_in, n_hid, n_out):
    ks = jax.random.split(key, 9)
    return {
        "mlp1": _make_linear(ks[0], n_in, n_hid) + _make_linear(ks[1], n_hid, n_hid),
        "mlp2": _make_linear(ks[2], 2 * n_hid, n_hid) + _make_linear(ks[3], n_hid, n_hid),
        "mlp3": _make_linear(ks[4], n_hid, n_hid) + _make_linear(ks[5], n_hid, n_hid),
        "mlp4": _make_linear(ks[6], 3 * n_hid, n_hid) + _make_linear(ks[7], n_hid, n_hid),
        "fc_out": _make_linear(ks[8], n_hid, n_out),
    }


# --------------------------- pure-JAX reference -------------------------------

def _ref_mlp(x3d, w1, b1, w2, b2):
    b_, r_, f_ = x3d.shape
    x = x3d.reshape(b_ * r_, f_)
    h = jax.nn.elu(x @ w1 + b1)
    y = jax.nn.elu(h @ w2 + b2)
    mean = y.mean(0, keepdims=True)
    var = ((y - mean) ** 2).mean(0, keepdims=True)
    return ((y - mean) / jnp.sqrt(var + BN_EPS)).reshape(b_, r_, -1)


def _ref_forward(params, inputs, rel_rec, rel_send):
    B, N = inputs.shape[0], inputs.shape[1]
    x = inputs.reshape(B, N, -1)
    x = _ref_mlp(x, *params["mlp1"])
    x = jnp.concatenate([jnp.einsum("en,bnh->beh", rel_rec, x),
                         jnp.einsum("en,bnh->beh", rel_send, x)], -1)
    x = _ref_mlp(x, *params["mlp2"])
    x_skip = x
    x = jnp.einsum("en,beh->bnh", rel_rec, x) / N
    x = _ref_mlp(x, *params["mlp3"])
    x = jnp.concatenate([jnp.einsum("en,bnh->beh", rel_rec, x),
                         jnp.einsum("en,bnh->beh", rel_send, x)], -1)
    x = jnp.concatenate([x, x_skip], -1)
    x = _ref_mlp(x, *params["mlp4"])
    w, b = params["fc_out"]
    return x @ w + b


# --------------------------- main ----------------------------------------------

if __name__ == "__main__":
    B, N, T, D = 2, 8, 4, 4
    n_in, n_hid, n_out = T * D, 32, 8

    key = jax.random.PRNGKey(0)
    k_in, k_par = jax.random.split(key)
    inputs = jax.random.normal(k_in, (B, N, T, D), jnp.float32)

    # fully-connected directed graph without self-loops (NRI-style one-hots)
    edges = [(i, j) for i in range(N) for j in range(N) if i != j]
    E = len(edges)
    recv_idx = jnp.array([i for i, _ in edges], jnp.int32)
    send_idx = jnp.array([j for _, j in edges], jnp.int32)
    rel_rec = jnp.zeros((E, N), jnp.float32).at[jnp.arange(E), recv_idx].set(1.0)
    rel_send = jnp.zeros((E, N), jnp.float32).at[jnp.arange(E), send_idx].set(1.0)

    params = init_interaction_net(k_par, n_in, n_hid, n_out)

    out = jax.jit(interaction_net_forward)(params, inputs, rel_rec, rel_send)
    out = jax.block_until_ready(out)

    ref = _ref_forward(params, inputs, rel_rec, rel_send)
    assert out.shape == (B, E, n_out), out.shape
    assert bool(jnp.all(jnp.isfinite(out)))
    assert bool(jnp.allclose(out, ref, atol=5e-2, rtol=5e-2))
    print("KERNEL_OK")
</pallas_src>

<mosaic_0001>
module attributes {stable_mosaic.version = 11 : i64} {
  func.func @_fused_kernel(%arg0: memref<16x16xf32, #tpu.memory_space<vmem>>, %arg1: memref<112x16xf32, #tpu.memory_space<vmem>>, %arg2: memref<112x16xf32, #tpu.memory_space<vmem>>, %arg3: memref<16x112xf32, #tpu.memory_space<vmem>>, %arg4: memref<16x32xf32, #tpu.memory_space<vmem>>, %arg5: memref<1x32xf32, #tpu.memory_space<vmem>>, %arg6: memref<32x32xf32, #tpu.memory_space<vmem>>, %arg7: memref<1x32xf32, #tpu.memory_space<vmem>>, %arg8: memref<32x64xf32, #tpu.memory_space<vmem>>, %arg9: memref<1x32xf32, #tpu.memory_space<vmem>>, %arg10: memref<32x32xf32, #tpu.memory_space<vmem>>, %arg11: memref<1x32xf32, #tpu.memory_space<vmem>>, %arg12: memref<32x32xf32, #tpu.memory_space<vmem>>, %arg13: memref<1x32xf32, #tpu.memory_space<vmem>>, %arg14: memref<32x32xf32, #tpu.memory_space<vmem>>, %arg15: memref<1x32xf32, #tpu.memory_space<vmem>>, %arg16: memref<32x64xf32, #tpu.memory_space<vmem>>, %arg17: memref<1x32xf32, #tpu.memory_space<vmem>>, %arg18: memref<32x32xf32, #tpu.memory_space<vmem>>, %arg19: memref<32x32xf32, #tpu.memory_space<vmem>>, %arg20: memref<1x32xf32, #tpu.memory_space<vmem>>, %arg21: memref<32x128xf32, #tpu.memory_space<vmem>>, %arg22: memref<1x128xf32, #tpu.memory_space<vmem>>, %arg23: memref<112x128xf32, #tpu.memory_space<vmem>>) attributes {dimension_semantics = [], scalar_prefetch = 0 : i64, scratch_operands = 0 : i64, tpu.core_type = #tpu.core_type<tc>} {
    %c0 = arith.constant 0 : index
    %c0_0 = arith.constant 0 : index
    %0 = vector.load %arg0[%c0, %c0_0] : memref<16x16xf32, #tpu.memory_space<vmem>>, vector<16x16xf32>
    %c0_1 = arith.constant 0 : index
    %c0_2 = arith.constant 0 : index
    %1 = vector.load %arg1[%c0_1, %c0_2] : memref<112x16xf32, #tpu.memory_space<vmem>>, vector<112x16xf32>
    %c0_3 = arith.constant 0 : index
    %c0_4 = arith.constant 0 : index
    %2 = vector.load %arg2[%c0_3, %c0_4] : memref<112x16xf32, #tpu.memory_space<vmem>>, vector<112x16xf32>
    %c0_5 = arith.constant 0 : index
    %c0_6 = arith.constant 0 : index
    %3 = vector.load %arg3[%c0_5, %c0_6] : memref<16x112xf32, #tpu.memory_space<vmem>>, vector<16x112xf32>
    %c0_7 = arith.constant 0 : index
    %c0_8 = arith.constant 0 : index
    %4 = vector.load %arg4[%c0_7, %c0_8] : memref<16x32xf32, #tpu.memory_space<vmem>>, vector<16x32xf32>
    %c0_9 = arith.constant 0 : index
    %c0_10 = arith.constant 0 : index
    %5 = vector.load %arg5[%c0_9, %c0_10] : memref<1x32xf32, #tpu.memory_space<vmem>>, vector<1x32xf32>
    %c0_11 = arith.constant 0 : index
    %c0_12 = arith.constant 0 : index
    %6 = vector.load %arg6[%c0_11, %c0_12] : memref<32x32xf32, #tpu.memory_space<vmem>>, vector<32x32xf32>
    %c0_13 = arith.constant 0 : index
    %c0_14 = arith.constant 0 : index
    %7 = vector.load %arg7[%c0_13, %c0_14] : memref<1x32xf32, #tpu.memory_space<vmem>>, vector<1x32xf32>
    %cst = arith.constant dense<0.000000e+00> : vector<16x32xf32>
    %8 = tpu.matmul %0, %4, %cst {dimension_numbers = #tpu.dot_dimension_numbers<[1], [0], [0], [1], [0, 0, 1, 1], [], []>} : vector<16x16xf32>, vector<16x32xf32>, vector<16x32xf32> -> vector<16x32xf32>
    %9 = vector.broadcast %5 : vector<1x32xf32> to vector<16x32xf32>
    %10 = arith.addf %8, %9 : vector<16x32xf32>
    %cst_15 = arith.constant 0.000000e+00 : f32
    %11 = vector.broadcast %cst_15 : f32 to vector<16x32xf32>
    %12 = arith.cmpf ogt, %10, %11 : vector<16x32xf32>
    %cst_16 = arith.constant 0.000000e+00 : f32
    %13 = vector.broadcast %cst_16 : f32 to vector<16x32xf32>
    %14 = arith.minimumf %10, %13 : vector<16x32xf32>
    %15 = math.exp %14 : vector<16x32xf32>
    %cst_17 = arith.constant 1.000000e+00 : f32
    %16 = vector.broadcast %cst_17 : f32 to vector<16x32xf32>
    %17 = arith.subf %15, %16 : vector<16x32xf32>
    %18 = arith.select %12, %10, %17 : vector<16x32xi1>, vector<16x32xf32>
    %cst_18 = arith.constant dense<0.000000e+00> : vector<16x32xf32>
    %19 = tpu.matmul %18, %6, %cst_18 {dimension_numbers = #tpu.dot_dimension_numbers<[1], [0], [0], [1], [0, 0, 1, 1], [], []>} : vector<16x32xf32>, vector<32x32xf32>, vector<16x32xf32> -> vector<16x32xf32>
    %20 = vector.broadcast %7 : vector<1x32xf32> to vector<16x32xf32>
    %21 = arith.addf %19, %20 : vector<16x32xf32>
    %cst_19 = arith.constant 0.000000e+00 : f32
    %22 = vector.broadcast %cst_19 : f32 to vector<16x32xf32>
    %23 = arith.cmpf ogt, %21, %22 : vector<16x32xf32>
    %cst_20 = arith.constant 0.000000e+00 : f32
    %24 = vector.broadcast %cst_20 : f32 to vector<16x32xf32>
    %25 = arith.minimumf %21, %24 : vector<16x32xf32>
    %26 = math.exp %25 : vector<16x32xf32>
    %cst_21 = arith.constant 1.000000e+00 : f32
    %27 = vector.broadcast %cst_21 : f32 to vector<16x32xf32>
    %28 = arith.subf %26, %27 : vector<16x32xf32>
    %29 = arith.select %23, %21, %28 : vector<16x32xi1>, vector<16x32xf32>
    %cst_22 = arith.constant dense<0.000000e+00> : vector<32xf32>
    %30 = vector.multi_reduction <add>, %29, %cst_22 [0] : vector<16x32xf32> to vector<32xf32>
    %31 = vector.shape_cast %30 : vector<32xf32> to vector<1x32xf32>
    %cst_23 = arith.constant 1.600000e+01 : f32
    %32 = vector.broadcast %cst_23 : f32 to vector<1x32xf32>
    %33 = arith.divf %31, %32 : vector<1x32xf32>
    %34 = arith.mulf %29, %29 : vector<16x32xf32>
    %cst_24 = arith.constant dense<0.000000e+00> : vector<32xf32>
    %35 = vector.multi_reduction <add>, %34, %cst_24 [0] : vector<16x32xf32> to vector<32xf32>
    %36 = vector.shape_cast %35 : vector<32xf32> to vector<1x32xf32>
    %cst_25 = arith.constant 1.600000e+01 : f32
    %37 = vector.broadcast %cst_25 : f32 to vector<1x32xf32>
    %38 = arith.divf %36, %37 : vector<1x32xf32>
    %39 = arith.mulf %33, %33 : vector<1x32xf32>
    %40 = arith.subf %38, %39 : vector<1x32xf32>
    %cst_26 = arith.constant 0.000000e+00 : f32
    %41 = vector.broadcast %cst_26 : f32 to vector<1x32xf32>
    %42 = arith.maximumf %40, %41 : vector<1x32xf32>
    %43 = vector.broadcast %33 : vector<1x32xf32> to vector<16x32xf32>
    %44 = arith.subf %29, %43 : vector<16x32xf32>
    %cst_27 = arith.constant 9.99999974E-6 : f32
    %45 = vector.broadcast %cst_27 : f32 to vector<1x32xf32>
    %46 = arith.addf %42, %45 : vector<1x32xf32>
    %47 = math.rsqrt %46 : vector<1x32xf32>
    %48 = vector.broadcast %47 : vector<1x32xf32> to vector<16x32xf32>
    %49 = arith.mulf %44, %48 : vector<16x32xf32>
    %c0_28 = arith.constant 0 : index
    %c0_29 = arith.constant 0 : index
    %50 = vector.load %arg8[%c0_28, %c0_29] : memref<32x64xf32, #tpu.memory_space<vmem>>, vector<32x64xf32>
    %cst_30 = arith.constant dense<0.000000e+00> : vector<16x64xf32>
    %51 = tpu.matmul %49, %50, %cst_30 {dimension_numbers = #tpu.dot_dimension_numbers<[1], [0], [0], [1], [0, 0, 1, 1], [], []>} : vector<16x32xf32>, vector<32x64xf32>, vector<16x64xf32> -> vector<16x64xf32>
    %52 = vector.extract_strided_slice %51 {offsets = [0, 0], sizes = [16, 32], strides = [1, 1]} : vector<16x64xf32> to vector<16x32xf32>
    %cst_31 = arith.constant dense<0.000000e+00> : vector<112x32xf32>
    %53 = tpu.matmul %1, %52, %cst_31 {dimension_numbers = #tpu.dot_dimension_numbers<[1], [0], [0], [1], [0, 0, 1, 1], [], []>} : vector<112x16xf32>, vector<16x32xf32>, vector<112x32xf32> -> vector<112x32xf32>
    %54 = vector.extract_strided_slice %51 {offsets = [0, 32], sizes = [16, 32], strides = [1, 1]} : vector<16x64xf32> to vector<16x32xf32>
    %cst_32 = arith.constant dense<0.000000e+00> : vector<112x32xf32>
    %55 = tpu.matmul %2, %54, %cst_32 {dimension_numbers = #tpu.dot_dimension_numbers<[1], [0], [0], [1], [0, 0, 1, 1], [], []>} : vector<112x16xf32>, vector<16x32xf32>, vector<112x32xf32> -> vector<112x32xf32>
    %56 = arith.addf %53, %55 : vector<112x32xf32>
    %c0_33 = arith.constant 0 : index
    %c0_34 = arith.constant 0 : index
    %57 = vector.load %arg9[%c0_33, %c0_34] : memref<1x32xf32, #tpu.memory_space<vmem>>, vector<1x32xf32>
    %58 = vector.broadcast %57 : vector<1x32xf32> to vector<112x32xf32>
    %59 = arith.addf %56, %58 : vector<112x32xf32>
    %cst_35 = arith.constant 0.000000e+00 : f32
    %60 = vector.broadcast %cst_35 : f32 to vector<112x32xf32>
    %61 = arith.cmpf ogt, %59, %60 : vector<112x32xf32>
    %cst_36 = arith.constant 0.000000e+00 : f32
    %62 = vector.broadcast %cst_36 : f32 to vector<112x32xf32>
    %63 = arith.minimumf %59, %62 : vector<112x32xf32>
    %64 = math.exp %63 : vector<112x32xf32>
    %cst_37 = arith.constant 1.000000e+00 : f32
    %65 = vector.broadcast %cst_37 : f32 to vector<112x32xf32>
    %66 = arith.subf %64, %65 : vector<112x32xf32>
    %67 = arith.select %61, %59, %66 : vector<112x32xi1>, vector<112x32xf32>
    %c0_38 = arith.constant 0 : index
    %c0_39 = arith.constant 0 : index
    %68 = vector.load %arg10[%c0_38, %c0_39] : memref<32x32xf32, #tpu.memory_space<vmem>>, vector<32x32xf32>
    %cst_40 = arith.constant dense<0.000000e+00> : vector<112x32xf32>
    %69 = tpu.matmul %67, %68, %cst_40 {dimension_numbers = #tpu.dot_dimension_numbers<[1], [0], [0], [1], [0, 0, 1, 1], [], []>} : vector<112x32xf32>, vector<32x32xf32>, vector<112x32xf32> -> vector<112x32xf32>
    %c0_41 = arith.constant 0 : index
    %c0_42 = arith.constant 0 : index
    %70 = vector.load %arg11[%c0_41, %c0_42] : memref<1x32xf32, #tpu.memory_space<vmem>>, vector<1x32xf32>
    %71 = vector.broadcast %70 : vector<1x32xf32> to vector<112x32xf32>
    %72 = arith.addf %69, %71 : vector<112x32xf32>
    %cst_43 = arith.constant 0.000000e+00 : f32
    %73 = vector.broadcast %cst_43 : f32 to vector<112x32xf32>
    %74 = arith.cmpf ogt, %72, %73 : vector<112x32xf32>
    %cst_44 = arith.constant 0.000000e+00 : f32
    %75 = vector.broadcast %cst_44 : f32 to vector<112x32xf32>
    %76 = arith.minimumf %72, %75 : vector<112x32xf32>
    %77 = math.exp %76 : vector<112x32xf32>
    %cst_45 = arith.constant 1.000000e+00 : f32
    %78 = vector.broadcast %cst_45 : f32 to vector<112x32xf32>
    %79 = arith.subf %77, %78 : vector<112x32xf32>
    %80 = arith.select %74, %72, %79 : vector<112x32xi1>, vector<112x32xf32>
    %cst_46 = arith.constant dense<0.000000e+00> : vector<32xf32>
    %81 = vector.multi_reduction <add>, %80, %cst_46 [0] : vector<112x32xf32> to vector<32xf32>
    %82 = vector.shape_cast %81 : vector<32xf32> to vector<1x32xf32>
    %cst_47 = arith.constant 1.120000e+02 : f32
    %83 = vector.broadcast %cst_47 : f32 to vector<1x32xf32>
    %84 = arith.divf %82, %83 : vector<1x32xf32>
    %85 = arith.mulf %80, %80 : vector<112x32xf32>
    %cst_48 = arith.constant dense<0.000000e+00> : vector<32xf32>
    %86 = vector.multi_reduction <add>, %85, %cst_48 [0] : vector<112x32xf32> to vector<32xf32>
    %87 = vector.shape_cast %86 : vector<32xf32> to vector<1x32xf32>
    %cst_49 = arith.constant 1.120000e+02 : f32
    %88 = vector.broadcast %cst_49 : f32 to vector<1x32xf32>
    %89 = arith.divf %87, %88 : vector<1x32xf32>
    %90 = arith.mulf %84, %84 : vector<1x32xf32>
    %91 = arith.subf %89, %90 : vector<1x32xf32>
    %cst_50 = arith.constant 0.000000e+00 : f32
    %92 = vector.broadcast %cst_50 : f32 to vector<1x32xf32>
    %93 = arith.maximumf %91, %92 : vector<1x32xf32>
    %94 = vector.broadcast %84 : vector<1x32xf32> to vector<112x32xf32>
    %95 = arith.subf %80, %94 : vector<112x32xf32>
    %cst_51 = arith.constant 9.99999974E-6 : f32
    %96 = vector.broadcast %cst_51 : f32 to vector<1x32xf32>
    %97 = arith.addf %93, %96 : vector<1x32xf32>
    %98 = math.rsqrt %97 : vector<1x32xf32>
    %99 = vector.broadcast %98 : vector<1x32xf32> to vector<112x32xf32>
    %100 = arith.mulf %95, %99 : vector<112x32xf32>
    %cst_52 = arith.constant dense<0.000000e+00> : vector<16x32xf32>
    %101 = tpu.matmul %3, %100, %cst_52 {dimension_numbers = #tpu.dot_dimension_numbers<[1], [0], [0], [1], [0, 0, 1, 1], [], []>} : vector<16x112xf32>, vector<112x32xf32>, vector<16x32xf32> -> vector<16x32xf32>
    %c0_53 = arith.constant 0 : index
    %c0_54 = arith.constant 0 : index
    %102 = vector.load %arg12[%c0_53, %c0_54] : memref<32x32xf32, #tpu.memory_space<vmem>>, vector<32x32xf32>
    %c0_55 = arith.constant 0 : index
    %c0_56 = arith.constant 0 : index
    %103 = vector.load %arg13[%c0_55, %c0_56] : memref<1x32xf32, #tpu.memory_space<vmem>>, vector<1x32xf32>
    %c0_57 = arith.constant 0 : index
    %c0_58 = arith.constant 0 : index
    %104 = vector.load %arg14[%c0_57, %c0_58] : memref<32x32xf32, #tpu.memory_space<vmem>>, vector<32x32xf32>
    %c0_59 = arith.constant 0 : index
    %c0_60 = arith.constant 0 : index
    %105 = vector.load %arg15[%c0_59, %c0_60] : memref<1x32xf32, #tpu.memory_space<vmem>>, vector<1x32xf32>
    %cst_61 = arith.constant dense<0.000000e+00> : vector<16x32xf32>
    %106 = tpu.matmul %101, %102, %cst_61 {dimension_numbers = #tpu.dot_dimension_numbers<[1], [0], [0], [1], [0, 0, 1, 1], [], []>} : vector<16x32xf32>, vector<32x32xf32>, vector<16x32xf32> -> vector<16x32xf32>
    %107 = vector.broadcast %103 : vector<1x32xf32> to vector<16x32xf32>
    %108 = arith.addf %106, %107 : vector<16x32xf32>
    %cst_62 = arith.constant 0.000000e+00 : f32
    %109 = vector.broadcast %cst_62 : f32 to vector<16x32xf32>
    %110 = arith.cmpf ogt, %108, %109 : vector<16x32xf32>
    %cst_63 = arith.constant 0.000000e+00 : f32
    %111 = vector.broadcast %cst_63 : f32 to vector<16x32xf32>
    %112 = arith.minimumf %108, %111 : vector<16x32xf32>
    %113 = math.exp %112 : vector<16x32xf32>
    %cst_64 = arith.constant 1.000000e+00 : f32
    %114 = vector.broadcast %cst_64 : f32 to vector<16x32xf32>
    %115 = arith.subf %113, %114 : vector<16x32xf32>
    %116 = arith.select %110, %108, %115 : vector<16x32xi1>, vector<16x32xf32>
    %cst_65 = arith.constant dense<0.000000e+00> : vector<16x32xf32>
    %117 = tpu.matmul %116, %104, %cst_65 {dimension_numbers = #tpu.dot_dimension_numbers<[1], [0], [0], [1], [0, 0, 1, 1], [], []>} : vector<16x32xf32>, vector<32x32xf32>, vector<16x32xf32> -> vector<16x32xf32>
    %118 = vector.broadcast %105 : vector<1x32xf32> to vector<16x32xf32>
    %119 = arith.addf %117, %118 : vector<16x32xf32>
    %cst_66 = arith.constant 0.000000e+00 : f32
    %120 = vector.broadcast %cst_66 : f32 to vector<16x32xf32>
    %121 = arith.cmpf ogt, %119, %120 : vector<16x32xf32>
    %cst_67 = arith.constant 0.000000e+00 : f32
    %122 = vector.broadcast %cst_67 : f32 to vector<16x32xf32>
    %123 = arith.minimumf %119, %122 : vector<16x32xf32>
    %124 = math.exp %123 : vector<16x32xf32>
    %cst_68 = arith.constant 1.000000e+00 : f32
    %125 = vector.broadcast %cst_68 : f32 to vector<16x32xf32>
    %126 = arith.subf %124, %125 : vector<16x32xf32>
    %127 = arith.select %121, %119, %126 : vector<16x32xi1>, vector<16x32xf32>
    %cst_69 = arith.constant dense<0.000000e+00> : vector<32xf32>
    %128 = vector.multi_reduction <add>, %127, %cst_69 [0] : vector<16x32xf32> to vector<32xf32>
    %129 = vector.shape_cast %128 : vector<32xf32> to vector<1x32xf32>
    %cst_70 = arith.constant 1.600000e+01 : f32
    %130 = vector.broadcast %cst_70 : f32 to vector<1x32xf32>
    %131 = arith.divf %129, %130 : vector<1x32xf32>
    %132 = arith.mulf %127, %127 : vector<16x32xf32>
    %cst_71 = arith.constant dense<0.000000e+00> : vector<32xf32>
    %133 = vector.multi_reduction <add>, %132, %cst_71 [0] : vector<16x32xf32> to vector<32xf32>
    %134 = vector.shape_cast %133 : vector<32xf32> to vector<1x32xf32>
    %cst_72 = arith.constant 1.600000e+01 : f32
    %135 = vector.broadcast %cst_72 : f32 to vector<1x32xf32>
    %136 = arith.divf %134, %135 : vector<1x32xf32>
    %137 = arith.mulf %131, %131 : vector<1x32xf32>
    %138 = arith.subf %136, %137 : vector<1x32xf32>
    %cst_73 = arith.constant 0.000000e+00 : f32
    %139 = vector.broadcast %cst_73 : f32 to vector<1x32xf32>
    %140 = arith.maximumf %138, %139 : vector<1x32xf32>
    %141 = vector.broadcast %131 : vector<1x32xf32> to vector<16x32xf32>
    %142 = arith.subf %127, %141 : vector<16x32xf32>
    %cst_74 = arith.constant 9.99999974E-6 : f32
    %143 = vector.broadcast %cst_74 : f32 to vector<1x32xf32>
    %144 = arith.addf %140, %143 : vector<1x32xf32>
    %145 = math.rsqrt %144 : vector<1x32xf32>
    %146 = vector.broadcast %145 : vector<1x32xf32> to vector<16x32xf32>
    %147 = arith.mulf %142, %146 : vector<16x32xf32>
    %c0_75 = arith.constant 0 : index
    %c0_76 = arith.constant 0 : index
    %148 = vector.load %arg16[%c0_75, %c0_76] : memref<32x64xf32, #tpu.memory_space<vmem>>, vector<32x64xf32>
    %cst_77 = arith.constant dense<0.000000e+00> : vector<16x64xf32>
    %149 = tpu.matmul %147, %148, %cst_77 {dimension_numbers = #tpu.dot_dimension_numbers<[1], [0], [0], [1], [0, 0, 1, 1], [], []>} : vector<16x32xf32>, vector<32x64xf32>, vector<16x64xf32> -> vector<16x64xf32>
    %c0_78 = arith.constant 0 : index
    %c0_79 = arith.constant 0 : index
    %150 = vector.load %arg18[%c0_78, %c0_79] : memref<32x32xf32, #tpu.memory_space<vmem>>, vector<32x32xf32>
    %cst_80 = arith.constant dense<0.000000e+00> : vector<112x32xf32>
    %151 = tpu.matmul %100, %150, %cst_80 {dimension_numbers = #tpu.dot_dimension_numbers<[1], [0], [0], [1], [0, 0, 1, 1], [], []>} : vector<112x32xf32>, vector<32x32xf32>, vector<112x32xf32> -> vector<112x32xf32>
    %152 = vector.extract_strided_slice %149 {offsets = [0, 0], sizes = [16, 32], strides = [1, 1]} : vector<16x64xf32> to vector<16x32xf32>
    %cst_81 = arith.constant dense<0.000000e+00> : vector<112x32xf32>
    %153 = tpu.matmul %1, %152, %cst_81 {dimension_numbers = #tpu.dot_dimension_numbers<[1], [0], [0], [1], [0, 0, 1, 1], [], []>} : vector<112x16xf32>, vector<16x32xf32>, vector<112x32xf32> -> vector<112x32xf32>
    %154 = vector.extract_strided_slice %149 {offsets = [0, 32], sizes = [16, 32], strides = [1, 1]} : vector<16x64xf32> to vector<16x32xf32>
    %cst_82 = arith.constant dense<0.000000e+00> : vector<112x32xf32>
    %155 = tpu.matmul %2, %154, %cst_82 {dimension_numbers = #tpu.dot_dimension_numbers<[1], [0], [0], [1], [0, 0, 1, 1], [], []>} : vector<112x16xf32>, vector<16x32xf32>, vector<112x32xf32> -> vector<112x32xf32>
    %156 = arith.addf %153, %155 : vector<112x32xf32>
    %157 = arith.addf %156, %151 : vector<112x32xf32>
    %c0_83 = arith.constant 0 : index
    %c0_84 = arith.constant 0 : index
    %158 = vector.load %arg17[%c0_83, %c0_84] : memref<1x32xf32, #tpu.memory_space<vmem>>, vector<1x32xf32>
    %159 = vector.broadcast %158 : vector<1x32xf32> to vector<112x32xf32>
    %160 = arith.addf %157, %159 : vector<112x32xf32>
    %cst_85 = arith.constant 0.000000e+00 : f32
    %161 = vector.broadcast %cst_85 : f32 to vector<112x32xf32>
    %162 = arith.cmpf ogt, %160, %161 : vector<112x32xf32>
    %cst_86 = arith.constant 0.000000e+00 : f32
    %163 = vector.broadcast %cst_86 : f32 to vector<112x32xf32>
    %164 = arith.minimumf %160, %163 : vector<112x32xf32>
    %165 = math.exp %164 : vector<112x32xf32>
    %cst_87 = arith.constant 1.000000e+00 : f32
    %166 = vector.broadcast %cst_87 : f32 to vector<112x32xf32>
    %167 = arith.subf %165, %166 : vector<112x32xf32>
    %168 = arith.select %162, %160, %167 : vector<112x32xi1>, vector<112x32xf32>
    %c0_88 = arith.constant 0 : index
    %c0_89 = arith.constant 0 : index
    %169 = vector.load %arg19[%c0_88, %c0_89] : memref<32x32xf32, #tpu.memory_space<vmem>>, vector<32x32xf32>
    %cst_90 = arith.constant dense<0.000000e+00> : vector<112x32xf32>
    %170 = tpu.matmul %168, %169, %cst_90 {dimension_numbers = #tpu.dot_dimension_numbers<[1], [0], [0], [1], [0, 0, 1, 1], [], []>} : vector<112x32xf32>, vector<32x32xf32>, vector<112x32xf32> -> vector<112x32xf32>
    %c0_91 = arith.constant 0 : index
    %c0_92 = arith.constant 0 : index
    %171 = vector.load %arg20[%c0_91, %c0_92] : memref<1x32xf32, #tpu.memory_space<vmem>>, vector<1x32xf32>
    %172 = vector.broadcast %171 : vector<1x32xf32> to vector<112x32xf32>
    %173 = arith.addf %170, %172 : vector<112x32xf32>
    %cst_93 = arith.constant 0.000000e+00 : f32
    %174 = vector.broadcast %cst_93 : f32 to vector<112x32xf32>
    %175 = arith.cmpf ogt, %173, %174 : vector<112x32xf32>
    %cst_94 = arith.constant 0.000000e+00 : f32
    %176 = vector.broadcast %cst_94 : f32 to vector<112x32xf32>
    %177 = arith.minimumf %173, %176 : vector<112x32xf32>
    %178 = math.exp %177 : vector<112x32xf32>
    %cst_95 = arith.constant 1.000000e+00 : f32
    %179 = vector.broadcast %cst_95 : f32 to vector<112x32xf32>
    %180 = arith.subf %178, %179 : vector<112x32xf32>
    %181 = arith.select %175, %173, %180 : vector<112x32xi1>, vector<112x32xf32>
    %cst_96 = arith.constant dense<0.000000e+00> : vector<32xf32>
    %182 = vector.multi_reduction <add>, %181, %cst_96 [0] : vector<112x32xf32> to vector<32xf32>
    %183 = vector.shape_cast %182 : vector<32xf32> to vector<1x32xf32>
    %cst_97 = arith.constant 1.120000e+02 : f32
    %184 = vector.broadcast %cst_97 : f32 to vector<1x32xf32>
    %185 = arith.divf %183, %184 : vector<1x32xf32>
    %186 = arith.mulf %181, %181 : vector<112x32xf32>
    %cst_98 = arith.constant dense<0.000000e+00> : vector<32xf32>
    %187 = vector.multi_reduction <add>, %186, %cst_98 [0] : vector<112x32xf32> to vector<32xf32>
    %188 = vector.shape_cast %187 : vector<32xf32> to vector<1x32xf32>
    %cst_99 = arith.constant 1.120000e+02 : f32
    %189 = vector.broadcast %cst_99 : f32 to vector<1x32xf32>
    %190 = arith.divf %188, %189 : vector<1x32xf32>
    %191 = arith.mulf %185, %185 : vector<1x32xf32>
    %192 = arith.subf %190, %191 : vector<1x32xf32>
    %cst_100 = arith.constant 0.000000e+00 : f32
    %193 = vector.broadcast %cst_100 : f32 to vector<1x32xf32>
    %194 = arith.maximumf %192, %193 : vector<1x32xf32>
    %195 = vector.broadcast %185 : vector<1x32xf32> to vector<112x32xf32>
    %196 = arith.subf %181, %195 : vector<112x32xf32>
    %cst_101 = arith.constant 9.99999974E-6 : f32
    %197 = vector.broadcast %cst_101 : f32 to vector<1x32xf32>
    %198 = arith.addf %194, %197 : vector<1x32xf32>
    %199 = math.rsqrt %198 : vector<1x32xf32>
    %200 = vector.broadcast %199 : vector<1x32xf32> to vector<112x32xf32>
    %201 = arith.mulf %196, %200 : vector<112x32xf32>
    %c0_102 = arith.constant 0 : index
    %c0_103 = arith.constant 0 : index
    %202 = vector.load %arg21[%c0_102, %c0_103] : memref<32x128xf32, #tpu.memory_space<vmem>>, vector<32x128xf32>
    %cst_104 = arith.constant dense<0.000000e+00> : vector<112x128xf32>
    %203 = tpu.matmul %201, %202, %cst_104 {dimension_numbers = #tpu.dot_dimension_numbers<[1], [0], [0], [1], [0, 0, 1, 1], [], []>} : vector<112x32xf32>, vector<32x128xf32>, vector<112x128xf32> -> vector<112x128xf32>
    %c0_105 = arith.constant 0 : index
    %c0_106 = arith.constant 0 : index
    %204 = vector.load %arg22[%c0_105, %c0_106] : memref<1x128xf32, #tpu.memory_space<vmem>>, vector<1x128xf32>
    %205 = vector.broadcast %204 : vector<1x128xf32> to vector<112x128xf32>
    %206 = arith.addf %203, %205 : vector<112x128xf32>
    %c0_107 = arith.constant 0 : index
    %c0_108 = arith.constant 0 : index
    %207 = vector.load %arg23[%c0_107, %c0_108] : memref<112x128xf32, #tpu.memory_space<vmem>>, vector<112x128xf32>
    tpu.vector_store %arg23[%c0_107, %c0_108], %206 {strides = array<i32>} : memref<112x128xf32, #tpu.memory_space<vmem>>, vector<112x128xf32>,
    return
  }
}

</mosaic_0001>

<llo_original>
// kernel: interaction_net_forward.1
$region0: #{interaction_net_forward.1}
  #allocation0 [shape = 'u32[]', space=smem, size = 0x4, offset = 0x4, fixed_abs, tag = 'smem constant byte address 0x4 - core index']
  #allocation1 [shape = 'u32[144,128]{1,0:T(1,128)}', space=vmem, size = 0x12000, scoped, tag = 'internal scratch']
  %s0 = inlined_call_operand.vmem [shape: f32[16,16], index: 0, kind: input, shape index: {}]
  %s1 = inlined_call_operand.vmem [shape: f32[112,16], index: 1, kind: input, shape index: {}]
  %s2 = inlined_call_operand.vmem [shape: f32[112,16], index: 2, kind: input, shape index: {}]
  %s3 = inlined_call_operand.vmem [shape: f32[16,112], index: 3, kind: input, shape index: {}]
  %s4 = inlined_call_operand.vmem [shape: f32[16,32], index: 4, kind: input, shape index: {}]
  %s5 = inlined_call_operand.vmem [shape: f32[1,32], index: 5, kind: input, shape index: {}]
  %s6 = inlined_call_operand.vmem [shape: f32[32,32], index: 6, kind: input, shape index: {}]
  %s7 = inlined_call_operand.vmem [shape: f32[1,32], index: 7, kind: input, shape index: {}]
  %s8 = inlined_call_operand.vmem [shape: f32[32,64], index: 8, kind: input, shape index: {}]
  %s9 = inlined_call_operand.vmem [shape: f32[1,32], index: 9, kind: input, shape index: {}]
  %s10 = inlined_call_operand.vmem [shape: f32[32,32], index: 10, kind: input, shape index: {}]
  %s11 = inlined_call_operand.vmem [shape: f32[1,32], index: 11, kind: input, shape index: {}]
  %s12 = inlined_call_operand.vmem [shape: f32[32,32], index: 12, kind: input, shape index: {}]
  %s13 = inlined_call_operand.vmem [shape: f32[1,32], index: 13, kind: input, shape index: {}]
  %s14 = inlined_call_operand.vmem [shape: f32[32,32], index: 14, kind: input, shape index: {}]
  %s15 = inlined_call_operand.vmem [shape: f32[1,32], index: 15, kind: input, shape index: {}]
  %s16 = inlined_call_operand.vmem [shape: f32[32,64], index: 16, kind: input, shape index: {}]
  %s17 = inlined_call_operand.vmem [shape: f32[1,32], index: 17, kind: input, shape index: {}]
  %s18 = inlined_call_operand.vmem [shape: f32[32,32], index: 18, kind: input, shape index: {}]
  %s19 = inlined_call_operand.vmem [shape: f32[32,32], index: 19, kind: input, shape index: {}]
  %s20 = inlined_call_operand.vmem [shape: f32[1,32], index: 20, kind: input, shape index: {}]
  %s21 = inlined_call_operand.vmem [shape: f32[32,128], index: 21, kind: input, shape index: {}]
  %s22 = inlined_call_operand.vmem [shape: f32[1,128], index: 22, kind: input, shape index: {}]
  %s23 = inlined_call_operand.vmem [shape: f32[112,128], index: 23, kind: output, shape index: {}]
  %s24 = sld [smem:[#allocation0]]
  $region102: #{interaction_net_forward.1} parent=0
    _
  %s26 = ssub.s32 1, %s24
  %s27 = scalar_select 0, %s26, %s24
  // Predicated region
  $region2: #{interaction_net_forward.1} parent=0 // pred_check
    _
  $region3: #{interaction_net_forward.1} parent=0 // pred_check_branch
    %29 = sbr.rel (0) target = $region5
  $region4: #{interaction_net_forward.1} parent=0 // pred_region
    _
  $region5: #{interaction_net_forward.1} parent=0 // pred_fallthru
    _
  // Predicated region
  $region6: #{interaction_net_forward.1} parent=0 // pred_check
    _
  $region7: #{interaction_net_forward.1} parent=0 // pred_check_branch
    %31 = sbr.rel (0) target = $region9
  $region8: #{interaction_net_forward.1} parent=0 // pred_region
    _
  $region9: #{interaction_net_forward.1} parent=0 // pred_fallthru
    _
  // Predicated region
  $region10: #{interaction_net_forward.1} parent=0 // pred_check
    _
  $region11: #{interaction_net_forward.1} parent=0 // pred_check_branch
    %33 = sbr.rel (0) target = $region13
  $region12: #{interaction_net_forward.1} parent=0 // pred_region
    _
  $region13: #{interaction_net_forward.1} parent=0 // pred_fallthru
    _
  // Predicated region
  $region14: #{interaction_net_forward.1} parent=0 // pred_check
    _
  $region15: #{interaction_net_forward.1} parent=0 // pred_check_branch
    %35 = sbr.rel (0) target = $region17
  $region16: #{interaction_net_forward.1} parent=0 // pred_region
    _
  $region17: #{interaction_net_forward.1} parent=0 // pred_fallthru
    _
  // Predicated region
  $region18: #{interaction_net_forward.1} parent=0 // pred_check
    _
  $region19: #{interaction_net_forward.1} parent=0 // pred_check_branch
    %37 = sbr.rel (0) target = $region21
  $region20: #{interaction_net_forward.1} parent=0 // pred_region
    _
  $region21: #{interaction_net_forward.1} parent=0 // pred_fallthru
    _
  // Predicated region
  $region22: #{interaction_net_forward.1} parent=0 // pred_check
    _
  $region23: #{interaction_net_forward.1} parent=0 // pred_check_branch
    %39 = sbr.rel (0) target = $region25
  $region24: #{interaction_net_forward.1} parent=0 // pred_region
    _
  $region25: #{interaction_net_forward.1} parent=0 // pred_fallthru
    _
  // Predicated region
  $region26: #{interaction_net_forward.1} parent=0 // pred_check
    _
  $region27: #{interaction_net_forward.1} parent=0 // pred_check_branch
    %41 = sbr.rel (0) target = $region29
  $region28: #{interaction_net_forward.1} parent=0 // pred_region
    _
  $region29: #{interaction_net_forward.1} parent=0 // pred_fallthru
    _
  // Predicated region
  $region30: #{interaction_net_forward.1} parent=0 // pred_check
    _
  $region31: #{interaction_net_forward.1} parent=0 // pred_check_branch
    %43 = sbr.rel (0) target = $region33
  $region32: #{interaction_net_forward.1} parent=0 // pred_region
    _
  $region33: #{interaction_net_forward.1} parent=0 // pred_fallthru
    _
  // Predicated region
  $region34: #{interaction_net_forward.1} parent=0 // pred_check
    _
  $region35: #{interaction_net_forward.1} parent=0 // pred_check_branch
    %45 = sbr.rel (0) target = $region37
  $region36: #{interaction_net_forward.1} parent=0 // pred_region
    _
  $region37: #{interaction_net_forward.1} parent=0 // pred_fallthru
    _
  // Predicated region
  $region38: #{interaction_net_forward.1} parent=0 // pred_check
    _
  $region39: #{interaction_net_forward.1} parent=0 // pred_check_branch
    %47 = sbr.rel (0) target = $region41
  $region40: #{interaction_net_forward.1} parent=0 // pred_region
    _
  $region41: #{interaction_net_forward.1} parent=0 // pred_fallthru
    _
  // Predicated region
  $region42: #{interaction_net_forward.1} parent=0 // pred_check
    _
  $region43: #{interaction_net_forward.1} parent=0 // pred_check_branch
    %49 = sbr.rel (0) target = $region45
  $region44: #{interaction_net_forward.1} parent=0 // pred_region
    _
  $region45: #{interaction_net_forward.1} parent=0 // pred_fallthru
    _
  // Predicated region
  $region46: #{interaction_net_forward.1} parent=0 // pred_check
    _
  $region47: #{interaction_net_forward.1} parent=0 // pred_check_branch
    %51 = sbr.rel (0) target = $region49
  $region48: #{interaction_net_forward.1} parent=0 // pred_region
    _
  $region49: #{interaction_net_forward.1} parent=0 // pred_fallthru
    _
  // Predicated region
  $region50: #{interaction_net_forward.1} parent=0 // pred_check
    _
  $region51: #{interaction_net_forward.1} parent=0 // pred_check_branch
    %53 = sbr.rel (0) target = $region53
  $region52: #{interaction_net_forward.1} parent=0 // pred_region
    _
  $region53: #{interaction_net_forward.1} parent=0 // pred_fallthru
    _
  // Predicated region
  $region54: #{interaction_net_forward.1} parent=0 // pred_check
    _
  $region55: #{interaction_net_forward.1} parent=0 // pred_check_branch
    %55 = sbr.rel (0) target = $region57
  $region56: #{interaction_net_forward.1} parent=0 // pred_region
    _
  $region57: #{interaction_net_forward.1} parent=0 // pred_fallthru
    _
  // Predicated region
  $region58: #{interaction_net_forward.1} parent=0 // pred_check
    _
  $region59: #{interaction_net_forward.1} parent=0 // pred_check_branch
    %57 = sbr.rel (0) target = $region61
  $region60: #{interaction_net_forward.1} parent=0 // pred_region
    _
  $region61: #{interaction_net_forward.1} parent=0 // pred_fallthru
    _
  // Predicated region
  $region62: #{interaction_net_forward.1} parent=0 // pred_check
    _
  $region63: #{interaction_net_forward.1} parent=0 // pred_check_branch
    %59 = sbr.rel (0) target = $region65
  $region64: #{interaction_net_forward.1} parent=0 // pred_region
    _
  $region65: #{interaction_net_forward.1} parent=0 // pred_fallthru
    _
  // Predicated region
  $region66: #{interaction_net_forward.1} parent=0 // pred_check
    _
  $region67: #{interaction_net_forward.1} parent=0 // pred_check_branch
    %61 = sbr.rel (0) target = $region69
  $region68: #{interaction_net_forward.1} parent=0 // pred_region
    _
  $region69: #{interaction_net_forward.1} parent=0 // pred_fallthru
    _
  // Predicated region
  $region70: #{interaction_net_forward.1} parent=0 // pred_check
    _
  $region71: #{interaction_net_forward.1} parent=0 // pred_check_branch
    %63 = sbr.rel (0) target = $region73
  $region72: #{interaction_net_forward.1} parent=0 // pred_region
    _
  $region73: #{interaction_net_forward.1} parent=0 // pred_fallthru
    _
  // Predicated region
  $region74: #{interaction_net_forward.1} parent=0 // pred_check
    _
  $region75: #{interaction_net_forward.1} parent=0 // pred_check_branch
    %65 = sbr.rel (0) target = $region77
  $region76: #{interaction_net_forward.1} parent=0 // pred_region
    _
  $region77: #{interaction_net_forward.1} parent=0 // pred_fallthru
    _
  // Predicated region
  $region78: #{interaction_net_forward.1} parent=0 // pred_check
    _
  $region79: #{interaction_net_forward.1} parent=0 // pred_check_branch
    %67 = sbr.rel (0) target = $region81
  $region80: #{interaction_net_forward.1} parent=0 // pred_region
    _
  $region81: #{interaction_net_forward.1} parent=0 // pred_fallthru
    _
  // Predicated region
  $region82: #{interaction_net_forward.1} parent=0 // pred_check
    _
  $region83: #{interaction_net_forward.1} parent=0 // pred_check_branch
    %69 = sbr.rel (0) target = $region85
  $region84: #{interaction_net_forward.1} parent=0 // pred_region
    _
  $region85: #{interaction_net_forward.1} parent=0 // pred_fallthru
    _
  // Predicated region
  $region86: #{interaction_net_forward.1} parent=0 // pred_check
    _
  $region87: #{interaction_net_forward.1} parent=0 // pred_check_branch
    %71 = sbr.rel (0) target = $region89
  $region88: #{interaction_net_forward.1} parent=0 // pred_region
    _
  $region89: #{interaction_net_forward.1} parent=0 // pred_fallthru
    _
  // Predicated region
  $region90: #{interaction_net_forward.1} parent=0 // pred_check
    _
  $region91: #{interaction_net_forward.1} parent=0 // pred_check_branch
    %73 = sbr.rel (0) target = $region93
  $region92: #{interaction_net_forward.1} parent=0 // pred_region
    _
  $region93: #{interaction_net_forward.1} parent=0 // pred_fallthru
    _
  %v74 = vld [vmem:[%s0] sm:$0xff]
  %v75 = vld [vmem:[%s0 + $0x8] sm:$0xff]
  %v76 = vld [vmem:[%s1] sm:$0xff]
  %v77 = vld [vmem:[%s1 + $0x8] sm:$0xff]
  %v78 = vld [vmem:[%s1 + $0x10] sm:$0xff]
  %v79 = vld [vmem:[%s1 + $0x18] sm:$0xff]
  %v80 = vld [vmem:[%s1 + $0x20] sm:$0xff]
  %v81 = vld [vmem:[%s1 + $0x28] sm:$0xff]
  %v82 = vld [vmem:[%s1 + $0x30] sm:$0xff]
  %v83 = vld [vmem:[%s1 + $0x38] sm:$0xff]
  %v84 = vld [vmem:[%s1 + $0x40] sm:$0xff]
  %v85 = vld [vmem:[%s1 + $0x48] sm:$0xff]
  %v86 = vld [vmem:[%s1 + $0x50] sm:$0xff]
  %v87 = vld [vmem:[%s1 + $0x58] sm:$0xff]
  %v88 = vld [vmem:[%s1 + $0x60] sm:$0xff]
  %v89 = vld [vmem:[%s1 + $0x68] sm:$0xff]
  %v90 = vld [vmem:[%s2] sm:$0xff]
  %v91 = vld [vmem:[%s2 + $0x8] sm:$0xff]
  %v92 = vld [vmem:[%s2 + $0x10] sm:$0xff]
  %v93 = vld [vmem:[%s2 + $0x18] sm:$0xff]
  %v94 = vld [vmem:[%s2 + $0x20] sm:$0xff]
  %v95 = vld [vmem:[%s2 + $0x28] sm:$0xff]
  %v96 = vld [vmem:[%s2 + $0x30] sm:$0xff]
  %v97 = vld [vmem:[%s2 + $0x38] sm:$0xff]
  %v98 = vld [vmem:[%s2 + $0x40] sm:$0xff]
  %v99 = vld [vmem:[%s2 + $0x48] sm:$0xff]
  %v100 = vld [vmem:[%s2 + $0x50] sm:$0xff]
  %v101 = vld [vmem:[%s2 + $0x58] sm:$0xff]
  %v102 = vld [vmem:[%s2 + $0x60] sm:$0xff]
  %v103 = vld [vmem:[%s2 + $0x68] sm:$0xff]
  %v104 = vld [vmem:[%s3] sm:$0xff]
  %v105 = vld [vmem:[%s3 + $0x8] sm:$0xff]
  %v106 = vld [vmem:[%s4] sm:$0xff]
  %v107 = vld [vmem:[%s4 + $0x8] sm:$0xff]
  %v108 = vld [vmem:[%s5] sm:$0x1]
  %v109 = vld [vmem:[%s6] sm:$0xff]
  %v110 = vld [vmem:[%s6 + $0x8] sm:$0xff]
  %v111 = vld [vmem:[%s6 + $0x10] sm:$0xff]
  %v112 = vld [vmem:[%s6 + $0x18] sm:$0xff]
  %v113 = vld [vmem:[%s7] sm:$0x1]
  %v115 = vlaneseq
  %v116 = vshrl.u32 %v115, 7
  %v117 = vsub.s32 0, %v116
  %v118 = vrot.slane %v108, %v117
  %vm120 = vcmask 130048
  %v122 = vsel %vm120, %v74, 0
  %v125 = vsel %vm120, %v75, 0
  %127 = vmatprep.subr.mxu0 0.0
  %128 = vmatpush1.msra.mxu0 %v106
  %129 = vmatprep.subr.mxu0 0.0
  %130 = vmatpush1.msra.mxu0 %v107
  %131 = vmatprep.subr.mxu0 0.0
  %132 = vmatpush1.msra.mxu0 0.0
  %133 = vmatprep.subr.mxu0 0.0
  %134 = vmatpush1.msra.mxu0 0.0
  %135 = vmatprep.subr.mxu0 0.0
  %136 = vmatpush1.msra.mxu0 0.0
  %137 = vmatprep.subr.mxu0 0.0
  %138 = vmatpush1.msra.mxu0 0.0
  %139 = vmatprep.subr.mxu0 0.0
  %140 = vmatpush1.msra.mxu0 0.0
  %141 = vmatprep.subr.mxu0 0.0
  %142 = vmatpush1.msra.mxu0 0.0
  %143 = vmatprep.subr.mxu0 0.0
  %144 = vmatpush1.msra.mxu0 0.0
  %145 = vmatprep.subr.mxu0 0.0
  %146 = vmatpush1.msra.mxu0 0.0
  %147 = vmatprep.subr.mxu0 0.0
  %148 = vmatpush1.msra.mxu0 0.0
  %149 = vmatprep.subr.mxu0 0.0
  %150 = vmatpush1.msra.mxu0 0.0
  %151 = vmatprep.subr.mxu0 0.0
  %152 = vmatpush1.msra.mxu0 0.0
  %153 = vmatprep.subr.mxu0 0.0
  %154 = vmatpush1.msra.mxu0 0.0
  %155 = vmatprep.subr.mxu0 0.0
  %156 = vmatpush1.msra.mxu0 0.0
  %157 = vmatprep.subr.mxu0 0.0
  %158 = vmatpush1.msra.mxu0 0.0
  %159 = vmatprep.subr.mxu0 0.0
  %160 = vmatpush1.msra.mxu0 0.0
  %161 = vmatprep.subr.mxu0 0.0
  %162 = vmatpush1.msra.mxu0 0.0
  %163 = vmatprep.subr.mxu0 0.0
  %164 = vmatpush1.msra.mxu0 0.0
  %165 = vmatprep.subr.mxu0 0.0
  %166 = vmatpush1.msra.mxu0 0.0
  %167 = vmatprep.subr.mxu0 0.0
  %168 = vmatpush1.msra.mxu0 0.0
  %169 = vmatprep.subr.mxu0 0.0
  %170 = vmatpush1.msra.mxu0 0.0
  %171 = vmatprep.subr.mxu0 0.0
  %172 = vmatpush1.msra.mxu0 0.0
  %173 = vmatprep.subr.mxu0 0.0
  %174 = vmatpush1.msra.mxu0 0.0
  %175 = vmatprep.subr.mxu0 0.0
  %176 = vmatpush1.msra.mxu0 0.0
  %177 = vmatprep.subr.mxu0 0.0
  %178 = vmatpush1.msra.mxu0 0.0
  %179 = vmatprep.subr.mxu0 0.0
  %180 = vmatpush1.msra.mxu0 0.0
  %181 = vmatprep.subr.mxu0 0.0
  %182 = vmatpush1.msra.mxu0 0.0
  %183 = vmatprep.subr.mxu0 0.0
  %184 = vmatpush1.msra.mxu0 0.0
  %185 = vmatprep.subr.mxu0 0.0
  %186 = vmatpush1.msra.mxu0 0.0
  %187 = vmatprep.subr.mxu0 0.0
  %188 = vmatpush1.msra.mxu0 0.0
  %189 = vmatprep.subr.mxu0 0.0
  %190 = vmatpush1.msra.mxu0 0.0
  %191 = vmatprep.mubr.f32.mxu0 0.0
  %192 = vmatmul.mubr.f32.gmra.mrb[0].mxu0 %v122
  %v193 = vpop.f32.mrb[0].mxu0
  %v194 = vadd.f32 %v118, %v193
  %v195 = vpop.f32.mrb[0].mxu0
  %196 = vmatprep.mubr.f32.mxu0 0.0
  %197 = vmatmul.mubr.f32.gmra.mrb[0].mxu0 %v125
  %v198 = vpop.f32.mrb[0].mxu0
  %v199 = vadd.f32 %v118, %v198
  %v200 = vpop.f32.mrb[0].mxu0
  %201 = vdwg.mxu0
  %vm202 = vcmp.gt.f32.partialorder %v194, 0.0
  %vm203 = vcmp.gt.f32.partialorder %v199, 0.0
  %v204 = vmin.f32 %v194, 0.0
  %v205 = vmin.f32 %v199, 0.0
  %v206 = vmul.f32 %v204, 1.442695
  %v207 = vpow.pop %v206
  %v208 = vmul.f32 %v205, 1.442695
  %v209 = vpow.pop %v208
  %v210 = vsub.f32 %v207, 1.0
  %v211 = vsub.f32 %v209, 1.0
  %v212 = vsel %vm202, %v194, %v210
  %v213 = vsel %vm203, %v199, %v211
  %v215 = vlaneseq
  %v216 = vshrl.u32 %v215, 7
  %v217 = vsub.s32 0, %v216
  %v218 = vrot.slane %v113, %v217
  %vm220 = vcmask 261120
  %v222 = vsel %vm220, %v212, 0
  %v225 = vsel %vm220, %v213, 0
  %227 = vmatprep.subr.mxu0 0.0
  %228 = vmatpush1.msra.mxu0 %v109
  %229 = vmatprep.subr.mxu0 0.0
  %230 = vmatpush1.msra.mxu0 %v110
  %231 = vmatprep.subr.mxu0 0.0
  %232 = vmatpush1.msra.mxu0 %v111
  %233 = vmatprep.subr.mxu0 0.0
  %234 = vmatpush1.msra.mxu0 %v112
  %235 = vmatprep.subr.mxu0 0.0
  %236 = vmatpush1.msra.mxu0 0.0
  %237 = vmatprep.subr.mxu0 0.0
  %238 = vmatpush1.msra.mxu0 0.0
  %239 = vmatprep.subr.mxu0 0.0
  %240 = vmatpush1.msra.mxu0 0.0
  %241 = vmatprep.subr.mxu0 0.0
  %242 = vmatpush1.msra.mxu0 0.0
  %243 = vmatprep.subr.mxu0 0.0
  %244 = vmatpush1.msra.mxu0 0.0
  %245 = vmatprep.subr.mxu0 0.0
  %246 = vmatpush1.msra.mxu0 0.0
  %247 = vmatprep.subr.mxu0 0.0
  %248 = vmatpush1.msra.mxu0 0.0
  %249 = vmatprep.subr.mxu0 0.0
  %250 = vmatpush1.msra.mxu0 0.0
  %251 = vmatprep.subr.mxu0 0.0
  %252 = vmatpush1.msra.mxu0 0.0
  %253 = vmatprep.subr.mxu0 0.0
  %254 = vmatpush1.msra.mxu0 0.0
  %255 = vmatprep.subr.mxu0 0.0
  %256 = vmatpush1.msra.mxu0 0.0
  %257 = vmatprep.subr.mxu0 0.0
  %258 = vmatpush1.msra.mxu0 0.0
  %259 = vmatprep.subr.mxu0 0.0
  %260 = vmatpush1.msra.mxu0 0.0
  %261 = vmatprep.subr.mxu0 0.0
  %262 = vmatpush1.msra.mxu0 0.0
  %263 = vmatprep.subr.mxu0 0.0
  %264 = vmatpush1.msra.mxu0 0.0
  %265 = vmatprep.subr.mxu0 0.0
  %266 = vmatpush1.msra.mxu0 0.0
  %267 = vmatprep.subr.mxu0 0.0
  %268 = vmatpush1.msra.mxu0 0.0
  %269 = vmatprep.subr.mxu0 0.0
  %270 = vmatpush1.msra.mxu0 0.0
  %271 = vmatprep.subr.mxu0 0.0
  %272 = vmatpush1.msra.mxu0 0.0
  %273 = vmatprep.subr.mxu0 0.0
  %274 = vmatpush1.msra.mxu0 0.0
  %275 = vmatprep.subr.mxu0 0.0
  %276 = vmatpush1.msra.mxu0 0.0
  %277 = vmatprep.subr.mxu0 0.0
  %278 = vmatpush1.msra.mxu0 0.0
  %279 = vmatprep.subr.mxu0 0.0
  %280 = vmatpush1.msra.mxu0 0.0
  %281 = vmatprep.subr.mxu0 0.0
  %282 = vmatpush1.msra.mxu0 0.0
  %283 = vmatprep.subr.mxu0 0.0
  %284 = vmatpush1.msra.mxu0 0.0
  %285 = vmatprep.subr.mxu0 0.0
  %286 = vmatpush1.msra.mxu0 0.0
  %287 = vmatprep.subr.mxu0 0.0
  %288 = vmatpush1.msra.mxu0 0.0
  %289 = vmatprep.subr.mxu0 0.0
  %290 = vmatpush1.msra.mxu0 0.0
  %291 = vmatprep.mubr.f32.mxu0 0.0
  %292 = vmatmul.mubr.f32.gmra.mrb[0].mxu0 %v222
  %v293 = vpop.f32.mrb[0].mxu0
  %v294 = vadd.f32 %v218, %v293
  %v295 = vpop.f32.mrb[0].mxu0
  %296 = vmatprep.mubr.f32.mxu0 0.0
  %297 = vmatmul.mubr.f32.gmra.mrb[0].mxu0 %v225
  %v298 = vpop.f32.mrb[0].mxu0
  %v299 = vadd.f32 %v218, %v298
  %v300 = vpop.f32.mrb[0].mxu0
  %301 = vdwg.mxu0
  %vm302 = vcmp.gt.f32.partialorder %v294, 0.0
  %vm303 = vcmp.gt.f32.partialorder %v299, 0.0
  %v304 = vmin.f32 %v294, 0.0
  %v305 = vmin.f32 %v299, 0.0
  %v306 = vmul.f32 %v304, 1.442695
  %v307 = vpow.pop %v306
  %v308 = vmul.f32 %v305, 1.442695
  %v309 = vpow.pop %v308
  %v310 = vsub.f32 %v307, 1.0
  %v311 = vsub.f32 %v309, 1.0
  %v312 = vsel %vm302, %v294, %v310
  %v313 = vsel %vm303, %v299, %v311
  %v314 = vsel %vm220, %v312, 0.0
  %v315 = vsel %vm220, %v313, 0.0
  %v316 = vadd.f32 %v314, %v315
  %v317 = vrot.slane %v316, 4
  %v318 = vadd.f32 %v316, %v317
  %v319 = vrot.slane %v318, 2
  %v320 = vadd.f32 %v318, %v319
  %v321 = vrot.slane %v320, 1
  %v322 = vadd.f32 %v320, %v321
  %v323 = vrcp.pop 16.0
  %v324 = vmul.f32 %v322, %v323
  %v325 = vmul.f32 %v312, %v312
  %v326 = vmul.f32 %v313, %v313
  %v327 = vsel %vm220, %v325, 0.0
  %v328 = vsel %vm220, %v326, 0.0
  %v329 = vadd.f32 %v327, %v328
  %v330 = vrot.slane %v329, 4
  %v331 = vadd.f32 %v329, %v330
  %v332 = vrot.slane %v331, 2
  %v333 = vadd.f32 %v331, %v332
  %v334 = vrot.slane %v333, 1
  %v335 = vadd.f32 %v333, %v334
  %v336 = vmul.f32 %v335, %v323
  %v337 = vmul.f32 %v324, %v324
  %v338 = vsub.f32 %v336, %v337
  %v339 = vmax.f32 %v338, 0.0
  %v340 = vsub.f32 %v312, %v324
  %v341 = vsub.f32 %v313, %v324
  %v342 = vadd.f32 %v339, 1e-05
  %v343 = vrsqrt.pop %v342
  %v344 = vmul.f32 %v340, %v343
  %v345 = vmul.f32 %v341, %v343
  %v346 = vld [vmem:[%s8] sm:$0xff]
  %v347 = vld [vmem:[%s8 + $0x8] sm:$0xff]
  %v348 = vld [vmem:[%s8 + $0x10] sm:$0xff]
  %v349 = vld [vmem:[%s8 + $0x18] sm:$0xff]
  %v351 = vsel %vm220, %v344, 0
  %v354 = vsel %vm220, %v345, 0
  %356 = vmatprep.subr.mxu0 0.0
  %357 = vmatpush1.msra.mxu0 %v346
  %358 = vmatprep.subr.mxu0 0.0
  %359 = vmatpush1.msra.mxu0 %v347
  %360 = vmatprep.subr.mxu0 0.0
  %361 = vmatpush1.msra.mxu0 %v348
  %362 = vmatprep.subr.mxu0 0.0
  %363 = vmatpush1.msra.mxu0 %v349
  %364 = vmatprep.subr.mxu0 0.0
  %365 = vmatpush1.msra.mxu0 0.0
  %366 = vmatprep.subr.mxu0 0.0
  %367 = vmatpush1.msra.mxu0 0.0
  %368 = vmatprep.subr.mxu0 0.0
  %369 = vmatpush1.msra.mxu0 0.0
  %370 = vmatprep.subr.mxu0 0.0
  %371 = vmatpush1.msra.mxu0 0.0
  %372 = vmatprep.subr.mxu0 0.0
  %373 = vmatpush1.msra.mxu0 0.0
  %374 = vmatprep.subr.mxu0 0.0
  %375 = vmatpush1.msra.mxu0 0.0
  %376 = vmatprep.subr.mxu0 0.0
  %377 = vmatpush1.msra.mxu0 0.0
  %378 = vmatprep.subr.mxu0 0.0
  %379 = vmatpush1.msra.mxu0 0.0
  %380 = vmatprep.subr.mxu0 0.0
  %381 = vmatpush1.msra.mxu0 0.0
  %382 = vmatprep.subr.mxu0 0.0
  %383 = vmatpush1.msra.mxu0 0.0
  %384 = vmatprep.subr.mxu0 0.0
  %385 = vmatpush1.msra.mxu0 0.0
  %386 = vmatprep.subr.mxu0 0.0
  %387 = vmatpush1.msra.mxu0 0.0
  %388 = vmatprep.subr.mxu0 0.0
  %389 = vmatpush1.msra.mxu0 0.0
  %390 = vmatprep.subr.mxu0 0.0
  %391 = vmatpush1.msra.mxu0 0.0
  %392 = vmatprep.subr.mxu0 0.0
  %393 = vmatpush1.msra.mxu0 0.0
  %394 = vmatprep.subr.mxu0 0.0
  %395 = vmatpush1.msra.mxu0 0.0
  %396 = vmatprep.subr.mxu0 0.0
  %397 = vmatpush1.msra.mxu0 0.0
  %398 = vmatprep.subr.mxu0 0.0
  %399 = vmatpush1.msra.mxu0 0.0
  %400 = vmatprep.subr.mxu0 0.0
  %401 = vmatpush1.msra.mxu0 0.0
  %402 = vmatprep.subr.mxu0 0.0
  %403 = vmatpush1.msra.mxu0 0.0
  %404 = vmatprep.subr.mxu0 0.0
  %405 = vmatpush1.msra.mxu0 0.0
  %406 = vmatprep.subr.mxu0 0.0
  %407 = vmatpush1.msra.mxu0 0.0
  %408 = vmatprep.subr.mxu0 0.0
  %409 = vmatpush1.msra.mxu0 0.0
  %410 = vmatprep.subr.mxu0 0.0
  %411 = vmatpush1.msra.mxu0 0.0
  %412 = vmatprep.subr.mxu0 0.0
  %413 = vmatpush1.msra.mxu0 0.0
  %414 = vmatprep.subr.mxu0 0.0
  %415 = vmatpush1.msra.mxu0 0.0
  %416 = vmatprep.subr.mxu0 0.0
  %417 = vmatpush1.msra.mxu0 0.0
  %418 = vmatprep.subr.mxu0 0.0
  %419 = vmatpush1.msra.mxu0 0.0
  %420 = vmatprep.mubr.f32.mxu0 0.0
  %421 = vmatmul.mubr.f32.gmra.mrb[0].mxu0 %v351
  %v422 = vpop.f32.mrb[0].mxu0
  %v423 = vadd.f32 0.0, %v422
  %v424 = vpop.f32.mrb[0].mxu0
  %425 = vmatprep.mubr.f32.mxu0 0.0
  %426 = vmatmul.mubr.f32.gmra.mrb[0].mxu0 %v354
  %v427 = vpop.f32.mrb[0].mxu0
  %v428 = vadd.f32 0.0, %v427
  %v429 = vpop.f32.mrb[0].mxu0
  %430 = vdwg.mxu0
  %433 = vrot.lane.b32.xlu0 %v423, 96
  %v434 = vpop.permute.xlu0 %433
  %435 = vrot.lane.b32.xlu0 %v428, 96
  %v436 = vpop.permute.xlu0 %435
  %v440 = vsel %vm120, %v90, 0
  %v443 = vsel %vm120, %v91, 0
  %v446 = vsel %vm120, %v92, 0
  %v449 = vsel %vm120, %v93, 0
  %v452 = vsel %vm120, %v94, 0
  %v455 = vsel %vm120, %v95, 0
  %v458 = vsel %vm120, %v96, 0
  %v461 = vsel %vm120, %v97, 0
  %v464 = vsel %vm120, %v98, 0
  %v467 = vsel %vm120, %v99, 0
  %v470 = vsel %vm120, %v100, 0
  %v473 = vsel %vm120, %v101, 0
  %v476 = vsel %vm120, %v102, 0
  %v479 = vsel %vm120, %v103, 0
  %481 = vmatprep.subr.mxu0 0.0
  %482 = vmatpush1.msra.mxu0 %v434
  %483 = vmatprep.subr.mxu0 0.0
  %484 = vmatpush1.msra.mxu0 %v436
  %485 = vmatprep.subr.mxu0 0.0
  %486 = vmatpush1.msra.mxu0 0.0
  %487 = vmatprep.subr.mxu0 0.0
  %488 = vmatpush1.msra.mxu0 0.0
  %489 = vmatprep.subr.mxu0 0.0
  %490 = vmatpush1.msra.mxu0 0.0
  %491 = vmatprep.subr.mxu0 0.0
  %492 = vmatpush1.msra.mxu0 0.0
  %493 = vmatprep.subr.mxu0 0.0
  %494 = vmatpush1.msra.mxu0 0.0
  %495 = vmatprep.subr.mxu0 0.0
  %496 = vmatpush1.msra.mxu0 0.0
  %497 = vmatprep.subr.mxu0 0.0
  %498 = vmatpush1.msra.mxu0 0.0
  %499 = vmatprep.subr.mxu0 0.0
  %500 = vmatpush1.msra.mxu0 0.0
  %501 = vmatprep.subr.mxu0 0.0
  %502 = vmatpush1.msra.mxu0 0.0
  %503 = vmatprep.subr.mxu0 0.0
  %504 = vmatpush1.msra.mxu0 0.0
  %505 = vmatprep.subr.mxu0 0.0
  %506 = vmatpush1.msra.mxu0 0.0
  %507 = vmatprep.subr.mxu0 0.0
  %508 = vmatpush1.msra.mxu0 0.0
  %509 = vmatprep.subr.mxu0 0.0
  %510 = vmatpush1.msra.mxu0 0.0
  %511 = vmatprep.subr.mxu0 0.0
  %512 = vmatpush1.msra.mxu0 0.0
  %513 = vmatprep.subr.mxu0 0.0
  %514 = vmatpush1.msra.mxu0 0.0
  %515 = vmatprep.subr.mxu0 0.0
  %516 = vmatpush1.msra.mxu0 0.0
  %517 = vmatprep.subr.mxu0 0.0
  %518 = vmatpush1.msra.mxu0 0.0
  %519 = vmatprep.subr.mxu0 0.0
  %520 = vmatpush1.msra.mxu0 0.0
  %521 = vmatprep.subr.mxu0 0.0
  %522 = vmatpush1.msra.mxu0 0.0
  %523 = vmatprep.subr.mxu0 0.0
  %524 = vmatpush1.msra.mxu0 0.0
  %525 = vmatprep.subr.mxu0 0.0
  %526 = vmatpush1.msra.mxu0 0.0
  %527 = vmatprep.subr.mxu0 0.0
  %528 = vmatpush1.msra.mxu0 0.0
  %529 = vmatprep.subr.mxu0 0.0
  %530 = vmatpush1.msra.mxu0 0.0
  %531 = vmatprep.subr.mxu0 0.0
  %532 = vmatpush1.msra.mxu0 0.0
  %533 = vmatprep.subr.mxu0 0.0
  %534 = vmatpush1.msra.mxu0 0.0
  %535 = vmatprep.subr.mxu0 0.0
  %536 = vmatpush1.msra.mxu0 0.0
  %537 = vmatprep.subr.mxu0 0.0
  %538 = vmatpush1.msra.mxu0 0.0
  %539 = vmatprep.subr.mxu0 0.0
  %540 = vmatpush1.msra.mxu0 0.0
  %541 = vmatprep.subr.mxu0 0.0
  %542 = vmatpush1.msra.mxu0 0.0
  %543 = vmatprep.subr.mxu0 0.0
  %544 = vmatpush1.msra.mxu0 0.0
  %545 = vmatprep.mubr.f32.mxu0 0.0
  %546 = vmatmul.mubr.f32.gmra.mrb[0].mxu0 %v440
  %v547 = vpop.f32.mrb[0].mxu0
  %v548 = vadd.f32 0.0, %v547
  %v549 = vpop.f32.mrb[0].mxu0
  %550 = vmatprep.mubr.f32.mxu0 0.0
  %551 = vmatmul.mubr.f32.gmra.mrb[0].mxu0 %v443
  %v552 = vpop.f32.mrb[0].mxu0
  %v553 = vadd.f32 0.0, %v552
  %v554 = vpop.f32.mrb[0].mxu0
  %555 = vmatprep.mubr.f32.mxu0 0.0
  %556 = vmatmul.mubr.f32.gmra.mrb[0].mxu0 %v446
  %v557 = vpop.f32.mrb[0].mxu0
  %v558 = vadd.f32 0.0, %v557
  %v559 = vpop.f32.mrb[0].mxu0
  %560 = vmatprep.mubr.f32.mxu0 0.0
  %561 = vmatmul.mubr.f32.gmra.mrb[0].mxu0 %v449
  %v562 = vpop.f32.mrb[0].mxu0
  %v563 = vadd.f32 0.0, %v562
  %v564 = vpop.f32.mrb[0].mxu0
  %565 = vmatprep.mubr.f32.mxu0 0.0
  %566 = vmatmul.mubr.f32.gmra.mrb[0].mxu0 %v452
  %v567 = vpop.f32.mrb[0].mxu0
  %v568 = vadd.f32 0.0, %v567
  %v569 = vpop.f32.mrb[0].mxu0
  %570 = vmatprep.mubr.f32.mxu0 0.0
  %571 = vmatmul.mubr.f32.gmra.mrb[0].mxu0 %v455
  %v572 = vpop.f32.mrb[0].mxu0
  %v573 = vadd.f32 0.0, %v572
  %v574 = vpop.f32.mrb[0].mxu0
  %575 = vmatprep.mubr.f32.mxu0 0.0
  %576 = vmatmul.mubr.f32.gmra.mrb[0].mxu0 %v458
  %v577 = vpop.f32.mrb[0].mxu0
  %v578 = vadd.f32 0.0, %v577
  %v579 = vpop.f32.mrb[0].mxu0
  %580 = vmatprep.mubr.f32.mxu0 0.0
  %581 = vmatmul.mubr.f32.gmra.mrb[0].mxu0 %v461
  %v582 = vpop.f32.mrb[0].mxu0
  %v583 = vadd.f32 0.0, %v582
  %v584 = vpop.f32.mrb[0].mxu0
  %585 = vmatprep.mubr.f32.mxu0 0.0
  %586 = vmatmul.mubr.f32.gmra.mrb[0].mxu0 %v464
  %v587 = vpop.f32.mrb[0].mxu0
  %v588 = vadd.f32 0.0, %v587
  %v589 = vpop.f32.mrb[0].mxu0
  %590 = vmatprep.mubr.f32.mxu0 0.0
  %591 = vmatmul.mubr.f32.gmra.mrb[0].mxu0 %v467
  %v592 = vpop.f32.mrb[0].mxu0
  %v593 = vadd.f32 0.0, %v592
  %v594 = vpop.f32.mrb[0].mxu0
  %595 = vmatprep.mubr.f32.mxu0 0.0
  %596 = vmatmul.mubr.f32.gmra.mrb[0].mxu0 %v470
  %v597 = vpop.f32.mrb[0].mxu0
  %v598 = vadd.f32 0.0, %v597
  %v599 = vpop.f32.mrb[0].mxu0
  %600 = vmatprep.mubr.f32.mxu0 0.0
  %601 = vmatmul.mubr.f32.gmra.mrb[0].mxu0 %v473
  %v602 = vpop.f32.mrb[0].mxu0
  %v603 = vadd.f32 0.0, %v602
  %v604 = vpop.f32.mrb[0].mxu0
  %605 = vmatprep.mubr.f32.mxu0 0.0
  %606 = vmatmul.mubr.f32.gmra.mrb[0].mxu0 %v476
  %v607 = vpop.f32.mrb[0].mxu0
  %v608 = vadd.f32 0.0, %v607
  %v609 = vpop.f32.mrb[0].mxu0
  %610 = vmatprep.mubr.f32.mxu0 0.0
  %611 = vmatmul.mubr.f32.gmra.mrb[0].mxu0 %v479
  %v612 = vpop.f32.mrb[0].mxu0
  %v613 = vadd.f32 0.0, %v612
  %v614 = vpop.f32.mrb[0].mxu0
  %615 = vdwg.mxu0
  %v617 = vsel %vm120, %v76, 0
  %v620 = vsel %vm120, %v77, 0
  %v623 = vsel %vm120, %v78, 0
  %v626 = vsel %vm120, %v79, 0
  %v629 = vsel %vm120, %v80, 0
  %v632 = vsel %vm120, %v81, 0
  %v635 = vsel %vm120, %v82, 0
  %v638 = vsel %vm120, %v83, 0
  %v641 = vsel %vm120, %v84, 0
  %v644 = vsel %vm120, %v85, 0
  %v647 = vsel %vm120, %v86, 0
  %v650 = vsel %vm120, %v87, 0
  %v653 = vsel %vm120, %v88, 0
  %v656 = vsel %vm120, %v89, 0
  %658 = vmatprep.subr.mxu0 0.0
  %659 = vmatpush1.msra.mxu0 %v423
  %660 = vmatprep.subr.mxu0 0.0
  %661 = vmatpush1.msra.mxu0 %v428
  %662 = vmatprep.subr.mxu0 0.0
  %663 = vmatpush1.msra.mxu0 0.0
  %664 = vmatprep.subr.mxu0 0.0
  %665 = vmatpush1.msra.mxu0 0.0
  %666 = vmatprep.subr.mxu0 0.0
  %667 = vmatpush1.msra.mxu0 0.0
  %668 = vmatprep.subr.mxu0 0.0
  %669 = vmatpush1.msra.mxu0 0.0
  %670 = vmatprep.subr.mxu0 0.0
  %671 = vmatpush1.msra.mxu0 0.0
  %672 = vmatprep.subr.mxu0 0.0
  %673 = vmatpush1.msra.mxu0 0.0
  %674 = vmatprep.subr.mxu0 0.0
  %675 = vmatpush1.msra.mxu0 0.0
  %676 = vmatprep.subr.mxu0 0.0
  %677 = vmatpush1.msra.mxu0 0.0
  %678 = vmatprep.subr.mxu0 0.0
  %679 = vmatpush1.msra.mxu0 0.0
  %680 = vmatprep.subr.mxu0 0.0
  %681 = vmatpush1.msra.mxu0 0.0
  %682 = vmatprep.subr.mxu0 0.0
  %683 = vmatpush1.msra.mxu0 0.0
  %684 = vmatprep.subr.mxu0 0.0
  %685 = vmatpush1.msra.mxu0 0.0
  %686 = vmatprep.subr.mxu0 0.0
  %687 = vmatpush1.msra.mxu0 0.0
  %688 = vmatprep.subr.mxu0 0.0
  %689 = vmatpush1.msra.mxu0 0.0
  %690 = vmatprep.subr.mxu0 0.0
  %691 = vmatpush1.msra.mxu0 0.0
  %692 = vmatprep.subr.mxu0 0.0
  %693 = vmatpush1.msra.mxu0 0.0
  %694 = vmatprep.subr.mxu0 0.0
  %695 = vmatpush1.msra.mxu0 0.0
  %696 = vmatprep.subr.mxu0 0.0
  %697 = vmatpush1.msra.mxu0 0.0
  %698 = vmatprep.subr.mxu0 0.0
  %699 = vmatpush1.msra.mxu0 0.0
  %700 = vmatprep.subr.mxu0 0.0
  %701 = vmatpush1.msra.mxu0 0.0
  %702 = vmatprep.subr.mxu0 0.0
  %703 = vmatpush1.msra.mxu0 0.0
  %704 = vmatprep.subr.mxu0 0.0
  %705 = vmatpush1.msra.mxu0 0.0
  %706 = vmatprep.subr.mxu0 0.0
  %707 = vmatpush1.msra.mxu0 0.0
  %708 = vmatprep.subr.mxu0 0.0
  %709 = vmatpush1.msra.mxu0 0.0
  %710 = vmatprep.subr.mxu0 0.0
  %711 = vmatpush1.msra.mxu0 0.0
  %712 = vmatprep.subr.mxu0 0.0
  %713 = vmatpush1.msra.mxu0 0.0
  %714 = vmatprep.subr.mxu0 0.0
  %715 = vmatpush1.msra.mxu0 0.0
  %716 = vmatprep.subr.mxu0 0.0
  %717 = vmatpush1.msra.mxu0 0.0
  %718 = vmatprep.subr.mxu0 0.0
  %719 = vmatpush1.msra.mxu0 0.0
  %720 = vmatprep.subr.mxu0 0.0
  %721 = vmatpush1.msra.mxu0 0.0
  %722 = vmatprep.mubr.f32.mxu0 0.0
  %723 = vmatmul.mubr.f32.gmra.mrb[0].mxu0 %v617
  %v724 = vpop.f32.mrb[0].mxu0
  %v725 = vadd.f32 %v548, %v724
  %v726 = vpop.f32.mrb[0].mxu0
  %727 = vmatprep.mubr.f32.mxu0 0.0
  %728 = vmatmul.mubr.f32.gmra.mrb[0].mxu0 %v620
  %v729 = vpop.f32.mrb[0].mxu0
  %v730 = vadd.f32 %v553, %v729
  %v731 = vpop.f32.mrb[0].mxu0
  %732 = vmatprep.mubr.f32.mxu0 0.0
  %733 = vmatmul.mubr.f32.gmra.mrb[0].mxu0 %v623
  %v734 = vpop.f32.mrb[0].mxu0
  %v735 = vadd.f32 %v558, %v734
  %v736 = vpop.f32.mrb[0].mxu0
  %737 = vmatprep.mubr.f32.mxu0 0.0
  %738 = vmatmul.mubr.f32.gmra.mrb[0].mxu0 %v626
  %v739 = vpop.f32.mrb[0].mxu0
  %v740 = vadd.f32 %v563, %v739
  %v741 = vpop.f32.mrb[0].mxu0
  %742 = vmatprep.mubr.f32.mxu0 0.0
  %743 = vmatmul.mubr.f32.gmra.mrb[0].mxu0 %v629
  %v744 = vpop.f32.mrb[0].mxu0
  %v745 = vadd.f32 %v568, %v744
  %v746 = vpop.f32.mrb[0].mxu0
  %747 = vmatprep.mubr.f32.mxu0 0.0
  %748 = vmatmul.mubr.f32.gmra.mrb[0].mxu0 %v632
  %v749 = vpop.f32.mrb[0].mxu0
  %v750 = vadd.f32 %v573, %v749
  %v751 = vpop.f32.mrb[0].mxu0
  %752 = vmatprep.mubr.f32.mxu0 0.0
  %753 = vmatmul.mubr.f32.gmra.mrb[0].mxu0 %v635
  %v754 = vpop.f32.mrb[0].mxu0
  %v755 = vadd.f32 %v578, %v754
  %v756 = vpop.f32.mrb[0].mxu0
  %757 = vmatprep.mubr.f32.mxu0 0.0
  %758 = vmatmul.mubr.f32.gmra.mrb[0].mxu0 %v638
  %v759 = vpop.f32.mrb[0].mxu0
  %v760 = vadd.f32 %v583, %v759
  %v761 = vpop.f32.mrb[0].mxu0
  %762 = vmatprep.mubr.f32.mxu0 0.0
  %763 = vmatmul.mubr.f32.gmra.mrb[0].mxu0 %v641
  %v764 = vpop.f32.mrb[0].mxu0
  %v765 = vadd.f32 %v588, %v764
  %v766 = vpop.f32.mrb[0].mxu0
  %767 = vmatprep.mubr.f32.mxu0 0.0
  %768 = vmatmul.mubr.f32.gmra.mrb[0].mxu0 %v644
  %v769 = vpop.f32.mrb[0].mxu0
  %v770 = vadd.f32 %v593, %v769
  %v771 = vpop.f32.mrb[0].mxu0
  %772 = vmatprep.mubr.f32.mxu0 0.0
  %773 = vmatmul.mubr.f32.gmra.mrb[0].mxu0 %v647
  %v774 = vpop.f32.mrb[0].mxu0
  %v775 = vadd.f32 %v598, %v774
  %v776 = vpop.f32.mrb[0].mxu0
  %777 = vmatprep.mubr.f32.mxu0 0.0
  %778 = vmatmul.mubr.f32.gmra.mrb[0].mxu0 %v650
  %v779 = vpop.f32.mrb[0].mxu0
  %v780 = vadd.f32 %v603, %v779
  %v781 = vpop.f32.mrb[0].mxu0
  %782 = vmatprep.mubr.f32.mxu0 0.0
  %783 = vmatmul.mubr.f32.gmra.mrb[0].mxu0 %v653
  %v784 = vpop.f32.mrb[0].mxu0
  %v785 = vadd.f32 %v608, %v784
  %v786 = vpop.f32.mrb[0].mxu0
  %787 = vmatprep.mubr.f32.mxu0 0.0
  %788 = vmatmul.mubr.f32.gmra.mrb[0].mxu0 %v656
  %v789 = vpop.f32.mrb[0].mxu0
  %v790 = vadd.f32 %v613, %v789
  %v791 = vpop.f32.mrb[0].mxu0
  %792 = vdwg.mxu0
  %v793 = vld [vmem:[%s9] sm:$0x1]
  %v795 = vlaneseq
  %v796 = vshrl.u32 %v795, 7
  %v797 = vsub.s32 0, %v796
  %v798 = vrot.slane %v793, %v797
  %v800 = vadd.f32 %v725, %v798
  %v801 = vadd.f32 %v730, %v798
  %v802 = vadd.f32 %v735, %v798
  %v803 = vadd.f32 %v740, %v798
  %v804 = vadd.f32 %v745, %v798
  %v805 = vadd.f32 %v750, %v798
  %v806 = vadd.f32 %v755, %v798
  %v807 = vadd.f32 %v760, %v798
  %v808 = vadd.f32 %v765, %v798
  %v809 = vadd.f32 %v770, %v798
  %v810 = vadd.f32 %v775, %v798
  %v811 = vadd.f32 %v780, %v798
  %v812 = vadd.f32 %v785, %v798
  %v813 = vadd.f32 %v790, %v798
  %vm814 = vcmp.gt.f32.partialorder %v800, 0.0
  %vm815 = vcmp.gt.f32.partialorder %v801, 0.0
  %vm816 = vcmp.gt.f32.partialorder %v802, 0.0
  %vm817 = vcmp.gt.f32.partialorder %v803, 0.0
  %vm818 = vcmp.gt.f32.partialorder %v804, 0.0
  %vm819 = vcmp.gt.f32.partialorder %v805, 0.0
  %vm820 = vcmp.gt.f32.partialorder %v806, 0.0
  %vm821 = vcmp.gt.f32.partialorder %v807, 0.0
  %vm822 = vcmp.gt.f32.partialorder %v808, 0.0
  %vm823 = vcmp.gt.f32.partialorder %v809, 0.0
  %vm824 = vcmp.gt.f32.partialorder %v810, 0.0
  %vm825 = vcmp.gt.f32.partialorder %v811, 0.0
  %vm826 = vcmp.gt.f32.partialorder %v812, 0.0
  %vm827 = vcmp.gt.f32.partialorder %v813, 0.0
  %v828 = vmin.f32 %v800, 0.0
  %v829 = vmin.f32 %v801, 0.0
  %v830 = vmin.f32 %v802, 0.0
  %v831 = vmin.f32 %v803, 0.0
  %v832 = vmin.f32 %v804, 0.0
  %v833 = vmin.f32 %v805, 0.0
  %v834 = vmin.f32 %v806, 0.0
  %v835 = vmin.f32 %v807, 0.0
  %v836 = vmin.f32 %v808, 0.0
  %v837 = vmin.f32 %v809, 0.0
  %v838 = vmin.f32 %v810, 0.0
  %v839 = vmin.f32 %v811, 0.0
  %v840 = vmin.f32 %v812, 0.0
  %v841 = vmin.f32 %v813, 0.0
  %v842 = vmul.f32 %v828, 1.442695
  %v843 = vpow.pop %v842
  %v844 = vmul.f32 %v829, 1.442695
  %v845 = vpow.pop %v844
  %v846 = vmul.f32 %v830, 1.442695
  %v847 = vpow.pop %v846
  %v848 = vmul.f32 %v831, 1.442695
  %v849 = vpow.pop %v848
  %v850 = vmul.f32 %v832, 1.442695
  %v851 = vpow.pop %v850
  %v852 = vmul.f32 %v833, 1.442695
  %v853 = vpow.pop %v852
  %v854 = vmul.f32 %v834, 1.442695
  %v855 = vpow.pop %v854
  %v856 = vmul.f32 %v835, 1.442695
  %v857 = vpow.pop %v856
  %v858 = vmul.f32 %v836, 1.442695
  %v859 = vpow.pop %v858
  %v860 = vmul.f32 %v837, 1.442695
  %v861 = vpow.pop %v860
  %v862 = vmul.f32 %v838, 1.442695
  %v863 = vpow.pop %v862
  %v864 = vmul.f32 %v839, 1.442695
  %v865 = vpow.pop %v864
  %v866 = vmul.f32 %v840, 1.442695
  %v867 = vpow.pop %v866
  %v868 = vmul.f32 %v841, 1.442695
  %v869 = vpow.pop %v868
  %v870 = vsub.f32 %v843, 1.0
  %v871 = vsub.f32 %v845, 1.0
  %v872 = vsub.f32 %v847, 1.0
  %v873 = vsub.f32 %v849, 1.0
  %v874 = vsub.f32 %v851, 1.0
  %v875 = vsub.f32 %v853, 1.0
  %v876 = vsub.f32 %v855, 1.0
  %v877 = vsub.f32 %v857, 1.0
  %v878 = vsub.f32 %v859, 1.0
  %v879 = vsub.f32 %v861, 1.0
  %v880 = vsub.f32 %v863, 1.0
  %v881 = vsub.f32 %v865, 1.0
  %v882 = vsub.f32 %v867, 1.0
  %v883 = vsub.f32 %v869, 1.0
  %v884 = vsel %vm814, %v800, %v870
  %v885 = vsel %vm815, %v801, %v871
  %v886 = vsel %vm816, %v802, %v872
  %v887 = vsel %vm817, %v803, %v873
  %v888 = vsel %vm818, %v804, %v874
  %v889 = vsel %vm819, %v805, %v875
  %v890 = vsel %vm820, %v806, %v876
  %v891 = vsel %vm821, %v807, %v877
  %v892 = vsel %vm822, %v808, %v878
  %v893 = vsel %vm823, %v809, %v879
  %v894 = vsel %vm824, %v810, %v880
  %v895 = vsel %vm825, %v811, %v881
  %v896 = vsel %vm826, %v812, %v882
  %v897 = vsel %vm827, %v813, %v883
  %v898 = vld [vmem:[%s10] sm:$0xff]
  %v899 = vld [vmem:[%s10 + $0x8] sm:$0xff]
  %v900 = vld [vmem:[%s10 + $0x10] sm:$0xff]
  %v901 = vld [vmem:[%s10 + $0x18] sm:$0xff]
  %v902 = vld [vmem:[%s11] sm:$0x1]
  %v904 = vlaneseq
  %v905 = vshrl.u32 %v904, 7
  %v906 = vsub.s32 0, %v905
  %v907 = vrot.slane %v902, %v906
  %v910 = vsel %vm220, %v884, 0
  %v913 = vsel %vm220, %v885, 0
  %v916 = vsel %vm220, %v886, 0
  %v919 = vsel %vm220, %v887, 0
  %v922 = vsel %vm220, %v888, 0
  %v925 = vsel %vm220, %v889, 0
  %v928 = vsel %vm220, %v890, 0
  %v931 = vsel %vm220, %v891, 0
  %v934 = vsel %vm220, %v892, 0
  %v937 = vsel %vm220, %v893, 0
  %v940 = vsel %vm220, %v894, 0
  %v943 = vsel %vm220, %v895, 0
  %v946 = vsel %vm220, %v896, 0
  %v949 = vsel %vm220, %v897, 0
  %951 = vmatprep.subr.mxu0 0.0
  %952 = vmatpush1.msra.mxu0 %v898
  %953 = vmatprep.subr.mxu0 0.0
  %954 = vmatpush1.msra.mxu0 %v899
  %955 = vmatprep.subr.mxu0 0.0
  %956 = vmatpush1.msra.mxu0 %v900
  %957 = vmatprep.subr.mxu0 0.0
  %958 = vmatpush1.msra.mxu0 %v901
  %959 = vmatprep.subr.mxu0 0.0
  %960 = vmatpush1.msra.mxu0 0.0
  %961 = vmatprep.subr.mxu0 0.0
  %962 = vmatpush1.msra.mxu0 0.0
  %963 = vmatprep.subr.mxu0 0.0
  %964 = vmatpush1.msra.mxu0 0.0
  %965 = vmatprep.subr.mxu0 0.0
  %966 = vmatpush1.msra.mxu0 0.0
  %967 = vmatprep.subr.mxu0 0.0
  %968 = vmatpush1.msra.mxu0 0.0
  %969 = vmatprep.subr.mxu0 0.0
  %970 = vmatpush1.msra.mxu0 0.0
  %971 = vmatprep.subr.mxu0 0.0
  %972 = vmatpush1.msra.mxu0 0.0
  %973 = vmatprep.subr.mxu0 0.0
  %974 = vmatpush1.msra.mxu0 0.0
  %975 = vmatprep.subr.mxu0 0.0
  %976 = vmatpush1.msra.mxu0 0.0
  %977 = vmatprep.subr.mxu0 0.0
  %978 = vmatpush1.msra.mxu0 0.0
  %979 = vmatprep.subr.mxu0 0.0
  %980 = vmatpush1.msra.mxu0 0.0
  %981 = vmatprep.subr.mxu0 0.0
  %982 = vmatpush1.msra.mxu0 0.0
  %983 = vmatprep.subr.mxu0 0.0
  %984 = vmatpush1.msra.mxu0 0.0
  %985 = vmatprep.subr.mxu0 0.0
  %986 = vmatpush1.msra.mxu0 0.0
  %987 = vmatprep.subr.mxu0 0.0
  %988 = vmatpush1.msra.mxu0 0.0
  %989 = vmatprep.subr.mxu0 0.0
  %990 = vmatpush1.msra.mxu0 0.0
  %991 = vmatprep.subr.mxu0 0.0
  %992 = vmatpush1.msra.mxu0 0.0
  %993 = vmatprep.subr.mxu0 0.0
  %994 = vmatpush1.msra.mxu0 0.0
  %995 = vmatprep.subr.mxu0 0.0
  %996 = vmatpush1.msra.mxu0 0.0
  %997 = vmatprep.subr.mxu0 0.0
  %998 = vmatpush1.msra.mxu0 0.0
  %999 = vmatprep.subr.mxu0 0.0
  %1000 = vmatpush1.msra.mxu0 0.0
  %1001 = vmatprep.subr.mxu0 0.0
  %1002 = vmatpush1.msra.mxu0 0.0
  %1003 = vmatprep.subr.mxu0 0.0
  %1004 = vmatpush1.msra.mxu0 0.0
  %1005 = vmatprep.subr.mxu0 0.0
  %1006 = vmatpush1.msra.mxu0 0.0
  %1007 = vmatprep.subr.mxu0 0.0
  %1008 = vmatpush1.msra.mxu0 0.0
  %1009 = vmatprep.subr.mxu0 0.0
  %1010 = vmatpush1.msra.mxu0 0.0
  %1011 = vmatprep.subr.mxu0 0.0
  %1012 = vmatpush1.msra.mxu0 0.0
  %1013 = vmatprep.subr.mxu0 0.0
  %1014 = vmatpush1.msra.mxu0 0.0
  %1015 = vmatprep.mubr.f32.mxu0 0.0
  %1016 = vmatmul.mubr.f32.gmra.mrb[0].mxu0 %v910
  %v1017 = vpop.f32.mrb[0].mxu0
  %v1018 = vadd.f32 %v907, %v1017
  %v1019 = vpop.f32.mrb[0].mxu0
  %1020 = vmatprep.mubr.f32.mxu0 0.0
  %1021 = vmatmul.mubr.f32.gmra.mrb[0].mxu0 %v913
  %v1022 = vpop.f32.mrb[0].mxu0
  %v1023 = vadd.f32 %v907, %v1022
  %v1024 = vpop.f32.mrb[0].mxu0
  %1025 = vmatprep.mubr.f32.mxu0 0.0
  %1026 = vmatmul.mubr.f32.gmra.mrb[0].mxu0 %v916
  %v1027 = vpop.f32.mrb[0].mxu0
  %v1028 = vadd.f32 %v907, %v1027
  %v1029 = vpop.f32.mrb[0].mxu0
  %1030 = vmatprep.mubr.f32.mxu0 0.0
  %1031 = vmatmul.mubr.f32.gmra.mrb[0].mxu0 %v919
  %v1032 = vpop.f32.mrb[0].mxu0
  %v1033 = vadd.f32 %v907, %v1032
  %v1034 = vpop.f32.mrb[0].mxu0
  %1035 = vmatprep.mubr.f32.mxu0 0.0
  %1036 = vmatmul.mubr.f32.gmra.mrb[0].mxu0 %v922
  %v1037 = vpop.f32.mrb[0].mxu0
  %v1038 = vadd.f32 %v907, %v1037
  %v1039 = vpop.f32.mrb[0].mxu0
  %1040 = vmatprep.mubr.f32.mxu0 0.0
  %1041 = vmatmul.mubr.f32.gmra.mrb[0].mxu0 %v925
  %v1042 = vpop.f32.mrb[0].mxu0
  %v1043 = vadd.f32 %v907, %v1042
  %v1044 = vpop.f32.mrb[0].mxu0
  %1045 = vmatprep.mubr.f32.mxu0 0.0
  %1046 = vmatmul.mubr.f32.gmra.mrb[0].mxu0 %v928
  %v1047 = vpop.f32.mrb[0].mxu0
  %v1048 = vadd.f32 %v907, %v1047
  %v1049 = vpop.f32.mrb[0].mxu0
  %1050 = vmatprep.mubr.f32.mxu0 0.0
  %1051 = vmatmul.mubr.f32.gmra.mrb[0].mxu0 %v931
  %v1052 = vpop.f32.mrb[0].mxu0
  %v1053 = vadd.f32 %v907, %v1052
  %v1054 = vpop.f32.mrb[0].mxu0
  %1055 = vmatprep.mubr.f32.mxu0 0.0
  %1056 = vmatmul.mubr.f32.gmra.mrb[0].mxu0 %v934
  %v1057 = vpop.f32.mrb[0].mxu0
  %v1058 = vadd.f32 %v907, %v1057
  %v1059 = vpop.f32.mrb[0].mxu0
  %1060 = vmatprep.mubr.f32.mxu0 0.0
  %1061 = vmatmul.mubr.f32.gmra.mrb[0].mxu0 %v937
  %v1062 = vpop.f32.mrb[0].mxu0
  %v1063 = vadd.f32 %v907, %v1062
  %v1064 = vpop.f32.mrb[0].mxu0
  %1065 = vmatprep.mubr.f32.mxu0 0.0
  %1066 = vmatmul.mubr.f32.gmra.mrb[0].mxu0 %v940
  %v1067 = vpop.f32.mrb[0].mxu0
  %v1068 = vadd.f32 %v907, %v1067
  %v1069 = vpop.f32.mrb[0].mxu0
  %1070 = vmatprep.mubr.f32.mxu0 0.0
  %1071 = vmatmul.mubr.f32.gmra.mrb[0].mxu0 %v943
  %v1072 = vpop.f32.mrb[0].mxu0
  %v1073 = vadd.f32 %v907, %v1072
  %v1074 = vpop.f32.mrb[0].mxu0
  %1075 = vmatprep.mubr.f32.mxu0 0.0
  %1076 = vmatmul.mubr.f32.gmra.mrb[0].mxu0 %v946
  %v1077 = vpop.f32.mrb[0].mxu0
  %v1078 = vadd.f32 %v907, %v1077
  %v1079 = vpop.f32.mrb[0].mxu0
  %1080 = vmatprep.mubr.f32.mxu0 0.0
  %1081 = vmatmul.mubr.f32.gmra.mrb[0].mxu0 %v949
  %v1082 = vpop.f32.mrb[0].mxu0
  %v1083 = vadd.f32 %v907, %v1082
  %v1084 = vpop.f32.mrb[0].mxu0
  %1085 = vdwg.mxu0
  %vm1086 = vcmp.gt.f32.partialorder %v1018, 0.0
  %vm1087 = vcmp.gt.f32.partialorder %v1023, 0.0
  %vm1088 = vcmp.gt.f32.partialorder %v1028, 0.0
  %vm1089 = vcmp.gt.f32.partialorder %v1033, 0.0
  %vm1090 = vcmp.gt.f32.partialorder %v1038, 0.0
  %vm1091 = vcmp.gt.f32.partialorder %v1043, 0.0
  %vm1092 = vcmp.gt.f32.partialorder %v1048, 0.0
  %vm1093 = vcmp.gt.f32.partialorder %v1053, 0.0
  %vm1094 = vcmp.gt.f32.partialorder %v1058, 0.0
  %vm1095 = vcmp.gt.f32.partialorder %v1063, 0.0
  %vm1096 = vcmp.gt.f32.partialorder %v1068, 0.0
  %vm1097 = vcmp.gt.f32.partialorder %v1073, 0.0
  %vm1098 = vcmp.gt.f32.partialorder %v1078, 0.0
  %vm1099 = vcmp.gt.f32.partialorder %v1083, 0.0
  %v1100 = vmin.f32 %v1018, 0.0
  %v1101 = vmin.f32 %v1023, 0.0
  %v1102 = vmin.f32 %v1028, 0.0
  %v1103 = vmin.f32 %v1033, 0.0
  %v1104 = vmin.f32 %v1038, 0.0
  %v1105 = vmin.f32 %v1043, 0.0
  %v1106 = vmin.f32 %v1048, 0.0
  %v1107 = vmin.f32 %v1053, 0.0
  %v1108 = vmin.f32 %v1058, 0.0
  %v1109 = vmin.f32 %v1063, 0.0
  %v1110 = vmin.f32 %v1068, 0.0
  %v1111 = vmin.f32 %v1073, 0.0
  %v1112 = vmin.f32 %v1078, 0.0
  %v1113 = vmin.f32 %v1083, 0.0
  %v1114 = vmul.f32 %v1100, 1.442695
  %v1115 = vpow.pop %v1114
  %v1116 = vmul.f32 %v1101, 1.442695
  %v1117 = vpow.pop %v1116
  %v1118 = vmul.f32 %v1102, 1.442695
  %v1119 = vpow.pop %v1118
  %v1120 = vmul.f32 %v1103, 1.442695
  %v1121 = vpow.pop %v1120
  %v1122 = vmul.f32 %v1104, 1.442695
  %v1123 = vpow.pop %v1122
  %v1124 = vmul.f32 %v1105, 1.442695
  %v1125 = vpow.pop %v1124
  %v1126 = vmul.f32 %v1106, 1.442695
  %v1127 = vpow.pop %v1126
  %v1128 = vmul.f32 %v1107, 1.442695
  %v1129 = vpow.pop %v1128
  %v1130 = vmul.f32 %v1108, 1.442695
  %v1131 = vpow.pop %v1130
  %v1132 = vmul.f32 %v1109, 1.442695
  %v1133 = vpow.pop %v1132
  %v1134 = vmul.f32 %v1110, 1.442695
  %v1135 = vpow.pop %v1134
  %v1136 = vmul.f32 %v1111, 1.442695
  %v1137 = vpow.pop %v1136
  %v1138 = vmul.f32 %v1112, 1.442695
  %v1139 = vpow.pop %v1138
  %v1140 = vmul.f32 %v1113, 1.442695
  %v1141 = vpow.pop %v1140
  %v1142 = vsub.f32 %v1115, 1.0
  %v1143 = vsub.f32 %v1117, 1.0
  %v1144 = vsub.f32 %v1119, 1.0
  %v1145 = vsub.f32 %v1121, 1.0
  %v1146 = vsub.f32 %v1123, 1.0
  %v1147 = vsub.f32 %v1125, 1.0
  %v1148 = vsub.f32 %v1127, 1.0
  %v1149 = vsub.f32 %v1129, 1.0
  %v1150 = vsub.f32 %v1131, 1.0
  %v1151 = vsub.f32 %v1133, 1.0
  %v1152 = vsub.f32 %v1135, 1.0
  %v1153 = vsub.f32 %v1137, 1.0
  %v1154 = vsub.f32 %v1139, 1.0
  %v1155 = vsub.f32 %v1141, 1.0
  %v1156 = vsel %vm1086, %v1018, %v1142
  %v1157 = vsel %vm1087, %v1023, %v1143
  %v1158 = vsel %vm1088, %v1028, %v1144
  %v1159 = vsel %vm1089, %v1033, %v1145
  %v1160 = vsel %vm1090, %v1038, %v1146
  %v1161 = vsel %vm1091, %v1043, %v1147
  %v1162 = vsel %vm1092, %v1048, %v1148
  %v1163 = vsel %vm1093, %v1053, %v1149
  %v1164 = vsel %vm1094, %v1058, %v1150
  %v1165 = vsel %vm1095, %v1063, %v1151
  %v1166 = vsel %vm1096, %v1068, %v1152
  %v1167 = vsel %vm1097, %v1073, %v1153
  %v1168 = vsel %vm1098, %v1078, %v1154
  %v1169 = vsel %vm1099, %v1083, %v1155
  %v1170 = vsel %vm220, %v1156, 0.0
  %v1171 = vsel %vm220, %v1157, 0.0
  %v1172 = vadd.f32 %v1170, %v1171
  %v1173 = vsel %vm220, %v1158, 0.0
  %v1174 = vadd.f32 %v1172, %v1173
  %v1175 = vsel %vm220, %v1159, 0.0
  %v1176 = vadd.f32 %v1174, %v1175
  %v1177 = vsel %vm220, %v1160, 0.0
  %v1178 = vadd.f32 %v1176, %v1177
  %v1179 = vsel %vm220, %v1161, 0.0
  %v1180 = vadd.f32 %v1178, %v1179
  %v1181 = vsel %vm220, %v1162, 0.0
  %v1182 = vadd.f32 %v1180, %v1181
  %v1183 = vsel %vm220, %v1163, 0.0
  %v1184 = vadd.f32 %v1182, %v1183
  %v1185 = vsel %vm220, %v1164, 0.0
  %v1186 = vadd.f32 %v1184, %v1185
  %v1187 = vsel %vm220, %v1165, 0.0
  %v1188 = vadd.f32 %v1186, %v1187
  %v1189 = vsel %vm220, %v1166, 0.0
  %v1190 = vadd.f32 %v1188, %v1189
  %v1191 = vsel %vm220, %v1167, 0.0
  %v1192 = vadd.f32 %v1190, %v1191
  %v1193 = vsel %vm220, %v1168, 0.0
  %v1194 = vadd.f32 %v1192, %v1193
  %v1195 = vsel %vm220, %v1169, 0.0
  %v1196 = vadd.f32 %v1194, %v1195
  %v1197 = vrot.slane %v1196, 4
  %v1198 = vadd.f32 %v1196, %v1197
  %v1199 = vrot.slane %v1198, 2
  %v1200 = vadd.f32 %v1198, %v1199
  %v1201 = vrot.slane %v1200, 1
  %v1202 = vadd.f32 %v1200, %v1201
  %v1203 = vrcp.pop 112.0
  %v1204 = vmul.f32 %v1202, %v1203
  %v1205 = vmul.f32 %v1156, %v1156
  %v1206 = vmul.f32 %v1157, %v1157
  %v1207 = vmul.f32 %v1158, %v1158
  %v1208 = vmul.f32 %v1159, %v1159
  %v1209 = vmul.f32 %v1160, %v1160
  %v1210 = vmul.f32 %v1161, %v1161
  %v1211 = vmul.f32 %v1162, %v1162
  %v1212 = vmul.f32 %v1163, %v1163
  %v1213 = vmul.f32 %v1164, %v1164
  %v1214 = vmul.f32 %v1165, %v1165
  %v1215 = vmul.f32 %v1166, %v1166
  %v1216 = vmul.f32 %v1167, %v1167
  %v1217 = vmul.f32 %v1168, %v1168
  %v1218 = vmul.f32 %v1169, %v1169
  %v1219 = vsel %vm220, %v1205, 0.0
  %v1220 = vsel %vm220, %v1206, 0.0
  %v1221 = vadd.f32 %v1219, %v1220
  %v1222 = vsel %vm220, %v1207, 0.0
  %v1223 = vadd.f32 %v1221, %v1222
  %v1224 = vsel %vm220, %v1208, 0.0
  %v1225 = vadd.f32 %v1223, %v1224
  %v1226 = vsel %vm220, %v1209, 0.0
  %v1227 = vadd.f32 %v1225, %v1226
  %v1228 = vsel %vm220, %v1210, 0.0
  %v1229 = vadd.f32 %v1227, %v1228
  %v1230 = vsel %vm220, %v1211, 0.0
  %v1231 = vadd.f32 %v1229, %v1230
  %v1232 = vsel %vm220, %v1212, 0.0
  %v1233 = vadd.f32 %v1231, %v1232
  %v1234 = vsel %vm220, %v1213, 0.0
  %v1235 = vadd.f32 %v1233, %v1234
  %v1236 = vsel %vm220, %v1214, 0.0
  %v1237 = vadd.f32 %v1235, %v1236
  %v1238 = vsel %vm220, %v1215, 0.0
  %v1239 = vadd.f32 %v1237, %v1238
  %v1240 = vsel %vm220, %v1216, 0.0
  %v1241 = vadd.f32 %v1239, %v1240
  %v1242 = vsel %vm220, %v1217, 0.0
  %v1243 = vadd.f32 %v1241, %v1242
  %v1244 = vsel %vm220, %v1218, 0.0
  %v1245 = vadd.f32 %v1243, %v1244
  %v1246 = vrot.slane %v1245, 4
  %v1247 = vadd.f32 %v1245, %v1246
  %v1248 = vrot.slane %v1247, 2
  %v1249 = vadd.f32 %v1247, %v1248
  %v1250 = vrot.slane %v1249, 1
  %v1251 = vadd.f32 %v1249, %v1250
  %v1252 = vmul.f32 %v1251, %v1203
  %v1253 = vmul.f32 %v1204, %v1204
  %v1254 = vsub.f32 %v1252, %v1253
  %v1255 = vmax.f32 %v1254, 0.0
  %v1256 = vsub.f32 %v1156, %v1204
  %v1257 = vsub.f32 %v1157, %v1204
  %v1258 = vsub.f32 %v1158, %v1204
  %v1259 = vsub.f32 %v1159, %v1204
  %v1260 = vsub.f32 %v1160, %v1204
  %v1261 = vsub.f32 %v1161, %v1204
  %v1262 = vsub.f32 %v1162, %v1204
  %v1263 = vsub.f32 %v1163, %v1204
  %v1264 = vsub.f32 %v1164, %v1204
  %v1265 = vsub.f32 %v1165, %v1204
  %v1266 = vsub.f32 %v1166, %v1204
  %v1267 = vsub.f32 %v1167, %v1204
  %v1268 = vsub.f32 %v1168, %v1204
  %v1269 = vsub.f32 %v1169, %v1204
  %v1270 = vadd.f32 %v1255, 1e-05
  %v1271 = vrsqrt.pop %v1270
  %v1272 = vmul.f32 %v1256, %v1271
  %v1273 = vmul.f32 %v1257, %v1271
  %v1274 = vmul.f32 %v1258, %v1271
  %v1275 = vmul.f32 %v1259, %v1271
  %v1276 = vmul.f32 %v1260, %v1271
  %v1277 = vmul.f32 %v1261, %v1271
  %v1278 = vmul.f32 %v1262, %v1271
  %v1279 = vmul.f32 %v1263, %v1271
  %v1280 = vmul.f32 %v1264, %v1271
  %v1281 = vmul.f32 %v1265, %v1271
  %v1282 = vmul.f32 %v1266, %v1271
  %v1283 = vmul.f32 %v1267, %v1271
  %v1284 = vmul.f32 %v1268, %v1271
  %v1285 = vmul.f32 %v1269, %v1271
  %vm1286 = vcmask 916480
  %v1288 = vsel %vm1286, %v104, 0
  %v1291 = vsel %vm1286, %v105, 0
  %1293 = vmatprep.subr.mxu0 0.0
  %1294 = vmatpush1.msra.mxu0 %v1272
  %1295 = vmatprep.subr.mxu0 0.0
  %1296 = vmatpush1.msra.mxu0 %v1273
  %1297 = vmatprep.subr.mxu0 0.0
  %1298 = vmatpush1.msra.mxu0 %v1274
  %1299 = vmatprep.subr.mxu0 0.0
  %1300 = vmatpush1.msra.mxu0 %v1275
  %1301 = vmatprep.subr.mxu0 0.0
  %1302 = vmatpush1.msra.mxu0 %v1276
  %1303 = vmatprep.subr.mxu0 0.0
  %1304 = vmatpush1.msra.mxu0 %v1277
  %1305 = vmatprep.subr.mxu0 0.0
  %1306 = vmatpush1.msra.mxu0 %v1278
  %1307 = vmatprep.subr.mxu0 0.0
  %1308 = vmatpush1.msra.mxu0 %v1279
  %1309 = vmatprep.subr.mxu0 0.0
  %1310 = vmatpush1.msra.mxu0 %v1280
  %1311 = vmatprep.subr.mxu0 0.0
  %1312 = vmatpush1.msra.mxu0 %v1281
  %1313 = vmatprep.subr.mxu0 0.0
  %1314 = vmatpush1.msra.mxu0 %v1282
  %1315 = vmatprep.subr.mxu0 0.0
  %1316 = vmatpush1.msra.mxu0 %v1283
  %1317 = vmatprep.subr.mxu0 0.0
  %1318 = vmatpush1.msra.mxu0 %v1284
  %1319 = vmatprep.subr.mxu0 0.0
  %1320 = vmatpush1.msra.mxu0 %v1285
  %1321 = vmatprep.subr.mxu0 0.0
  %1322 = vmatpush1.msra.mxu0 0.0
  %1323 = vmatprep.subr.mxu0 0.0
  %1324 = vmatpush1.msra.mxu0 0.0
  %1325 = vmatprep.subr.mxu0 0.0
  %1326 = vmatpush1.msra.mxu0 0.0
  %1327 = vmatprep.subr.mxu0 0.0
  %1328 = vmatpush1.msra.mxu0 0.0
  %1329 = vmatprep.subr.mxu0 0.0
  %1330 = vmatpush1.msra.mxu0 0.0
  %1331 = vmatprep.subr.mxu0 0.0
  %1332 = vmatpush1.msra.mxu0 0.0
  %1333 = vmatprep.subr.mxu0 0.0
  %1334 = vmatpush1.msra.mxu0 0.0
  %1335 = vmatprep.subr.mxu0 0.0
  %1336 = vmatpush1.msra.mxu0 0.0
  %1337 = vmatprep.subr.mxu0 0.0
  %1338 = vmatpush1.msra.mxu0 0.0
  %1339 = vmatprep.subr.mxu0 0.0
  %1340 = vmatpush1.msra.mxu0 0.0
  %1341 = vmatprep.subr.mxu0 0.0
  %1342 = vmatpush1.msra.mxu0 0.0
  %1343 = vmatprep.subr.mxu0 0.0
  %1344 = vmatpush1.msra.mxu0 0.0
  %1345 = vmatprep.subr.mxu0 0.0
  %1346 = vmatpush1.msra.mxu0 0.0
  %1347 = vmatprep.subr.mxu0 0.0
  %1348 = vmatpush1.msra.mxu0 0.0
  %1349 = vmatprep.subr.mxu0 0.0
  %1350 = vmatpush1.msra.mxu0 0.0
  %1351 = vmatprep.subr.mxu0 0.0
  %1352 = vmatpush1.msra.mxu0 0.0
  %1353 = vmatprep.subr.mxu0 0.0
  %1354 = vmatpush1.msra.mxu0 0.0
  %1355 = vmatprep.subr.mxu0 0.0
  %1356 = vmatpush1.msra.mxu0 0.0
  %1357 = vmatprep.mubr.f32.mxu0 0.0
  %1358 = vmatmul.mubr.f32.gmra.mrb[0].mxu0 %v1288
  %v1359 = vpop.f32.mrb[0].mxu0
  %v1360 = vadd.f32 0.0, %v1359
  %v1361 = vpop.f32.mrb[0].mxu0
  %1362 = vmatprep.mubr.f32.mxu0 0.0
  %1363 = vmatmul.mubr.f32.gmra.mrb[0].mxu0 %v1291
  %v1364 = vpop.f32.mrb[0].mxu0
  %v1365 = vadd.f32 0.0, %v1364
  %v1366 = vpop.f32.mrb[0].mxu0
  %1367 = vdwg.mxu0
  %v1368 = vld [vmem:[%s12] sm:$0xff]
  %v1369 = vld [vmem:[%s12 + $0x8] sm:$0xff]
  %v1370 = vld [vmem:[%s12 + $0x10] sm:$0xff]
  %v1371 = vld [vmem:[%s12 + $0x18] sm:$0xff]
  %v1372 = vld [vmem:[%s13] sm:$0x1]
  %v1373 = vld [vmem:[%s14] sm:$0xff]
  %v1374 = vld [vmem:[%s14 + $0x8] sm:$0xff]
  %v1375 = vld [vmem:[%s14 + $0x10] sm:$0xff]
  %v1376 = vld [vmem:[%s14 + $0x18] sm:$0xff]
  %v1377 = vld [vmem:[%s15] sm:$0x1]
  %v1379 = vlaneseq
  %v1380 = vshrl.u32 %v1379, 7
  %v1381 = vsub.s32 0, %v1380
  %v1382 = vrot.slane %v1372, %v1381
  %v1385 = vsel %vm220, %v1360, 0
  %v1388 = vsel %vm220, %v1365, 0
  %1390 = vmatprep.subr.mxu0 0.0
  %1391 = vmatpush1.msra.mxu0 %v1368
  %1392 = vmatprep.subr.mxu0 0.0
  %1393 = vmatpush1.msra.mxu0 %v1369
  %1394 = vmatprep.subr.mxu0 0.0
  %1395 = vmatpush1.msra.mxu0 %v1370
  %1396 = vmatprep.subr.mxu0 0.0
  %1397 = vmatpush1.msra.mxu0 %v1371
  %1398 = vmatprep.subr.mxu0 0.0
  %1399 = vmatpush1.msra.mxu0 0.0
  %1400 = vmatprep.subr.mxu0 0.0
  %1401 = vmatpush1.msra.mxu0 0.0
  %1402 = vmatprep.subr.mxu0 0.0
  %1403 = vmatpush1.msra.mxu0 0.0
  %1404 = vmatprep.subr.mxu0 0.0
  %1405 = vmatpush1.msra.mxu0 0.0
  %1406 = vmatprep.subr.mxu0 0.0
  %1407 = vmatpush1.msra.mxu0 0.0
  %1408 = vmatprep.subr.mxu0 0.0
  %1409 = vmatpush1.msra.mxu0 0.0
  %1410 = vmatprep.subr.mxu0 0.0
  %1411 = vmatpush1.msra.mxu0 0.0
  %1412 = vmatprep.subr.mxu0 0.0
  %1413 = vmatpush1.msra.mxu0 0.0
  %1414 = vmatprep.subr.mxu0 0.0
  %1415 = vmatpush1.msra.mxu0 0.0
  %1416 = vmatprep.subr.mxu0 0.0
  %1417 = vmatpush1.msra.mxu0 0.0
  %1418 = vmatprep.subr.mxu0 0.0
  %1419 = vmatpush1.msra.mxu0 0.0
  %1420 = vmatprep.subr.mxu0 0.0
  %1421 = vmatpush1.msra.mxu0 0.0
  %1422 = vmatprep.subr.mxu0 0.0
  %1423 = vmatpush1.msra.mxu0 0.0
  %1424 = vmatprep.subr.mxu0 0.0
  %1425 = vmatpush1.msra.mxu0 0.0
  %1426 = vmatprep.subr.mxu0 0.0
  %1427 = vmatpush1.msra.mxu0 0.0
  %1428 = vmatprep.subr.mxu0 0.0
  %1429 = vmatpush1.msra.mxu0 0.0
  %1430 = vmatprep.subr.mxu0 0.0
  %1431 = vmatpush1.msra.mxu0 0.0
  %1432 = vmatprep.subr.mxu0 0.0
  %1433 = vmatpush1.msra.mxu0 0.0
  %1434 = vmatprep.subr.mxu0 0.0
  %1435 = vmatpush1.msra.mxu0 0.0
  %1436 = vmatprep.subr.mxu0 0.0
  %1437 = vmatpush1.msra.mxu0 0.0
  %1438 = vmatprep.subr.mxu0 0.0
  %1439 = vmatpush1.msra.mxu0 0.0
  %1440 = vmatprep.subr.mxu0 0.0
  %1441 = vmatpush1.msra.mxu0 0.0
  %1442 = vmatprep.subr.mxu0 0.0
  %1443 = vmatpush1.msra.mxu0 0.0
  %1444 = vmatprep.subr.mxu0 0.0
  %1445 = vmatpush1.msra.mxu0 0.0
  %1446 = vmatprep.subr.mxu0 0.0
  %1447 = vmatpush1.msra.mxu0 0.0
  %1448 = vmatprep.subr.mxu0 0.0
  %1449 = vmatpush1.msra.mxu0 0.0
  %1450 = vmatprep.subr.mxu0 0.0
  %1451 = vmatpush1.msra.mxu0 0.0
  %1452 = vmatprep.subr.mxu0 0.0
  %1453 = vmatpush1.msra.mxu0 0.0
  %1454 = vmatprep.mubr.f32.mxu0 0.0
  %1455 = vmatmul.mubr.f32.gmra.mrb[0].mxu0 %v1385
  %v1456 = vpop.f32.mrb[0].mxu0
  %v1457 = vadd.f32 %v1382, %v1456
  %v1458 = vpop.f32.mrb[0].mxu0
  %1459 = vmatprep.mubr.f32.mxu0 0.0
  %1460 = vmatmul.mubr.f32.gmra.mrb[0].mxu0 %v1388
  %v1461 = vpop.f32.mrb[0].mxu0
  %v1462 = vadd.f32 %v1382, %v1461
  %v1463 = vpop.f32.mrb[0].mxu0
  %1464 = vdwg.mxu0
  %vm1465 = vcmp.gt.f32.partialorder %v1457, 0.0
  %vm1466 = vcmp.gt.f32.partialorder %v1462, 0.0
  %v1467 = vmin.f32 %v1457, 0.0
  %v1468 = vmin.f32 %v1462, 0.0
  %v1469 = vmul.f32 %v1467, 1.442695
  %v1470 = vpow.pop %v1469
  %v1471 = vmul.f32 %v1468, 1.442695
  %v1472 = vpow.pop %v1471
  %v1473 = vsub.f32 %v1470, 1.0
  %v1474 = vsub.f32 %v1472, 1.0
  %v1475 = vsel %vm1465, %v1457, %v1473
  %v1476 = vsel %vm1466, %v1462, %v1474
  %v1478 = vlaneseq
  %v1479 = vshrl.u32 %v1478, 7
  %v1480 = vsub.s32 0, %v1479
  %v1481 = vrot.slane %v1377, %v1480
  %v1484 = vsel %vm220, %v1475, 0
  %v1487 = vsel %vm220, %v1476, 0
  %1489 = vmatprep.subr.mxu0 0.0
  %1490 = vmatpush1.msra.mxu0 %v1373
  %1491 = vmatprep.subr.mxu0 0.0
  %1492 = vmatpush1.msra.mxu0 %v1374
  %1493 = vmatprep.subr.mxu0 0.0
  %1494 = vmatpush1.msra.mxu0 %v1375
  %1495 = vmatprep.subr.mxu0 0.0
  %1496 = vmatpush1.msra.mxu0 %v1376
  %1497 = vmatprep.subr.mxu0 0.0
  %1498 = vmatpush1.msra.mxu0 0.0
  %1499 = vmatprep.subr.mxu0 0.0
  %1500 = vmatpush1.msra.mxu0 0.0
  %1501 = vmatprep.subr.mxu0 0.0
  %1502 = vmatpush1.msra.mxu0 0.0
  %1503 = vmatprep.subr.mxu0 0.0
  %1504 = vmatpush1.msra.mxu0 0.0
  %1505 = vmatprep.subr.mxu0 0.0
  %1506 = vmatpush1.msra.mxu0 0.0
  %1507 = vmatprep.subr.mxu0 0.0
  %1508 = vmatpush1.msra.mxu0 0.0
  %1509 = vmatprep.subr.mxu0 0.0
  %1510 = vmatpush1.msra.mxu0 0.0
  %1511 = vmatprep.subr.mxu0 0.0
  %1512 = vmatpush1.msra.mxu0 0.0
  %1513 = vmatprep.subr.mxu0 0.0
  %1514 = vmatpush1.msra.mxu0 0.0
  %1515 = vmatprep.subr.mxu0 0.0
  %1516 = vmatpush1.msra.mxu0 0.0
  %1517 = vmatprep.subr.mxu0 0.0
  %1518 = vmatpush1.msra.mxu0 0.0
  %1519 = vmatprep.subr.mxu0 0.0
  %1520 = vmatpush1.msra.mxu0 0.0
  %1521 = vmatprep.subr.mxu0 0.0
  %1522 = vmatpush1.msra.mxu0 0.0
  %1523 = vmatprep.subr.mxu0 0.0
  %1524 = vmatpush1.msra.mxu0 0.0
  %1525 = vmatprep.subr.mxu0 0.0
  %1526 = vmatpush1.msra.mxu0 0.0
  %1527 = vmatprep.subr.mxu0 0.0
  %1528 = vmatpush1.msra.mxu0 0.0
  %1529 = vmatprep.subr.mxu0 0.0
  %1530 = vmatpush1.msra.mxu0 0.0
  %1531 = vmatprep.subr.mxu0 0.0
  %1532 = vmatpush1.msra.mxu0 0.0
  %1533 = vmatprep.subr.mxu0 0.0
  %1534 = vmatpush1.msra.mxu0 0.0
  %1535 = vmatprep.subr.mxu0 0.0
  %1536 = vmatpush1.msra.mxu0 0.0
  %1537 = vmatprep.subr.mxu0 0.0
  %1538 = vmatpush1.msra.mxu0 0.0
  %1539 = vmatprep.subr.mxu0 0.0
  %1540 = vmatpush1.msra.mxu0 0.0
  %1541 = vmatprep.subr.mxu0 0.0
  %1542 = vmatpush1.msra.mxu0 0.0
  %1543 = vmatprep.subr.mxu0 0.0
  %1544 = vmatpush1.msra.mxu0 0.0
  %1545 = vmatprep.subr.mxu0 0.0
  %1546 = vmatpush1.msra.mxu0 0.0
  %1547 = vmatprep.subr.mxu0 0.0
  %1548 = vmatpush1.msra.mxu0 0.0
  %1549 = vmatprep.subr.mxu0 0.0
  %1550 = vmatpush1.msra.mxu0 0.0
  %1551 = vmatprep.subr.mxu0 0.0
  %1552 = vmatpush1.msra.mxu0 0.0
  %1553 = vmatprep.mubr.f32.mxu0 0.0
  %1554 = vmatmul.mubr.f32.gmra.mrb[0].mxu0 %v1484
  %v1555 = vpop.f32.mrb[0].mxu0
  %v1556 = vadd.f32 %v1481, %v1555
  %v1557 = vpop.f32.mrb[0].mxu0
  %1558 = vmatprep.mubr.f32.mxu0 0.0
  %1559 = vmatmul.mubr.f32.gmra.mrb[0].mxu0 %v1487
  %v1560 = vpop.f32.mrb[0].mxu0
  %v1561 = vadd.f32 %v1481, %v1560
  %v1562 = vpop.f32.mrb[0].mxu0
  %1563 = vdwg.mxu0
  %vm1564 = vcmp.gt.f32.partialorder %v1556, 0.0
  %vm1565 = vcmp.gt.f32.partialorder %v1561, 0.0
  %v1566 = vmin.f32 %v1556, 0.0
  %v1567 = vmin.f32 %v1561, 0.0
  %v1568 = vmul.f32 %v1566, 1.442695
  %v1569 = vpow.pop %v1568
  %v1570 = vmul.f32 %v1567, 1.442695
  %v1571 = vpow.pop %v1570
  %v1572 = vsub.f32 %v1569, 1.0
  %v1573 = vsub.f32 %v1571, 1.0
  %v1574 = vsel %vm1564, %v1556, %v1572
  %v1575 = vsel %vm1565, %v1561, %v1573
  %v1576 = vsel %vm220, %v1574, 0.0
  %v1577 = vsel %vm220, %v1575, 0.0
  %v1578 = vadd.f32 %v1576, %v1577
  %v1579 = vrot.slane %v1578, 4
  %v1580 = vadd.f32 %v1578, %v1579
  %v1581 = vrot.slane %v1580, 2
  %v1582 = vadd.f32 %v1580, %v1581
  %v1583 = vrot.slane %v1582, 1
  %v1584 = vadd.f32 %v1582, %v1583
  %v1585 = vmul.f32 %v1584, %v323
  %v1586 = vmul.f32 %v1574, %v1574
  %v1587 = vmul.f32 %v1575, %v1575
  %v1588 = vsel %vm220, %v1586, 0.0
  %v1589 = vsel %vm220, %v1587, 0.0
  %v1590 = vadd.f32 %v1588, %v1589
  %v1591 = vrot.slane %v1590, 4
  %v1592 = vadd.f32 %v1590, %v1591
  %v1593 = vrot.slane %v1592, 2
  %v1594 = vadd.f32 %v1592, %v1593
  %v1595 = vrot.slane %v1594, 1
  %v1596 = vadd.f32 %v1594, %v1595
  %v1597 = vmul.f32 %v1596, %v323
  %v1598 = vmul.f32 %v1585, %v1585
  %v1599 = vsub.f32 %v1597, %v1598
  %v1600 = vmax.f32 %v1599, 0.0
  %v1601 = vsub.f32 %v1574, %v1585
  %v1602 = vsub.f32 %v1575, %v1585
  %v1603 = vadd.f32 %v1600, 1e-05
  %v1604 = vrsqrt.pop %v1603
  %v1605 = vmul.f32 %v1601, %v1604
  %v1606 = vmul.f32 %v1602, %v1604
  %v1607 = vld [vmem:[%s16] sm:$0xff]
  %v1608 = vld [vmem:[%s16 + $0x8] sm:$0xff]
  %v1609 = vld [vmem:[%s16 + $0x10] sm:$0xff]
  %v1610 = vld [vmem:[%s16 + $0x18] sm:$0xff]
  %v1612 = vsel %vm220, %v1605, 0
  %v1615 = vsel %vm220, %v1606, 0
  %1617 = vmatprep.subr.mxu0 0.0
  %1618 = vmatpush1.msra.mxu0 %v1607
  %1619 = vmatprep.subr.mxu0 0.0
  %1620 = vmatpush1.msra.mxu0 %v1608
  %1621 = vmatprep.subr.mxu0 0.0
  %1622 = vmatpush1.msra.mxu0 %v1609
  %1623 = vmatprep.subr.mxu0 0.0
  %1624 = vmatpush1.msra.mxu0 %v1610
  %1625 = vmatprep.subr.mxu0 0.0
  %1626 = vmatpush1.msra.mxu0 0.0
  %1627 = vmatprep.subr.mxu0 0.0
  %1628 = vmatpush1.msra.mxu0 0.0
  %1629 = vmatprep.subr.mxu0 0.0
  %1630 = vmatpush1.msra.mxu0 0.0
  %1631 = vmatprep.subr.mxu0 0.0
  %1632 = vmatpush1.msra.mxu0 0.0
  %1633 = vmatprep.subr.mxu0 0.0
  %1634 = vmatpush1.msra.mxu0 0.0
  %1635 = vmatprep.subr.mxu0 0.0
  %1636 = vmatpush1.msra.mxu0 0.0
  %1637 = vmatprep.subr.mxu0 0.0
  %1638 = vmatpush1.msra.mxu0 0.0
  %1639 = vmatprep.subr.mxu0 0.0
  %1640 = vmatpush1.msra.mxu0 0.0
  %1641 = vmatprep.subr.mxu0 0.0
  %1642 = vmatpush1.msra.mxu0 0.0
  %1643 = vmatprep.subr.mxu0 0.0
  %1644 = vmatpush1.msra.mxu0 0.0
  %1645 = vmatprep.subr.mxu0 0.0
  %1646 = vmatpush1.msra.mxu0 0.0
  %1647 = vmatprep.subr.mxu0 0.0
  %1648 = vmatpush1.msra.mxu0 0.0
  %1649 = vmatprep.subr.mxu0 0.0
  %1650 = vmatpush1.msra.mxu0 0.0
  %1651 = vmatprep.subr.mxu0 0.0
  %1652 = vmatpush1.msra.mxu0 0.0
  %1653 = vmatprep.subr.mxu0 0.0
  %1654 = vmatpush1.msra.mxu0 0.0
  %1655 = vmatprep.subr.mxu0 0.0
  %1656 = vmatpush1.msra.mxu0 0.0
  %1657 = vmatprep.subr.mxu0 0.0
  %1658 = vmatpush1.msra.mxu0 0.0
  %1659 = vmatprep.subr.mxu0 0.0
  %1660 = vmatpush1.msra.mxu0 0.0
  %1661 = vmatprep.subr.mxu0 0.0
  %1662 = vmatpush1.msra.mxu0 0.0
  %1663 = vmatprep.subr.mxu0 0.0
  %1664 = vmatpush1.msra.mxu0 0.0
  %1665 = vmatprep.subr.mxu0 0.0
  %1666 = vmatpush1.msra.mxu0 0.0
  %1667 = vmatprep.subr.mxu0 0.0
  %1668 = vmatpush1.msra.mxu0 0.0
  %1669 = vmatprep.subr.mxu0 0.0
  %1670 = vmatpush1.msra.mxu0 0.0
  %1671 = vmatprep.subr.mxu0 0.0
  %1672 = vmatpush1.msra.mxu0 0.0
  %1673 = vmatprep.subr.mxu0 0.0
  %1674 = vmatpush1.msra.mxu0 0.0
  %1675 = vmatprep.subr.mxu0 0.0
  %1676 = vmatpush1.msra.mxu0 0.0
  %1677 = vmatprep.subr.mxu0 0.0
  %1678 = vmatpush1.msra.mxu0 0.0
  %1679 = vmatprep.subr.mxu0 0.0
  %1680 = vmatpush1.msra.mxu0 0.0
  %1681 = vmatprep.mubr.f32.mxu0 0.0
  %1682 = vmatmul.mubr.f32.gmra.mrb[0].mxu0 %v1612
  %v1683 = vpop.f32.mrb[0].mxu0
  %v1684 = vadd.f32 0.0, %v1683
  %v1685 = vpop.f32.mrb[0].mxu0
  %1686 = vmatprep.mubr.f32.mxu0 0.0
  %1687 = vmatmul.mubr.f32.gmra.mrb[0].mxu0 %v1615
  %v1688 = vpop.f32.mrb[0].mxu0
  %v1689 = vadd.f32 0.0, %v1688
  %v1690 = vpop.f32.mrb[0].mxu0
  %1691 = vdwg.mxu0
  %v1692 = vld [vmem:[%s18] sm:$0xff]
  %v1693 = vld [vmem:[%s18 + $0x8] sm:$0xff]
  %v1694 = vld [vmem:[%s18 + $0x10] sm:$0xff]
  %v1695 = vld [vmem:[%s18 + $0x18] sm:$0xff]
  %v1697 = vsel %vm220, %v1272, 0
  %v1700 = vsel %vm220, %v1273, 0
  %v1703 = vsel %vm220, %v1274, 0
  %v1706 = vsel %vm220, %v1275, 0
  %v1709 = vsel %vm220, %v1276, 0
  %v1712 = vsel %vm220, %v1277, 0
  %v1715 = vsel %vm220, %v1278, 0
  %v1718 = vsel %vm220, %v1279, 0
  %v1721 = vsel %vm220, %v1280, 0
  %v1724 = vsel %vm220, %v1281, 0
  %v1727 = vsel %vm220, %v1282, 0
  %v1730 = vsel %vm220, %v1283, 0
  %v1733 = vsel %vm220, %v1284, 0
  %v1736 = vsel %vm220, %v1285, 0
  %1738 = vmatprep.subr.mxu0 0.0
  %1739 = vmatpush1.msra.mxu0 %v1692
  %1740 = vmatprep.subr.mxu0 0.0
  %1741 = vmatpush1.msra.mxu0 %v1693
  %1742 = vmatprep.subr.mxu0 0.0
  %1743 = vmatpush1.msra.mxu0 %v1694
  %1744 = vmatprep.subr.mxu0 0.0
  %1745 = vmatpush1.msra.mxu0 %v1695
  %1746 = vmatprep.subr.mxu0 0.0
  %1747 = vmatpush1.msra.mxu0 0.0
  %1748 = vmatprep.subr.mxu0 0.0
  %1749 = vmatpush1.msra.mxu0 0.0
  %1750 = vmatprep.subr.mxu0 0.0
  %1751 = vmatpush1.msra.mxu0 0.0
  %1752 = vmatprep.subr.mxu0 0.0
  %1753 = vmatpush1.msra.mxu0 0.0
  %1754 = vmatprep.subr.mxu0 0.0
  %1755 = vmatpush1.msra.mxu0 0.0
  %1756 = vmatprep.subr.mxu0 0.0
  %1757 = vmatpush1.msra.mxu0 0.0
  %1758 = vmatprep.subr.mxu0 0.0
  %1759 = vmatpush1.msra.mxu0 0.0
  %1760 = vmatprep.subr.mxu0 0.0
  %1761 = vmatpush1.msra.mxu0 0.0
  %1762 = vmatprep.subr.mxu0 0.0
  %1763 = vmatpush1.msra.mxu0 0.0
  %1764 = vmatprep.subr.mxu0 0.0
  %1765 = vmatpush1.msra.mxu0 0.0
  %1766 = vmatprep.subr.mxu0 0.0
  %1767 = vmatpush1.msra.mxu0 0.0
  %1768 = vmatprep.subr.mxu0 0.0
  %1769 = vmatpush1.msra.mxu0 0.0
  %1770 = vmatprep.subr.mxu0 0.0
  %1771 = vmatpush1.msra.mxu0 0.0
  %1772 = vmatprep.subr.mxu0 0.0
  %1773 = vmatpush1.msra.mxu0 0.0
  %1774 = vmatprep.subr.mxu0 0.0
  %1775 = vmatpush1.msra.mxu0 0.0
  %1776 = vmatprep.subr.mxu0 0.0
  %1777 = vmatpush1.msra.mxu0 0.0
  %1778 = vmatprep.subr.mxu0 0.0
  %1779 = vmatpush1.msra.mxu0 0.0
  %1780 = vmatprep.subr.mxu0 0.0
  %1781 = vmatpush1.msra.mxu0 0.0
  %1782 = vmatprep.subr.mxu0 0.0
  %1783 = vmatpush1.msra.mxu0 0.0
  %1784 = vmatprep.subr.mxu0 0.0
  %1785 = vmatpush1.msra.mxu0 0.0
  %1786 = vmatprep.subr.mxu0 0.0
  %1787 = vmatpush1.msra.mxu0 0.0
  %1788 = vmatprep.subr.mxu0 0.0
  %1789 = vmatpush1.msra.mxu0 0.0
  %1790 = vmatprep.subr.mxu0 0.0
  %1791 = vmatpush1.msra.mxu0 0.0
  %1792 = vmatprep.subr.mxu0 0.0
  %1793 = vmatpush1.msra.mxu0 0.0
  %1794 = vmatprep.subr.mxu0 0.0
  %1795 = vmatpush1.msra.mxu0 0.0
  %1796 = vmatprep.subr.mxu0 0.0
  %1797 = vmatpush1.msra.mxu0 0.0
  %1798 = vmatprep.subr.mxu0 0.0
  %1799 = vmatpush1.msra.mxu0 0.0
  %1800 = vmatprep.subr.mxu0 0.0
  %1801 = vmatpush1.msra.mxu0 0.0
  %1802 = vmatprep.mubr.f32.mxu0 0.0
  %1803 = vmatmul.mubr.f32.gmra.mrb[0].mxu0 %v1697
  %v1804 = vpop.f32.mrb[0].mxu0
  %v1805 = vadd.f32 0.0, %v1804
  %v1806 = vpop.f32.mrb[0].mxu0
  %1807 = vmatprep.mubr.f32.mxu0 0.0
  %1808 = vmatmul.mubr.f32.gmra.mrb[0].mxu0 %v1700
  %v1809 = vpop.f32.mrb[0].mxu0
  %v1810 = vadd.f32 0.0, %v1809
  %v1811 = vpop.f32.mrb[0].mxu0
  %1812 = vmatprep.mubr.f32.mxu0 0.0
  %1813 = vmatmul.mubr.f32.gmra.mrb[0].mxu0 %v1703
  %v1814 = vpop.f32.mrb[0].mxu0
  %v1815 = vadd.f32 0.0, %v1814
  %v1816 = vpop.f32.mrb[0].mxu0
  %1817 = vmatprep.mubr.f32.mxu0 0.0
  %1818 = vmatmul.mubr.f32.gmra.mrb[0].mxu0 %v1706
  %v1819 = vpop.f32.mrb[0].mxu0
  %v1820 = vadd.f32 0.0, %v1819
  %v1821 = vpop.f32.mrb[0].mxu0
  %1822 = vmatprep.mubr.f32.mxu0 0.0
  %1823 = vmatmul.mubr.f32.gmra.mrb[0].mxu0 %v1709
  %v1824 = vpop.f32.mrb[0].mxu0
  %v1825 = vadd.f32 0.0, %v1824
  %v1826 = vpop.f32.mrb[0].mxu0
  %1827 = vmatprep.mubr.f32.mxu0 0.0
  %1828 = vmatmul.mubr.f32.gmra.mrb[0].mxu0 %v1712
  %v1829 = vpop.f32.mrb[0].mxu0
  %v1830 = vadd.f32 0.0, %v1829
  %v1831 = vpop.f32.mrb[0].mxu0
  %1832 = vmatprep.mubr.f32.mxu0 0.0
  %1833 = vmatmul.mubr.f32.gmra.mrb[0].mxu0 %v1715
  %v1834 = vpop.f32.mrb[0].mxu0
  %v1835 = vadd.f32 0.0, %v1834
  %v1836 = vpop.f32.mrb[0].mxu0
  %1837 = vmatprep.mubr.f32.mxu0 0.0
  %1838 = vmatmul.mubr.f32.gmra.mrb[0].mxu0 %v1718
  %v1839 = vpop.f32.mrb[0].mxu0
  %v1840 = vadd.f32 0.0, %v1839
  %v1841 = vpop.f32.mrb[0].mxu0
  %1842 = vmatprep.mubr.f32.mxu0 0.0
  %1843 = vmatmul.mubr.f32.gmra.mrb[0].mxu0 %v1721
  %v1844 = vpop.f32.mrb[0].mxu0
  %v1845 = vadd.f32 0.0, %v1844
  %v1846 = vpop.f32.mrb[0].mxu0
  %1847 = vmatprep.mubr.f32.mxu0 0.0
  %1848 = vmatmul.mubr.f32.gmra.mrb[0].mxu0 %v1724
  %v1849 = vpop.f32.mrb[0].mxu0
  %v1850 = vadd.f32 0.0, %v1849
  %v1851 = vpop.f32.mrb[0].mxu0
  %1852 = vmatprep.mubr.f32.mxu0 0.0
  %1853 = vmatmul.mubr.f32.gmra.mrb[0].mxu0 %v1727
  %v1854 = vpop.f32.mrb[0].mxu0
  %v1855 = vadd.f32 0.0, %v1854
  %v1856 = vpop.f32.mrb[0].mxu0
  %1857 = vmatprep.mubr.f32.mxu0 0.0
  %1858 = vmatmul.mubr.f32.gmra.mrb[0].mxu0 %v1730
  %v1859 = vpop.f32.mrb[0].mxu0
  %v1860 = vadd.f32 0.0, %v1859
  %v1861 = vpop.f32.mrb[0].mxu0
  %1862 = vmatprep.mubr.f32.mxu0 0.0
  %1863 = vmatmul.mubr.f32.gmra.mrb[0].mxu0 %v1733
  %v1864 = vpop.f32.mrb[0].mxu0
  %v1865 = vadd.f32 0.0, %v1864
  %v1866 = vpop.f32.mrb[0].mxu0
  %1867 = vmatprep.mubr.f32.mxu0 0.0
  %1868 = vmatmul.mubr.f32.gmra.mrb[0].mxu0 %v1736
  %v1869 = vpop.f32.mrb[0].mxu0
  %v1870 = vadd.f32 0.0, %v1869
  %v1871 = vpop.f32.mrb[0].mxu0
  %1872 = vdwg.mxu0
  %1875 = vrot.lane.b32.xlu0 %v1684, 96
  %v1876 = vpop.permute.xlu0 %1875
  %1877 = vrot.lane.b32.xlu0 %v1689, 96
  %v1878 = vpop.permute.xlu0 %1877
  %1881 = vmatprep.subr.mxu0 0.0
  %1882 = vmatpush1.msra.mxu0 %v1876
  %1883 = vmatprep.subr.mxu0 0.0
  %1884 = vmatpush1.msra.mxu0 %v1878
  %1885 = vmatprep.subr.mxu0 0.0
  %1886 = vmatpush1.msra.mxu0 0.0
  %1887 = vmatprep.subr.mxu0 0.0
  %1888 = vmatpush1.msra.mxu0 0.0
  %1889 = vmatprep.subr.mxu0 0.0
  %1890 = vmatpush1.msra.mxu0 0.0
  %1891 = vmatprep.subr.mxu0 0.0
  %1892 = vmatpush1.msra.mxu0 0.0
  %1893 = vmatprep.subr.mxu0 0.0
  %1894 = vmatpush1.msra.mxu0 0.0
  %1895 = vmatprep.subr.mxu0 0.0
  %1896 = vmatpush1.msra.mxu0 0.0
  %1897 = vmatprep.subr.mxu0 0.0
  %1898 = vmatpush1.msra.mxu0 0.0
  %1899 = vmatprep.subr.mxu0 0.0
  %1900 = vmatpush1.msra.mxu0 0.0
  %1901 = vmatprep.subr.mxu0 0.0
  %1902 = vmatpush1.msra.mxu0 0.0
  %1903 = vmatprep.subr.mxu0 0.0
  %1904 = vmatpush1.msra.mxu0 0.0
  %1905 = vmatprep.subr.mxu0 0.0
  %1906 = vmatpush1.msra.mxu0 0.0
  %1907 = vmatprep.subr.mxu0 0.0
  %1908 = vmatpush1.msra.mxu0 0.0
  %1909 = vmatprep.subr.mxu0 0.0
  %1910 = vmatpush1.msra.mxu0 0.0
  %1911 = vmatprep.subr.mxu0 0.0
  %1912 = vmatpush1.msra.mxu0 0.0
  %1913 = vmatprep.subr.mxu0 0.0
  %1914 = vmatpush1.msra.mxu0 0.0
  %1915 = vmatprep.subr.mxu0 0.0
  %1916 = vmatpush1.msra.mxu0 0.0
  %1917 = vmatprep.subr.mxu0 0.0
  %1918 = vmatpush1.msra.mxu0 0.0
  %1919 = vmatprep.subr.mxu0 0.0
  %1920 = vmatpush1.msra.mxu0 0.0
  %1921 = vmatprep.subr.mxu0 0.0
  %1922 = vmatpush1.msra.mxu0 0.0
  %1923 = vmatprep.subr.mxu0 0.0
  %1924 = vmatpush1.msra.mxu0 0.0
  %1925 = vmatprep.subr.mxu0 0.0
  %1926 = vmatpush1.msra.mxu0 0.0
  %1927 = vmatprep.subr.mxu0 0.0
  %1928 = vmatpush1.msra.mxu0 0.0
  %1929 = vmatprep.subr.mxu0 0.0
  %1930 = vmatpush1.msra.mxu0 0.0
  %1931 = vmatprep.subr.mxu0 0.0
  %1932 = vmatpush1.msra.mxu0 0.0
  %1933 = vmatprep.subr.mxu0 0.0
  %1934 = vmatpush1.msra.mxu0 0.0
  %1935 = vmatprep.subr.mxu0 0.0
  %1936 = vmatpush1.msra.mxu0 0.0
  %1937 = vmatprep.subr.mxu0 0.0
  %1938 = vmatpush1.msra.mxu0 0.0
  %1939 = vmatprep.subr.mxu0 0.0
  %1940 = vmatpush1.msra.mxu0 0.0
  %1941 = vmatprep.subr.mxu0 0.0
  %1942 = vmatpush1.msra.mxu0 0.0
  %1943 = vmatprep.subr.mxu0 0.0
  %1944 = vmatpush1.msra.mxu0 0.0
  %1945 = vmatprep.mubr.f32.mxu0 0.0
  %1946 = vmatmul.mubr.f32.gmra.mrb[0].mxu0 %v440
  %v1947 = vpop.f32.mrb[0].mxu0
  %v1948 = vadd.f32 0.0, %v1947
  %v1949 = vpop.f32.mrb[0].mxu0
  %1950 = vmatprep.mubr.f32.mxu0 0.0
  %1951 = vmatmul.mubr.f32.gmra.mrb[0].mxu0 %v443
  %v1952 = vpop.f32.mrb[0].mxu0
  %v1953 = vadd.f32 0.0, %v1952
  %v1954 = vpop.f32.mrb[0].mxu0
  %1955 = vmatprep.mubr.f32.mxu0 0.0
  %1956 = vmatmul.mubr.f32.gmra.mrb[0].mxu0 %v446
  %v1957 = vpop.f32.mrb[0].mxu0
  %v1958 = vadd.f32 0.0, %v1957
  %v1959 = vpop.f32.mrb[0].mxu0
  %1960 = vmatprep.mubr.f32.mxu0 0.0
  %1961 = vmatmul.mubr.f32.gmra.mrb[0].mxu0 %v449
  %v1962 = vpop.f32.mrb[0].mxu0
  %v1963 = vadd.f32 0.0, %v1962
  %v1964 = vpop.f32.mrb[0].mxu0
  %1965 = vmatprep.mubr.f32.mxu0 0.0
  %1966 = vmatmul.mubr.f32.gmra.mrb[0].mxu0 %v452
  %v1967 = vpop.f32.mrb[0].mxu0
  %v1968 = vadd.f32 0.0, %v1967
  %v1969 = vpop.f32.mrb[0].mxu0
  %1970 = vmatprep.mubr.f32.mxu0 0.0
  %1971 = vmatmul.mubr.f32.gmra.mrb[0].mxu0 %v455
  %v1972 = vpop.f32.mrb[0].mxu0
  %v1973 = vadd.f32 0.0, %v1972
  %v1974 = vpop.f32.mrb[0].mxu0
  %1975 = vmatprep.mubr.f32.mxu0 0.0
  %1976 = vmatmul.mubr.f32.gmra.mrb[0].mxu0 %v458
  %v1977 = vpop.f32.mrb[0].mxu0
  %v1978 = vadd.f32 0.0, %v1977
  %v1979 = vpop.f32.mrb[0].mxu0
  %1980 = vmatprep.mubr.f32.mxu0 0.0
  %1981 = vmatmul.mubr.f32.gmra.mrb[0].mxu0 %v461
  %v1982 = vpop.f32.mrb[0].mxu0
  %v1983 = vadd.f32 0.0, %v1982
  %v1984 = vpop.f32.mrb[0].mxu0
  %1985 = vmatprep.mubr.f32.mxu0 0.0
  %1986 = vmatmul.mubr.f32.gmra.mrb[0].mxu0 %v464
  %v1987 = vpop.f32.mrb[0].mxu0
  %v1988 = vadd.f32 0.0, %v1987
  %v1989 = vpop.f32.mrb[0].mxu0
  %1990 = vmatprep.mubr.f32.mxu0 0.0
  %1991 = vmatmul.mubr.f32.gmra.mrb[0].mxu0 %v467
  %v1992 = vpop.f32.mrb[0].mxu0
  %v1993 = vadd.f32 0.0, %v1992
  %v1994 = vpop.f32.mrb[0].mxu0
  %1995 = vmatprep.mubr.f32.mxu0 0.0
  %1996 = vmatmul.mubr.f32.gmra.mrb[0].mxu0 %v470
  %v1997 = vpop.f32.mrb[0].mxu0
  %v1998 = vadd.f32 0.0, %v1997
  %v1999 = vpop.f32.mrb[0].mxu0
  %2000 = vmatprep.mubr.f32.mxu0 0.0
  %2001 = vmatmul.mubr.f32.gmra.mrb[0].mxu0 %v473
  %v2002 = vpop.f32.mrb[0].mxu0
  %v2003 = vadd.f32 0.0, %v2002
  %v2004 = vpop.f32.mrb[0].mxu0
  %2005 = vmatprep.mubr.f32.mxu0 0.0
  %2006 = vmatmul.mubr.f32.gmra.mrb[0].mxu0 %v476
  %v2007 = vpop.f32.mrb[0].mxu0
  %v2008 = vadd.f32 0.0, %v2007
  %v2009 = vpop.f32.mrb[0].mxu0
  %2010 = vmatprep.mubr.f32.mxu0 0.0
  %2011 = vmatmul.mubr.f32.gmra.mrb[0].mxu0 %v479
  %v2012 = vpop.f32.mrb[0].mxu0
  %v2013 = vadd.f32 0.0, %v2012
  %v2014 = vpop.f32.mrb[0].mxu0
  %2015 = vdwg.mxu0
  %2016 = vmatprep.subr.mxu0 0.0
  %2017 = vmatpush1.msra.mxu0 %v1684
  %2018 = vmatprep.subr.mxu0 0.0
  %2019 = vmatpush1.msra.mxu0 %v1689
  %2020 = vmatprep.subr.mxu0 0.0
  %2021 = vmatpush1.msra.mxu0 0.0
  %2022 = vmatprep.subr.mxu0 0.0
  %2023 = vmatpush1.msra.mxu0 0.0
  %2024 = vmatprep.subr.mxu0 0.0
  %2025 = vmatpush1.msra.mxu0 0.0
  %2026 = vmatprep.subr.mxu0 0.0
  %2027 = vmatpush1.msra.mxu0 0.0
  %2028 = vmatprep.subr.mxu0 0.0
  %2029 = vmatpush1.msra.mxu0 0.0
  %2030 = vmatprep.subr.mxu0 0.0
  %2031 = vmatpush1.msra.mxu0 0.0
  %2032 = vmatprep.subr.mxu0 0.0
  %2033 = vmatpush1.msra.mxu0 0.0
  %2034 = vmatprep.subr.mxu0 0.0
  %2035 = vmatpush1.msra.mxu0 0.0
  %2036 = vmatprep.subr.mxu0 0.0
  %2037 = vmatpush1.msra.mxu0 0.0
  %2038 = vmatprep.subr.mxu0 0.0
  %2039 = vmatpush1.msra.mxu0 0.0
  %2040 = vmatprep.subr.mxu0 0.0
  %2041 = vmatpush1.msra.mxu0 0.0
  %2042 = vmatprep.subr.mxu0 0.0
  %2043 = vmatpush1.msra.mxu0 0.0
  %2044 = vmatprep.subr.mxu0 0.0
  %2045 = vmatpush1.msra.mxu0 0.0
  %2046 = vmatprep.subr.mxu0 0.0
  %2047 = vmatpush1.msra.mxu0 0.0
  %2048 = vmatprep.subr.mxu0 0.0
  %2049 = vmatpush1.msra.mxu0 0.0
  %2050 = vmatprep.subr.mxu0 0.0
  %2051 = vmatpush1.msra.mxu0 0.0
  %2052 = vmatprep.subr.mxu0 0.0
  %2053 = vmatpush1.msra.mxu0 0.0
  %2054 = vmatprep.subr.mxu0 0.0
  %2055 = vmatpush1.msra.mxu0 0.0
  %2056 = vmatprep.subr.mxu0 0.0
  %2057 = vmatpush1.msra.mxu0 0.0
  %2058 = vmatprep.subr.mxu0 0.0
  %2059 = vmatpush1.msra.mxu0 0.0
  %2060 = vmatprep.subr.mxu0 0.0
  %2061 = vmatpush1.msra.mxu0 0.0
  %2062 = vmatprep.subr.mxu0 0.0
  %2063 = vmatpush1.msra.mxu0 0.0
  %2064 = vmatprep.subr.mxu0 0.0
  %2065 = vmatpush1.msra.mxu0 0.0
  %2066 = vmatprep.subr.mxu0 0.0
  %2067 = vmatpush1.msra.mxu0 0.0
  %2068 = vmatprep.subr.mxu0 0.0
  %2069 = vmatpush1.msra.mxu0 0.0
  %2070 = vmatprep.subr.mxu0 0.0
  %2071 = vmatpush1.msra.mxu0 0.0
  %2072 = vmatprep.subr.mxu0 0.0
  %2073 = vmatpush1.msra.mxu0 0.0
  %2074 = vmatprep.subr.mxu0 0.0
  %2075 = vmatpush1.msra.mxu0 0.0
  %2076 = vmatprep.subr.mxu0 0.0
  %2077 = vmatpush1.msra.mxu0 0.0
  %2078 = vmatprep.subr.mxu0 0.0
  %2079 = vmatpush1.msra.mxu0 0.0
  %2080 = vmatprep.mubr.f32.mxu0 0.0
  %2081 = vmatmul.mubr.f32.gmra.mrb[0].mxu0 %v617
  %v2082 = vpop.f32.mrb[0].mxu0
  %v2083 = vadd.f32 %v1948, %v2082
  %v2084 = vpop.f32.mrb[0].mxu0
  %2085 = vmatprep.mubr.f32.mxu0 0.0
  %2086 = vmatmul.mubr.f32.gmra.mrb[0].mxu0 %v620
  %v2087 = vpop.f32.mrb[0].mxu0
  %v2088 = vadd.f32 %v1953, %v2087
  %v2089 = vpop.f32.mrb[0].mxu0
  %2090 = vmatprep.mubr.f32.mxu0 0.0
  %2091 = vmatmul.mubr.f32.gmra.mrb[0].mxu0 %v623
  %v2092 = vpop.f32.mrb[0].mxu0
  %v2093 = vadd.f32 %v1958, %v2092
  %v2094 = vpop.f32.mrb[0].mxu0
  %2095 = vmatprep.mubr.f32.mxu0 0.0
  %2096 = vmatmul.mubr.f32.gmra.mrb[0].mxu0 %v626
  %v2097 = vpop.f32.mrb[0].mxu0
  %v2098 = vadd.f32 %v1963, %v2097
  %v2099 = vpop.f32.mrb[0].mxu0
  %2100 = vmatprep.mubr.f32.mxu0 0.0
  %2101 = vmatmul.mubr.f32.gmra.mrb[0].mxu0 %v629
  %v2102 = vpop.f32.mrb[0].mxu0
  %v2103 = vadd.f32 %v1968, %v2102
  %v2104 = vpop.f32.mrb[0].mxu0
  %2105 = vmatprep.mubr.f32.mxu0 0.0
  %2106 = vmatmul.mubr.f32.gmra.mrb[0].mxu0 %v632
  %v2107 = vpop.f32.mrb[0].mxu0
  %v2108 = vadd.f32 %v1973, %v2107
  %v2109 = vpop.f32.mrb[0].mxu0
  %2110 = vmatprep.mubr.f32.mxu0 0.0
  %2111 = vmatmul.mubr.f32.gmra.mrb[0].mxu0 %v635
  %v2112 = vpop.f32.mrb[0].mxu0
  %v2113 = vadd.f32 %v1978, %v2112
  %v2114 = vpop.f32.mrb[0].mxu0
  %2115 = vmatprep.mubr.f32.mxu0 0.0
  %2116 = vmatmul.mubr.f32.gmra.mrb[0].mxu0 %v638
  %v2117 = vpop.f32.mrb[0].mxu0
  %v2118 = vadd.f32 %v1983, %v2117
  %v2119 = vpop.f32.mrb[0].mxu0
  %2120 = vmatprep.mubr.f32.mxu0 0.0
  %2121 = vmatmul.mubr.f32.gmra.mrb[0].mxu0 %v641
  %v2122 = vpop.f32.mrb[0].mxu0
  %v2123 = vadd.f32 %v1988, %v2122
  %v2124 = vpop.f32.mrb[0].mxu0
  %2125 = vmatprep.mubr.f32.mxu0 0.0
  %2126 = vmatmul.mubr.f32.gmra.mrb[0].mxu0 %v644
  %v2127 = vpop.f32.mrb[0].mxu0
  %v2128 = vadd.f32 %v1993, %v2127
  %v2129 = vpop.f32.mrb[0].mxu0
  %2130 = vmatprep.mubr.f32.mxu0 0.0
  %2131 = vmatmul.mubr.f32.gmra.mrb[0].mxu0 %v647
  %v2132 = vpop.f32.mrb[0].mxu0
  %v2133 = vadd.f32 %v1998, %v2132
  %v2134 = vpop.f32.mrb[0].mxu0
  %2135 = vmatprep.mubr.f32.mxu0 0.0
  %2136 = vmatmul.mubr.f32.gmra.mrb[0].mxu0 %v650
  %v2137 = vpop.f32.mrb[0].mxu0
  %v2138 = vadd.f32 %v2003, %v2137
  %v2139 = vpop.f32.mrb[0].mxu0
  %2140 = vmatprep.mubr.f32.mxu0 0.0
  %2141 = vmatmul.mubr.f32.gmra.mrb[0].mxu0 %v653
  %v2142 = vpop.f32.mrb[0].mxu0
  %v2143 = vadd.f32 %v2008, %v2142
  %v2144 = vpop.f32.mrb[0].mxu0
  %2145 = vmatprep.mubr.f32.mxu0 0.0
  %2146 = vmatmul.mubr.f32.gmra.mrb[0].mxu0 %v656
  %v2147 = vpop.f32.mrb[0].mxu0
  %v2148 = vadd.f32 %v2013, %v2147
  %v2149 = vpop.f32.mrb[0].mxu0
  %2150 = vdwg.mxu0
  %v2151 = vadd.f32 %v2083, %v1805
  %v2152 = vadd.f32 %v2088, %v1810
  %v2153 = vadd.f32 %v2093, %v1815
  %v2154 = vadd.f32 %v2098, %v1820
  %v2155 = vadd.f32 %v2103, %v1825
  %v2156 = vadd.f32 %v2108, %v1830
  %v2157 = vadd.f32 %v2113, %v1835
  %v2158 = vadd.f32 %v2118, %v1840
  %v2159 = vadd.f32 %v2123, %v1845
  %v2160 = vadd.f32 %v2128, %v1850
  %v2161 = vadd.f32 %v2133, %v1855
  %v2162 = vadd.f32 %v2138, %v1860
  %v2163 = vadd.f32 %v2143, %v1865
  %v2164 = vadd.f32 %v2148, %v1870
  %v2165 = vld [vmem:[%s17] sm:$0x1]
  %v2167 = vlaneseq
  %v2168 = vshrl.u32 %v2167, 7
  %v2169 = vsub.s32 0, %v2168
  %v2170 = vrot.slane %v2165, %v2169
  %v2172 = vadd.f32 %v2151, %v2170
  %v2173 = vadd.f32 %v2152, %v2170
  %v2174 = vadd.f32 %v2153, %v2170
  %v2175 = vadd.f32 %v2154, %v2170
  %v2176 = vadd.f32 %v2155, %v2170
  %v2177 = vadd.f32 %v2156, %v2170
  %v2178 = vadd.f32 %v2157, %v2170
  %v2179 = vadd.f32 %v2158, %v2170
  %v2180 = vadd.f32 %v2159, %v2170
  %v2181 = vadd.f32 %v2160, %v2170
  %v2182 = vadd.f32 %v2161, %v2170
  %v2183 = vadd.f32 %v2162, %v2170
  %v2184 = vadd.f32 %v2163, %v2170
  %v2185 = vadd.f32 %v2164, %v2170
  %vm2186 = vcmp.gt.f32.partialorder %v2172, 0.0
  %vm2187 = vcmp.gt.f32.partialorder %v2173, 0.0
  %vm2188 = vcmp.gt.f32.partialorder %v2174, 0.0
  %vm2189 = vcmp.gt.f32.partialorder %v2175, 0.0
  %vm2190 = vcmp.gt.f32.partialorder %v2176, 0.0
  %vm2191 = vcmp.gt.f32.partialorder %v2177, 0.0
  %vm2192 = vcmp.gt.f32.partialorder %v2178, 0.0
  %vm2193 = vcmp.gt.f32.partialorder %v2179, 0.0
  %vm2194 = vcmp.gt.f32.partialorder %v2180, 0.0
  %vm2195 = vcmp.gt.f32.partialorder %v2181, 0.0
  %vm2196 = vcmp.gt.f32.partialorder %v2182, 0.0
  %vm2197 = vcmp.gt.f32.partialorder %v2183, 0.0
  %vm2198 = vcmp.gt.f32.partialorder %v2184, 0.0
  %vm2199 = vcmp.gt.f32.partialorder %v2185, 0.0
  %v2200 = vmin.f32 %v2172, 0.0
  %v2201 = vmin.f32 %v2173, 0.0
  %v2202 = vmin.f32 %v2174, 0.0
  %v2203 = vmin.f32 %v2175, 0.0
  %v2204 = vmin.f32 %v2176, 0.0
  %v2205 = vmin.f32 %v2177, 0.0
  %v2206 = vmin.f32 %v2178, 0.0
  %v2207 = vmin.f32 %v2179, 0.0
  %v2208 = vmin.f32 %v2180, 0.0
  %v2209 = vmin.f32 %v2181, 0.0
  %v2210 = vmin.f32 %v2182, 0.0
  %v2211 = vmin.f32 %v2183, 0.0
  %v2212 = vmin.f32 %v2184, 0.0
  %v2213 = vmin.f32 %v2185, 0.0
  %v2214 = vmul.f32 %v2200, 1.442695
  %v2215 = vpow.pop %v2214
  %v2216 = vmul.f32 %v2201, 1.442695
  %v2217 = vpow.pop %v2216
  %v2218 = vmul.f32 %v2202, 1.442695
  %v2219 = vpow.pop %v2218
  %v2220 = vmul.f32 %v2203, 1.442695
  %v2221 = vpow.pop %v2220
  %v2222 = vmul.f32 %v2204, 1.442695
  %v2223 = vpow.pop %v2222
  %v2224 = vmul.f32 %v2205, 1.442695
  %v2225 = vpow.pop %v2224
  %v2226 = vmul.f32 %v2206, 1.442695
  %v2227 = vpow.pop %v2226
  %v2228 = vmul.f32 %v2207, 1.442695
  %v2229 = vpow.pop %v2228
  %v2230 = vmul.f32 %v2208, 1.442695
  %v2231 = vpow.pop %v2230
  %v2232 = vmul.f32 %v2209, 1.442695
  %v2233 = vpow.pop %v2232
  %v2234 = vmul.f32 %v2210, 1.442695
  %v2235 = vpow.pop %v2234
  %v2236 = vmul.f32 %v2211, 1.442695
  %v2237 = vpow.pop %v2236
  %v2238 = vmul.f32 %v2212, 1.442695
  %v2239 = vpow.pop %v2238
  %v2240 = vmul.f32 %v2213, 1.442695
  %v2241 = vpow.pop %v2240
  %v2242 = vsub.f32 %v2215, 1.0
  %v2243 = vsub.f32 %v2217, 1.0
  %v2244 = vsub.f32 %v2219, 1.0
  %v2245 = vsub.f32 %v2221, 1.0
  %v2246 = vsub.f32 %v2223, 1.0
  %v2247 = vsub.f32 %v2225, 1.0
  %v2248 = vsub.f32 %v2227, 1.0
  %v2249 = vsub.f32 %v2229, 1.0
  %v2250 = vsub.f32 %v2231, 1.0
  %v2251 = vsub.f32 %v2233, 1.0
  %v2252 = vsub.f32 %v2235, 1.0
  %v2253 = vsub.f32 %v2237, 1.0
  %v2254 = vsub.f32 %v2239, 1.0
  %v2255 = vsub.f32 %v2241, 1.0
  %v2256 = vsel %vm2186, %v2172, %v2242
  %v2257 = vsel %vm2187, %v2173, %v2243
  %v2258 = vsel %vm2188, %v2174, %v2244
  %v2259 = vsel %vm2189, %v2175, %v2245
  %v2260 = vsel %vm2190, %v2176, %v2246
  %v2261 = vsel %vm2191, %v2177, %v2247
  %v2262 = vsel %vm2192, %v2178, %v2248
  %v2263 = vsel %vm2193, %v2179, %v2249
  %v2264 = vsel %vm2194, %v2180, %v2250
  %v2265 = vsel %vm2195, %v2181, %v2251
  %v2266 = vsel %vm2196, %v2182, %v2252
  %v2267 = vsel %vm2197, %v2183, %v2253
  %v2268 = vsel %vm2198, %v2184, %v2254
  %v2269 = vsel %vm2199, %v2185, %v2255
  %v2270 = vld [vmem:[%s19] sm:$0xff]
  %v2271 = vld [vmem:[%s19 + $0x8] sm:$0xff]
  %v2272 = vld [vmem:[%s19 + $0x10] sm:$0xff]
  %v2273 = vld [vmem:[%s19 + $0x18] sm:$0xff]
  %v2274 = vld [vmem:[%s20] sm:$0x1]
  %v2276 = vlaneseq
  %v2277 = vshrl.u32 %v2276, 7
  %v2278 = vsub.s32 0, %v2277
  %v2279 = vrot.slane %v2274, %v2278
  %v2282 = vsel %vm220, %v2256, 0
  %v2285 = vsel %vm220, %v2257, 0
  %v2288 = vsel %vm220, %v2258, 0
  %v2291 = vsel %vm220, %v2259, 0
  %v2294 = vsel %vm220, %v2260, 0
  %v2297 = vsel %vm220, %v2261, 0
  %v2300 = vsel %vm220, %v2262, 0
  %v2303 = vsel %vm220, %v2263, 0
  %v2306 = vsel %vm220, %v2264, 0
  %v2309 = vsel %vm220, %v2265, 0
  %v2312 = vsel %vm220, %v2266, 0
  %v2315 = vsel %vm220, %v2267, 0
  %v2318 = vsel %vm220, %v2268, 0
  %v2321 = vsel %vm220, %v2269, 0
  %2323 = vmatprep.subr.mxu0 0.0
  %2324 = vmatpush1.msra.mxu0 %v2270
  %2325 = vmatprep.subr.mxu0 0.0
  %2326 = vmatpush1.msra.mxu0 %v2271
  %2327 = vmatprep.subr.mxu0 0.0
  %2328 = vmatpush1.msra.mxu0 %v2272
  %2329 = vmatprep.subr.mxu0 0.0
  %2330 = vmatpush1.msra.mxu0 %v2273
  %2331 = vmatprep.subr.mxu0 0.0
  %2332 = vmatpush1.msra.mxu0 0.0
  %2333 = vmatprep.subr.mxu0 0.0
  %2334 = vmatpush1.msra.mxu0 0.0
  %2335 = vmatprep.subr.mxu0 0.0
  %2336 = vmatpush1.msra.mxu0 0.0
  %2337 = vmatprep.subr.mxu0 0.0
  %2338 = vmatpush1.msra.mxu0 0.0
  %2339 = vmatprep.subr.mxu0 0.0
  %2340 = vmatpush1.msra.mxu0 0.0
  %2341 = vmatprep.subr.mxu0 0.0
  %2342 = vmatpush1.msra.mxu0 0.0
  %2343 = vmatprep.subr.mxu0 0.0
  %2344 = vmatpush1.msra.mxu0 0.0
  %2345 = vmatprep.subr.mxu0 0.0
  %2346 = vmatpush1.msra.mxu0 0.0
  %2347 = vmatprep.subr.mxu0 0.0
  %2348 = vmatpush1.msra.mxu0 0.0
  %2349 = vmatprep.subr.mxu0 0.0
  %2350 = vmatpush1.msra.mxu0 0.0
  %2351 = vmatprep.subr.mxu0 0.0
  %2352 = vmatpush1.msra.mxu0 0.0
  %2353 = vmatprep.subr.mxu0 0.0
  %2354 = vmatpush1.msra.mxu0 0.0
  %2355 = vmatprep.subr.mxu0 0.0
  %2356 = vmatpush1.msra.mxu0 0.0
  %2357 = vmatprep.subr.mxu0 0.0
  %2358 = vmatpush1.msra.mxu0 0.0
  %2359 = vmatprep.subr.mxu0 0.0
  %2360 = vmatpush1.msra.mxu0 0.0
  %2361 = vmatprep.subr.mxu0 0.0
  %2362 = vmatpush1.msra.mxu0 0.0
  %2363 = vmatprep.subr.mxu0 0.0
  %2364 = vmatpush1.msra.mxu0 0.0
  %2365 = vmatprep.subr.mxu0 0.0
  %2366 = vmatpush1.msra.mxu0 0.0
  %2367 = vmatprep.subr.mxu0 0.0
  %2368 = vmatpush1.msra.mxu0 0.0
  %2369 = vmatprep.subr.mxu0 0.0
  %2370 = vmatpush1.msra.mxu0 0.0
  %2371 = vmatprep.subr.mxu0 0.0
  %2372 = vmatpush1.msra.mxu0 0.0
  %2373 = vmatprep.subr.mxu0 0.0
  %2374 = vmatpush1.msra.mxu0 0.0
  %2375 = vmatprep.subr.mxu0 0.0
  %2376 = vmatpush1.msra.mxu0 0.0
  %2377 = vmatprep.subr.mxu0 0.0
  %2378 = vmatpush1.msra.mxu0 0.0
  %2379 = vmatprep.subr.mxu0 0.0
  %2380 = vmatpush1.msra.mxu0 0.0
  %2381 = vmatprep.subr.mxu0 0.0
  %2382 = vmatpush1.msra.mxu0 0.0
  %2383 = vmatprep.subr.mxu0 0.0
  %2384 = vmatpush1.msra.mxu0 0.0
  %2385 = vmatprep.subr.mxu0 0.0
  %2386 = vmatpush1.msra.mxu0 0.0
  %2387 = vmatprep.mubr.f32.mxu0 0.0
  %2388 = vmatmul.mubr.f32.gmra.mrb[0].mxu0 %v2282
  %v2389 = vpop.f32.mrb[0].mxu0
  %v2390 = vadd.f32 %v2279, %v2389
  %v2391 = vpop.f32.mrb[0].mxu0
  %2392 = vmatprep.mubr.f32.mxu0 0.0
  %2393 = vmatmul.mubr.f32.gmra.mrb[0].mxu0 %v2285
  %v2394 = vpop.f32.mrb[0].mxu0
  %v2395 = vadd.f32 %v2279, %v2394
  %v2396 = vpop.f32.mrb[0].mxu0
  %2397 = vmatprep.mubr.f32.mxu0 0.0
  %2398 = vmatmul.mubr.f32.gmra.mrb[0].mxu0 %v2288
  %v2399 = vpop.f32.mrb[0].mxu0
  %v2400 = vadd.f32 %v2279, %v2399
  %v2401 = vpop.f32.mrb[0].mxu0
  %2402 = vmatprep.mubr.f32.mxu0 0.0
  %2403 = vmatmul.mubr.f32.gmra.mrb[0].mxu0 %v2291
  %v2404 = vpop.f32.mrb[0].mxu0
  %v2405 = vadd.f32 %v2279, %v2404
  %v2406 = vpop.f32.mrb[0].mxu0
  %2407 = vmatprep.mubr.f32.mxu0 0.0
  %2408 = vmatmul.mubr.f32.gmra.mrb[0].mxu0 %v2294
  %v2409 = vpop.f32.mrb[0].mxu0
  %v2410 = vadd.f32 %v2279, %v2409
  %v2411 = vpop.f32.mrb[0].mxu0
  %2412 = vmatprep.mubr.f32.mxu0 0.0
  %2413 = vmatmul.mubr.f32.gmra.mrb[0].mxu0 %v2297
  %v2414 = vpop.f32.mrb[0].mxu0
  %v2415 = vadd.f32 %v2279, %v2414
  %v2416 = vpop.f32.mrb[0].mxu0
  %2417 = vmatprep.mubr.f32.mxu0 0.0
  %2418 = vmatmul.mubr.f32.gmra.mrb[0].mxu0 %v2300
  %v2419 = vpop.f32.mrb[0].mxu0
  %v2420 = vadd.f32 %v2279, %v2419
  %v2421 = vpop.f32.mrb[0].mxu0
  %2422 = vmatprep.mubr.f32.mxu0 0.0
  %2423 = vmatmul.mubr.f32.gmra.mrb[0].mxu0 %v2303
  %v2424 = vpop.f32.mrb[0].mxu0
  %v2425 = vadd.f32 %v2279, %v2424
  %v2426 = vpop.f32.mrb[0].mxu0
  %2427 = vmatprep.mubr.f32.mxu0 0.0
  %2428 = vmatmul.mubr.f32.gmra.mrb[0].mxu0 %v2306
  %v2429 = vpop.f32.mrb[0].mxu0
  %v2430 = vadd.f32 %v2279, %v2429
  %v2431 = vpop.f32.mrb[0].mxu0
  %2432 = vmatprep.mubr.f32.mxu0 0.0
  %2433 = vmatmul.mubr.f32.gmra.mrb[0].mxu0 %v2309
  %v2434 = vpop.f32.mrb[0].mxu0
  %v2435 = vadd.f32 %v2279, %v2434
  %v2436 = vpop.f32.mrb[0].mxu0
  %2437 = vmatprep.mubr.f32.mxu0 0.0
  %2438 = vmatmul.mubr.f32.gmra.mrb[0].mxu0 %v2312
  %v2439 = vpop.f32.mrb[0].mxu0
  %v2440 = vadd.f32 %v2279, %v2439
  %v2441 = vpop.f32.mrb[0].mxu0
  %2442 = vmatprep.mubr.f32.mxu0 0.0
  %2443 = vmatmul.mubr.f32.gmra.mrb[0].mxu0 %v2315
  %v2444 = vpop.f32.mrb[0].mxu0
  %v2445 = vadd.f32 %v2279, %v2444
  %v2446 = vpop.f32.mrb[0].mxu0
  %2447 = vmatprep.mubr.f32.mxu0 0.0
  %2448 = vmatmul.mubr.f32.gmra.mrb[0].mxu0 %v2318
  %v2449 = vpop.f32.mrb[0].mxu0
  %v2450 = vadd.f32 %v2279, %v2449
  %v2451 = vpop.f32.mrb[0].mxu0
  %2452 = vmatprep.mubr.f32.mxu0 0.0
  %2453 = vmatmul.mubr.f32.gmra.mrb[0].mxu0 %v2321
  %v2454 = vpop.f32.mrb[0].mxu0
  %v2455 = vadd.f32 %v2279, %v2454
  %v2456 = vpop.f32.mrb[0].mxu0
  %2457 = vdwg.mxu0
  %vm2458 = vcmp.gt.f32.partialorder %v2390, 0.0
  %vm2459 = vcmp.gt.f32.partialorder %v2395, 0.0
  %vm2460 = vcmp.gt.f32.partialorder %v2400, 0.0
  %vm2461 = vcmp.gt.f32.partialorder %v2405, 0.0
  %vm2462 = vcmp.gt.f32.partialorder %v2410, 0.0
  %vm2463 = vcmp.gt.f32.partialorder %v2415, 0.0
  %vm2464 = vcmp.gt.f32.partialorder %v2420, 0.0
  %vm2465 = vcmp.gt.f32.partialorder %v2425, 0.0
  %vm2466 = vcmp.gt.f32.partialorder %v2430, 0.0
  %vm2467 = vcmp.gt.f32.partialorder %v2435, 0.0
  %vm2468 = vcmp.gt.f32.partialorder %v2440, 0.0
  %vm2469 = vcmp.gt.f32.partialorder %v2445, 0.0
  %vm2470 = vcmp.gt.f32.partialorder %v2450, 0.0
  %vm2471 = vcmp.gt.f32.partialorder %v2455, 0.0
  %v2472 = vmin.f32 %v2390, 0.0
  %v2473 = vmin.f32 %v2395, 0.0
  %v2474 = vmin.f32 %v2400, 0.0
  %v2475 = vmin.f32 %v2405, 0.0
  %v2476 = vmin.f32 %v2410, 0.0
  %v2477 = vmin.f32 %v2415, 0.0
  %v2478 = vmin.f32 %v2420, 0.0
  %v2479 = vmin.f32 %v2425, 0.0
  %v2480 = vmin.f32 %v2430, 0.0
  %v2481 = vmin.f32 %v2435, 0.0
  %v2482 = vmin.f32 %v2440, 0.0
  %v2483 = vmin.f32 %v2445, 0.0
  %v2484 = vmin.f32 %v2450, 0.0
  %v2485 = vmin.f32 %v2455, 0.0
  %v2486 = vmul.f32 %v2472, 1.442695
  %v2487 = vpow.pop %v2486
  %v2488 = vmul.f32 %v2473, 1.442695
  %v2489 = vpow.pop %v2488
  %v2490 = vmul.f32 %v2474, 1.442695
  %v2491 = vpow.pop %v2490
  %v2492 = vmul.f32 %v2475, 1.442695
  %v2493 = vpow.pop %v2492
  %v2494 = vmul.f32 %v2476, 1.442695
  %v2495 = vpow.pop %v2494
  %v2496 = vmul.f32 %v2477, 1.442695
  %v2497 = vpow.pop %v2496
  %v2498 = vmul.f32 %v2478, 1.442695
  %v2499 = vpow.pop %v2498
  %v2500 = vmul.f32 %v2479, 1.442695
  %v2501 = vpow.pop %v2500
  %v2502 = vmul.f32 %v2480, 1.442695
  %v2503 = vpow.pop %v2502
  %v2504 = vmul.f32 %v2481, 1.442695
  %v2505 = vpow.pop %v2504
  %v2506 = vmul.f32 %v2482, 1.442695
  %v2507 = vpow.pop %v2506
  %v2508 = vmul.f32 %v2483, 1.442695
  %v2509 = vpow.pop %v2508
  %v2510 = vmul.f32 %v2484, 1.442695
  %v2511 = vpow.pop %v2510
  %v2512 = vmul.f32 %v2485, 1.442695
  %v2513 = vpow.pop %v2512
  %v2514 = vsub.f32 %v2487, 1.0
  %v2515 = vsub.f32 %v2489, 1.0
  %v2516 = vsub.f32 %v2491, 1.0
  %v2517 = vsub.f32 %v2493, 1.0
  %v2518 = vsub.f32 %v2495, 1.0
  %v2519 = vsub.f32 %v2497, 1.0
  %v2520 = vsub.f32 %v2499, 1.0
  %v2521 = vsub.f32 %v2501, 1.0
  %v2522 = vsub.f32 %v2503, 1.0
  %v2523 = vsub.f32 %v2505, 1.0
  %v2524 = vsub.f32 %v2507, 1.0
  %v2525 = vsub.f32 %v2509, 1.0
  %v2526 = vsub.f32 %v2511, 1.0
  %v2527 = vsub.f32 %v2513, 1.0
  %v2528 = vsel %vm2458, %v2390, %v2514
  %v2529 = vsel %vm2459, %v2395, %v2515
  %v2530 = vsel %vm2460, %v2400, %v2516
  %v2531 = vsel %vm2461, %v2405, %v2517
  %v2532 = vsel %vm2462, %v2410, %v2518
  %v2533 = vsel %vm2463, %v2415, %v2519
  %v2534 = vsel %vm2464, %v2420, %v2520
  %v2535 = vsel %vm2465, %v2425, %v2521
  %v2536 = vsel %vm2466, %v2430, %v2522
  %v2537 = vsel %vm2467, %v2435, %v2523
  %v2538 = vsel %vm2468, %v2440, %v2524
  %v2539 = vsel %vm2469, %v2445, %v2525
  %v2540 = vsel %vm2470, %v2450, %v2526
  %v2541 = vsel %vm2471, %v2455, %v2527
  %v2542 = vsel %vm220, %v2528, 0.0
  %v2543 = vsel %vm220, %v2529, 0.0
  %v2544 = vadd.f32 %v2542, %v2543
  %v2545 = vsel %vm220, %v2530, 0.0
  %v2546 = vadd.f32 %v2544, %v2545
  %v2547 = vsel %vm220, %v2531, 0.0
  %v2548 = vadd.f32 %v2546, %v2547
  %v2549 = vsel %vm220, %v2532, 0.0
  %v2550 = vadd.f32 %v2548, %v2549
  %v2551 = vsel %vm220, %v2533, 0.0
  %v2552 = vadd.f32 %v2550, %v2551
  %v2553 = vsel %vm220, %v2534, 0.0
  %v2554 = vadd.f32 %v2552, %v2553
  %v2555 = vsel %vm220, %v2535, 0.0
  %v2556 = vadd.f32 %v2554, %v2555
  %v2557 = vsel %vm220, %v2536, 0.0
  %v2558 = vadd.f32 %v2556, %v2557
  %v2559 = vsel %vm220, %v2537, 0.0
  %v2560 = vadd.f32 %v2558, %v2559
  %v2561 = vsel %vm220, %v2538, 0.0
  %v2562 = vadd.f32 %v2560, %v2561
  %v2563 = vsel %vm220, %v2539, 0.0
  %v2564 = vadd.f32 %v2562, %v2563
  %v2565 = vsel %vm220, %v2540, 0.0
  %v2566 = vadd.f32 %v2564, %v2565
  %v2567 = vsel %vm220, %v2541, 0.0
  %v2568 = vadd.f32 %v2566, %v2567
  %v2569 = vrot.slane %v2568, 4
  %v2570 = vadd.f32 %v2568, %v2569
  %v2571 = vrot.slane %v2570, 2
  %v2572 = vadd.f32 %v2570, %v2571
  %v2573 = vrot.slane %v2572, 1
  %v2574 = vadd.f32 %v2572, %v2573
  %v2575 = vmul.f32 %v2574, %v1203
  %v2576 = vmul.f32 %v2528, %v2528
  %v2577 = vmul.f32 %v2529, %v2529
  %v2578 = vmul.f32 %v2530, %v2530
  %v2579 = vmul.f32 %v2531, %v2531
  %v2580 = vmul.f32 %v2532, %v2532
  %v2581 = vmul.f32 %v2533, %v2533
  %v2582 = vmul.f32 %v2534, %v2534
  %v2583 = vmul.f32 %v2535, %v2535
  %v2584 = vmul.f32 %v2536, %v2536
  %v2585 = vmul.f32 %v2537, %v2537
  %v2586 = vmul.f32 %v2538, %v2538
  %v2587 = vmul.f32 %v2539, %v2539
  %v2588 = vmul.f32 %v2540, %v2540
  %v2589 = vmul.f32 %v2541, %v2541
  %v2590 = vsel %vm220, %v2576, 0.0
  %v2591 = vsel %vm220, %v2577, 0.0
  %v2592 = vadd.f32 %v2590, %v2591
  %v2593 = vsel %vm220, %v2578, 0.0
  %v2594 = vadd.f32 %v2592, %v2593
  %v2595 = vsel %vm220, %v2579, 0.0
  %v2596 = vadd.f32 %v2594, %v2595
  %v2597 = vsel %vm220, %v2580, 0.0
  %v2598 = vadd.f32 %v2596, %v2597
  %v2599 = vsel %vm220, %v2581, 0.0
  %v2600 = vadd.f32 %v2598, %v2599
  %v2601 = vsel %vm220, %v2582, 0.0
  %v2602 = vadd.f32 %v2600, %v2601
  %v2603 = vsel %vm220, %v2583, 0.0
  %v2604 = vadd.f32 %v2602, %v2603
  %v2605 = vsel %vm220, %v2584, 0.0
  %v2606 = vadd.f32 %v2604, %v2605
  %v2607 = vsel %vm220, %v2585, 0.0
  %v2608 = vadd.f32 %v2606, %v2607
  %v2609 = vsel %vm220, %v2586, 0.0
  %v2610 = vadd.f32 %v2608, %v2609
  %v2611 = vsel %vm220, %v2587, 0.0
  %v2612 = vadd.f32 %v2610, %v2611
  %v2613 = vsel %vm220, %v2588, 0.0
  %v2614 = vadd.f32 %v2612, %v2613
  %v2615 = vsel %vm220, %v2589, 0.0
  %v2616 = vadd.f32 %v2614, %v2615
  %v2617 = vrot.slane %v2616, 4
  %v2618 = vadd.f32 %v2616, %v2617
  %v2619 = vrot.slane %v2618, 2
  %v2620 = vadd.f32 %v2618, %v2619
  %v2621 = vrot.slane %v2620, 1
  %v2622 = vadd.f32 %v2620, %v2621
  %v2623 = vmul.f32 %v2622, %v1203
  %v2624 = vmul.f32 %v2575, %v2575
  %v2625 = vsub.f32 %v2623, %v2624
  %v2626 = vmax.f32 %v2625, 0.0
  %v2627 = vsub.f32 %v2528, %v2575
  %v2628 = vsub.f32 %v2529, %v2575
  %v2629 = vsub.f32 %v2530, %v2575
  %v2630 = vsub.f32 %v2531, %v2575
  %v2631 = vsub.f32 %v2532, %v2575
  %v2632 = vsub.f32 %v2533, %v2575
  %v2633 = vsub.f32 %v2534, %v2575
  %v2634 = vsub.f32 %v2535, %v2575
  %v2635 = vsub.f32 %v2536, %v2575
  %v2636 = vsub.f32 %v2537, %v2575
  %v2637 = vsub.f32 %v2538, %v2575
  %v2638 = vsub.f32 %v2539, %v2575
  %v2639 = vsub.f32 %v2540, %v2575
  %v2640 = vsub.f32 %v2541, %v2575
  %v2641 = vadd.f32 %v2626, 1e-05
  %v2642 = vrsqrt.pop %v2641
  %v2643 = vmul.f32 %v2627, %v2642
  %v2644 = vmul.f32 %v2628, %v2642
  %v2645 = vmul.f32 %v2629, %v2642
  %v2646 = vmul.f32 %v2630, %v2642
  %v2647 = vmul.f32 %v2631, %v2642
  %v2648 = vmul.f32 %v2632, %v2642
  %v2649 = vmul.f32 %v2633, %v2642
  %v2650 = vmul.f32 %v2634, %v2642
  %v2651 = vmul.f32 %v2635, %v2642
  %v2652 = vmul.f32 %v2636, %v2642
  %v2653 = vmul.f32 %v2637, %v2642
  %v2654 = vmul.f32 %v2638, %v2642
  %v2655 = vmul.f32 %v2639, %v2642
  %v2656 = vmul.f32 %v2640, %v2642
  %v2657 = vld [vmem:[%s21] sm:$0xff]
  %v2658 = vld [vmem:[%s21 + $0x8] sm:$0xff]
  %v2659 = vld [vmem:[%s21 + $0x10] sm:$0xff]
  %v2660 = vld [vmem:[%s21 + $0x18] sm:$0xff]
  %v2661 = vld [vmem:[%s22] sm:$0x1]
  %v2663 = vlaneseq
  %v2664 = vshrl.u32 %v2663, 7
  %v2665 = vsub.s32 0, %v2664
  %v2666 = vrot.slane %v2661, %v2665
  %v2669 = vsel %vm220, %v2643, 0
  %v2672 = vsel %vm220, %v2644, 0
  %v2675 = vsel %vm220, %v2645, 0
  %v2678 = vsel %vm220, %v2646, 0
  %v2681 = vsel %vm220, %v2647, 0
  %v2684 = vsel %vm220, %v2648, 0
  %v2687 = vsel %vm220, %v2649, 0
  %v2690 = vsel %vm220, %v2650, 0
  %v2693 = vsel %vm220, %v2651, 0
  %v2696 = vsel %vm220, %v2652, 0
  %v2699 = vsel %vm220, %v2653, 0
  %v2702 = vsel %vm220, %v2654, 0
  %v2705 = vsel %vm220, %v2655, 0
  %v2708 = vsel %vm220, %v2656, 0
  %2710 = vmatprep.subr.mxu0 0.0
  %2711 = vmatpush1.msra.mxu0 %v2657
  %2712 = vmatprep.subr.mxu0 0.0
  %2713 = vmatpush1.msra.mxu0 %v2658
  %2714 = vmatprep.subr.mxu0 0.0
  %2715 = vmatpush1.msra.mxu0 %v2659
  %2716 = vmatprep.subr.mxu0 0.0
  %2717 = vmatpush1.msra.mxu0 %v2660
  %2718 = vmatprep.subr.mxu0 0.0
  %2719 = vmatpush1.msra.mxu0 0.0
  %2720 = vmatprep.subr.mxu0 0.0
  %2721 = vmatpush1.msra.mxu0 0.0
  %2722 = vmatprep.subr.mxu0 0.0
  %2723 = vmatpush1.msra.mxu0 0.0
  %2724 = vmatprep.subr.mxu0 0.0
  %2725 = vmatpush1.msra.mxu0 0.0
  %2726 = vmatprep.subr.mxu0 0.0
  %2727 = vmatpush1.msra.mxu0 0.0
  %2728 = vmatprep.subr.mxu0 0.0
  %2729 = vmatpush1.msra.mxu0 0.0
  %2730 = vmatprep.subr.mxu0 0.0
  %2731 = vmatpush1.msra.mxu0 0.0
  %2732 = vmatprep.subr.mxu0 0.0
  %2733 = vmatpush1.msra.mxu0 0.0
  %2734 = vmatprep.subr.mxu0 0.0
  %2735 = vmatpush1.msra.mxu0 0.0
  %2736 = vmatprep.subr.mxu0 0.0
  %2737 = vmatpush1.msra.mxu0 0.0
  %2738 = vmatprep.subr.mxu0 0.0
  %2739 = vmatpush1.msra.mxu0 0.0
  %2740 = vmatprep.subr.mxu0 0.0
  %2741 = vmatpush1.msra.mxu0 0.0
  %2742 = vmatprep.subr.mxu0 0.0
  %2743 = vmatpush1.msra.mxu0 0.0
  %2744 = vmatprep.subr.mxu0 0.0
  %2745 = vmatpush1.msra.mxu0 0.0
  %2746 = vmatprep.subr.mxu0 0.0
  %2747 = vmatpush1.msra.mxu0 0.0
  %2748 = vmatprep.subr.mxu0 0.0
  %2749 = vmatpush1.msra.mxu0 0.0
  %2750 = vmatprep.subr.mxu0 0.0
  %2751 = vmatpush1.msra.mxu0 0.0
  %2752 = vmatprep.subr.mxu0 0.0
  %2753 = vmatpush1.msra.mxu0 0.0
  %2754 = vmatprep.subr.mxu0 0.0
  %2755 = vmatpush1.msra.mxu0 0.0
  %2756 = vmatprep.subr.mxu0 0.0
  %2757 = vmatpush1.msra.mxu0 0.0
  %2758 = vmatprep.subr.mxu0 0.0
  %2759 = vmatpush1.msra.mxu0 0.0
  %2760 = vmatprep.subr.mxu0 0.0
  %2761 = vmatpush1.msra.mxu0 0.0
  %2762 = vmatprep.subr.mxu0 0.0
  %2763 = vmatpush1.msra.mxu0 0.0
  %2764 = vmatprep.subr.mxu0 0.0
  %2765 = vmatpush1.msra.mxu0 0.0
  %2766 = vmatprep.subr.mxu0 0.0
  %2767 = vmatpush1.msra.mxu0 0.0
  %2768 = vmatprep.subr.mxu0 0.0
  %2769 = vmatpush1.msra.mxu0 0.0
  %2770 = vmatprep.subr.mxu0 0.0
  %2771 = vmatpush1.msra.mxu0 0.0
  %2772 = vmatprep.subr.mxu0 0.0
  %2773 = vmatpush1.msra.mxu0 0.0
  %2774 = vmatprep.mubr.f32.mxu0 0.0
  %2775 = vmatmul.mubr.f32.gmra.mrb[0].mxu0 %v2669
  %v2776 = vpop.f32.mrb[0].mxu0
  %v2777 = vadd.f32 %v2666, %v2776
  %v2778 = vpop.f32.mrb[0].mxu0
  %2779 = vmatprep.mubr.f32.mxu0 0.0
  %2780 = vmatmul.mubr.f32.gmra.mrb[0].mxu0 %v2672
  %v2781 = vpop.f32.mrb[0].mxu0
  %v2782 = vadd.f32 %v2666, %v2781
  %v2783 = vpop.f32.mrb[0].mxu0
  %2784 = vmatprep.mubr.f32.mxu0 0.0
  %2785 = vmatmul.mubr.f32.gmra.mrb[0].mxu0 %v2675
  %v2786 = vpop.f32.mrb[0].mxu0
  %v2787 = vadd.f32 %v2666, %v2786
  %v2788 = vpop.f32.mrb[0].mxu0
  %2789 = vmatprep.mubr.f32.mxu0 0.0
  %2790 = vmatmul.mubr.f32.gmra.mrb[0].mxu0 %v2678
  %v2791 = vpop.f32.mrb[0].mxu0
  %v2792 = vadd.f32 %v2666, %v2791
  %v2793 = vpop.f32.mrb[0].mxu0
  %2794 = vmatprep.mubr.f32.mxu0 0.0
  %2795 = vmatmul.mubr.f32.gmra.mrb[0].mxu0 %v2681
  %v2796 = vpop.f32.mrb[0].mxu0
  %v2797 = vadd.f32 %v2666, %v2796
  %v2798 = vpop.f32.mrb[0].mxu0
  %2799 = vmatprep.mubr.f32.mxu0 0.0
  %2800 = vmatmul.mubr.f32.gmra.mrb[0].mxu0 %v2684
  %v2801 = vpop.f32.mrb[0].mxu0
  %v2802 = vadd.f32 %v2666, %v2801
  %v2803 = vpop.f32.mrb[0].mxu0
  %2804 = vmatprep.mubr.f32.mxu0 0.0
  %2805 = vmatmul.mubr.f32.gmra.mrb[0].mxu0 %v2687
  %v2806 = vpop.f32.mrb[0].mxu0
  %v2807 = vadd.f32 %v2666, %v2806
  %v2808 = vpop.f32.mrb[0].mxu0
  %2809 = vmatprep.mubr.f32.mxu0 0.0
  %2810 = vmatmul.mubr.f32.gmra.mrb[0].mxu0 %v2690
  %v2811 = vpop.f32.mrb[0].mxu0
  %v2812 = vadd.f32 %v2666, %v2811
  %v2813 = vpop.f32.mrb[0].mxu0
  %2814 = vmatprep.mubr.f32.mxu0 0.0
  %2815 = vmatmul.mubr.f32.gmra.mrb[0].mxu0 %v2693
  %v2816 = vpop.f32.mrb[0].mxu0
  %v2817 = vadd.f32 %v2666, %v2816
  %v2818 = vpop.f32.mrb[0].mxu0
  %2819 = vmatprep.mubr.f32.mxu0 0.0
  %2820 = vmatmul.mubr.f32.gmra.mrb[0].mxu0 %v2696
  %v2821 = vpop.f32.mrb[0].mxu0
  %v2822 = vadd.f32 %v2666, %v2821
  %v2823 = vpop.f32.mrb[0].mxu0
  %2824 = vmatprep.mubr.f32.mxu0 0.0
  %2825 = vmatmul.mubr.f32.gmra.mrb[0].mxu0 %v2699
  %v2826 = vpop.f32.mrb[0].mxu0
  %v2827 = vadd.f32 %v2666, %v2826
  %v2828 = vpop.f32.mrb[0].mxu0
  %2829 = vmatprep.mubr.f32.mxu0 0.0
  %2830 = vmatmul.mubr.f32.gmra.mrb[0].mxu0 %v2702
  %v2831 = vpop.f32.mrb[0].mxu0
  %v2832 = vadd.f32 %v2666, %v2831
  %v2833 = vpop.f32.mrb[0].mxu0
  %2834 = vmatprep.mubr.f32.mxu0 0.0
  %2835 = vmatmul.mubr.f32.gmra.mrb[0].mxu0 %v2705
  %v2836 = vpop.f32.mrb[0].mxu0
  %v2837 = vadd.f32 %v2666, %v2836
  %v2838 = vpop.f32.mrb[0].mxu0
  %2839 = vmatprep.mubr.f32.mxu0 0.0
  %2840 = vmatmul.mubr.f32.gmra.mrb[0].mxu0 %v2708
  %v2841 = vpop.f32.mrb[0].mxu0
  %v2842 = vadd.f32 %v2666, %v2841
  %v2843 = vpop.f32.mrb[0].mxu0
  %2844 = vdwg.mxu0
  %2845 = vst [vmem:[%s23] sm:$0xff] %v2777
  %2846 = vst [vmem:[%s23 + $0x8] sm:$0xff] %v2782
  %2847 = vst [vmem:[%s23 + $0x10] sm:$0xff] %v2787
  %2848 = vst [vmem:[%s23 + $0x18] sm:$0xff] %v2792
  %2849 = vst [vmem:[%s23 + $0x20] sm:$0xff] %v2797
  %2850 = vst [vmem:[%s23 + $0x28] sm:$0xff] %v2802
  %2851 = vst [vmem:[%s23 + $0x30] sm:$0xff] %v2807
  %2852 = vst [vmem:[%s23 + $0x38] sm:$0xff] %v2812
  %2853 = vst [vmem:[%s23 + $0x40] sm:$0xff] %v2817
  %2854 = vst [vmem:[%s23 + $0x48] sm:$0xff] %v2822
  %2855 = vst [vmem:[%s23 + $0x50] sm:$0xff] %v2827
  %2856 = vst [vmem:[%s23 + $0x58] sm:$0xff] %v2832
  %2857 = vst [vmem:[%s23 + $0x60] sm:$0xff] %v2837
  %2858 = vst [vmem:[%s23 + $0x68] sm:$0xff] %v2842
  // Predicated region
  $region94: #{interaction_net_forward.1} parent=0 // pred_check
    _
  $region95: #{interaction_net_forward.1} parent=0 // pred_check_branch
    %2860 = sbr.rel (0) target = $region97
  $region96: #{interaction_net_forward.1} parent=0 // pred_region
    _
  $region97: #{interaction_net_forward.1} parent=0 // pred_fallthru
    _
  // Predicated region
  $region98: #{interaction_net_forward.1} parent=0 // pred_check
    _
  $region99: #{interaction_net_forward.1} parent=0 // pred_check_branch
    %2862 = sbr.rel (0) target = $region101
  $region100: #{interaction_net_forward.1} parent=0 // pred_region
    _
  $region101: #{interaction_net_forward.1} parent=0 // pred_fallthru
    _

</llo_original>
